<compile_context>
chip_gen: v5e
topology: v5e:2x2
jax: 0.10.0
libtpu: 0.0.40
codegen_flags: <defaults>
</compile_context>

<pallas_src>
import functools
import math

import numpy as np
import jax
import jax.numpy as jnp
from jax.experimental import pallas as pl
from jax.experimental.pallas import tpu as pltpu

LANE = 128


def _round_up(x, m):
    return (x + m - 1) // m * m


def _pick_tile_m(m):
    # Small M: small tiles -> more grid steps (keeps both v7x TCs busy) and
    # much less zero-row padding.  Large M: big tiles amortise per-step cost.
    if m >= 2048:
        return 256
    if m >= 256:
        return 128
    return 64


# ---------------------------------------------------------------------------
# Pallas kernel: one tile of x/y frames -> mel spectrograms -> partial sum of
# (squared diff + |log diff|), reduced to a lane-dense (8, 128) block.
# ---------------------------------------------------------------------------
def _mel_distance_kernel(fx_ref, fy_ref, cos_ref, sin_ref, fb_ref, out_ref,
                         *, log_epsilon):
    # fx/fy : (TM, NFFT_PAD)   bf16 un-windowed frames
    # cos/sin: (NFFT_PAD, NFREQ_PAD) bf16 Hann-windowed DFT basis, bins 1..nfft/2
    # fb    : (NFREQ_PAD, 128) bf16 mel filterbank (DC row dropped, zero-padded)
    tm = fx_ref.shape[0]

    # Fuse x and y along M: one cos / sin / fb matmul each instead of two.
    frames = jnp.concatenate([fx_ref[...], fy_ref[...]], axis=0)   # (2*TM, NFFT)

    re = jnp.dot(frames, cos_ref[...], preferred_element_type=jnp.float32)
    im = jnp.dot(frames, sin_ref[...], preferred_element_type=jnp.float32)
    mag = jnp.sqrt(re * re + im * im)                              # (2*TM, NFREQ)

    mel = jnp.dot(mag.astype(jnp.bfloat16), fb_ref[...],
                  preferred_element_type=jnp.float32)              # (2*TM, 128)

    mel_x = mel[:tm]
    mel_y = mel[tm:]
    diff = mel_x - mel_y
    lin = diff * diff
    log_diff = jnp.abs(jnp.log(mel_x + log_epsilon)
                       - jnp.log(mel_y + log_epsilon))

    # (TM, 128) -> (8, 128) lane-dense partial sum for this tile.
    out_ref[...] = (lin + log_diff).reshape(tm // 8, 8, LANE).sum(axis=0)


def _scale_distance(fx, fy, dft_cos, dft_sin, fb, log_epsilon, tile_m):
    """fx, fy: (M_pad, nfft_pad) bf16 frames. Returns sum(lin) + sum(|logdiff|)."""
    m_pad, nfft_pad = fx.shape
    nfreq_pad = dft_cos.shape[1]
    nmel_pad = fb.shape[1]
    grid_m = m_pad // tile_m

    kernel = functools.partial(_mel_distance_kernel, log_epsilon=log_epsilon)
    const = lambda shape: pl.BlockSpec(shape, lambda i: (0,) * len(shape))

    partial = pl.pallas_call(
        kernel,
        out_shape=jax.ShapeDtypeStruct((grid_m * 8, LANE), jnp.float32),
        grid_spec=pltpu.PrefetchScalarGridSpec(
            num_scalar_prefetch=0,
            grid=(grid_m,),
            in_specs=[
                pl.BlockSpec((tile_m, nfft_pad), lambda i: (i, 0)),
                pl.BlockSpec((tile_m, nfft_pad), lambda i: (i, 0)),
                const((nfft_pad, nfreq_pad)),
                const((nfft_pad, nfreq_pad)),
                const((nfreq_pad, nmel_pad)),
            ],
            out_specs=pl.BlockSpec((8, LANE), lambda i: (i, 0)),
        ),
        compiler_params=pltpu.CompilerParams(
            dimension_semantics=("parallel",),        # independent tiles
            # A few MiB/step at these scales; re-budget (and single-buffer the
            # constant operands) before adding scales >= 2048.
            vmem_limit_bytes=32 << 20),
    )(fx, fy, dft_cos, dft_sin, fb)
    return jnp.sum(partial)


# ---------------------------------------------------------------------------
# Wrapper-side constant construction (numpy, compile-time) and framing.
# ---------------------------------------------------------------------------
def _hann_window_np(n_fft):
    # torch.hann_window(n_fft) default (periodic=True)
    i = np.arange(n_fft, dtype=np.float64)
    return 0.5 - 0.5 * np.cos(2.0 * np.pi * i / n_fft)


def _windowed_dft_basis_np(n_fft):
    """Hann-windowed one-sided DFT basis for bins k = 1 .. n_fft//2.

    The DC bin (k=0) is omitted: with torchaudio's default f_min=0 the mel
    filterbank's DC row is exactly zero, so bin 0 never contributes to the
    mel spectrogram.  This keeps the frequency axis at n_fft//2 columns.
    """
    n = np.arange(n_fft, dtype=np.int64)[:, None]
    k = np.arange(1, n_fft // 2 + 1, dtype=np.int64)[None, :]
    ang = (2.0 * np.pi / n_fft) * ((n * k) % n_fft)
    w = _hann_window_np(n_fft)[:, None]
    return ((np.cos(ang) * w).astype(np.float32),
            (-np.sin(ang) * w).astype(np.float32))


def _mel_filterbank_np(n_freqs, n_mels, sample_rate, f_min=0.0, f_max=None):
    """HTK-scale triangular mel filterbank, norm=None (torchaudio defaults)."""
    if f_max is None:
        f_max = sample_rate / 2.0
    hz_to_mel = lambda f: 2595.0 * np.log10(1.0 + f / 700.0)
    mel_to_hz = lambda m: 700.0 * (10.0 ** (m / 2595.0) - 1.0)

    all_freqs = np.linspace(0.0, sample_rate // 2, n_freqs)
    m_pts = np.linspace(hz_to_mel(f_min), hz_to_mel(f_max), n_mels + 2)
    f_pts = mel_to_hz(m_pts)
    f_diff = f_pts[1:] - f_pts[:-1]                      # (n_mels + 1,)
    slopes = f_pts[None, :] - all_freqs[:, None]         # (n_freqs, n_mels + 2)
    down = -slopes[:, :-2] / f_diff[:-1][None, :]
    up = slopes[:, 2:] / f_diff[1:][None, :]
    return np.maximum(0.0, np.minimum(down, up)).astype(np.float32)


def _frame_signal(x_bt, n_fft, hop, dtype=jnp.float32):
    """Center (reflect) padded, hop-strided frames via strided slices
    (no gather HLO).  Returns ((B*C*n_frames, n_fft), n_frames)."""
    assert n_fft % hop == 0
    pad = n_fft // 2
    xp = jnp.pad(x_bt, ((0, 0), (pad, pad)), mode="reflect").astype(dtype)
    bc, tp = xp.shape
    n_frames = 1 + (tp - n_fft) // hop
    pieces = [
        xp[:, k * hop:k * hop + n_frames * hop].reshape(bc, n_frames, hop)
        for k in range(n_fft // hop)
    ]
    frames = jnp.concatenate(pieces, axis=-1)            # (BC, n_frames, n_fft)
    return frames.reshape(-1, n_fft), n_frames


# ---------------------------------------------------------------------------
# AudioDistance forward (Pallas) and pure-JAX reference.
# ---------------------------------------------------------------------------
def audio_distance(x, y, *, scales, sample_rate, n_mels, log_epsilon):
    """x, y: (B, C, T) float32 audio. Returns the scalar multi-scale distance."""
    b, c, t = x.shape
    xb = x.reshape(b * c, t)
    yb = y.reshape(b * c, t)

    assert n_mels <= LANE, "kernel assumes n_mels <= 128 (pads mel dim to 128)"
    nmel_pad = LANE

    distance = jnp.float32(0.0)
    for scale in scales:
        hop = scale // 4
        n_freq_full = scale // 2 + 1

        # Frames built directly in bf16 (MXU input dtype) -> half the traffic.
        fx, _ = _frame_signal(xb, scale, hop, dtype=jnp.bfloat16)
        fy, _ = _frame_signal(yb, scale, hop, dtype=jnp.bfloat16)
        m = fx.shape[0]
        count = m * n_mels             # real element count (for the means)

        # Static constants (numpy -> folded into the compiled program).
        cos_np, sin_np = _windowed_dft_basis_np(scale)       # (scale, scale//2)
        fb_full = _mel_filterbank_np(n_freq_full, n_mels, sample_rate)
        # torchaudio default f_min=0 makes the DC filterbank row exactly zero,
        # which is what lets us drop bin 0 from the DFT basis.
        assert np.abs(fb_full[0]).max() < 1e-6, \
            "non-zero DC mel row; keep the k=0 bin in the DFT basis"
        fb_np = fb_full[1:]                                   # (scale//2, n_mels)

        n_freq = scale // 2
        nfft_pad = _round_up(scale, LANE)
        nfreq_pad = _round_up(n_freq, LANE)
        tile_m = _pick_tile_m(m)
        m_pad = _round_up(m, tile_m)

        cos_p = np.zeros((nfft_pad, nfreq_pad), np.float32)
        cos_p[:scale, :n_freq] = cos_np
        sin_p = np.zeros((nfft_pad, nfreq_pad), np.float32)
        sin_p[:scale, :n_freq] = sin_np
        fb_p = np.zeros((nfreq_pad, nmel_pad), np.float32)
        fb_p[:n_freq, :n_mels] = fb_np

        # Zero-pad frames to lane-dense, (8,128)-aligned shapes; padded
        # rows/cols contribute exactly zero to the partial sums.
        fx_p = jnp.pad(fx, ((0, m_pad - m), (0, nfft_pad - scale)))
        fy_p = jnp.pad(fy, ((0, m_pad - m), (0, nfft_pad - scale)))

        part = _scale_distance(
            fx_p, fy_p,
            jnp.asarray(cos_p, dtype=jnp.bfloat16),
            jnp.asarray(sin_p, dtype=jnp.bfloat16),
            jnp.asarray(fb_p, dtype=jnp.bfloat16),
            log_epsilon, tile_m)
        distance = distance + part / count
    return distance


def audio_distance_ref(x, y, *, scales, sample_rate, n_mels, log_epsilon):
    """Pure-JAX f32 reference (jnp.fft.rfft, full filterbank incl. DC row)."""
    b, c, t = x.shape
    xb = x.reshape(b * c, t).astype(jnp.float32)
    yb = y.reshape(b * c, t).astype(jnp.float32)

    distance = 0.0
    for scale in scales:
        hop = scale // 4
        n_freq = scale // 2 + 1
        win = jnp.asarray(_hann_window_np(scale), dtype=jnp.float32)
        fb = jnp.asarray(_mel_filterbank_np(n_freq, n_mels, sample_rate))

        def melspec(sig):
            frames, _ = _frame_signal(sig, scale, hop, dtype=jnp.float32)
            spec = jnp.abs(jnp.fft.rfft(frames * win[None, :], axis=-1))
            return spec @ fb                              # (M, n_mels)

        sx = melspec(xb)
        sy = melspec(yb)
        lin = jnp.mean((sx - sy) ** 2)
        logd = jnp.mean(jnp.abs(jnp.log(sx + log_epsilon)
                                - jnp.log(sy + log_epsilon)))
        distance = distance + lin + logd
    return distance


if __name__ == "__main__":
    B, C, T = 2, 1, 4096
    scales = (512, 256, 128)
    sample_rate = 16000
    n_mels = 64
    log_epsilon = 1e-7

    key = jax.random.PRNGKey(0)
    kx, ky = jax.random.split(key)
    x = jax.random.normal(kx, (B, C, T), dtype=jnp.float32)
    y = jax.random.normal(ky, (B, C, T), dtype=jnp.float32)

    dist_fn = jax.jit(functools.partial(
        audio_distance, scales=scales, sample_rate=sample_rate,
        n_mels=n_mels, log_epsilon=log_epsilon))
    out = jax.block_until_ready(dist_fn(x, y))

    ref = audio_distance_ref(x, y, scales=scales, sample_rate=sample_rate,
                             n_mels=n_mels, log_epsilon=log_epsilon)

    rel = abs(float(out) - float(ref)) / max(abs(float(ref)), 1e-6)
    # bf16 frames / DFT basis / filterbank at the MXU (f32 accumulation)
    # => ~1-2% expected relative error.
    assert rel < 5e-2, (float(out), float(ref), rel)
    print("KERNEL_OK")
</pallas_src>

<mosaic_0001>
module attributes {stable_mosaic.version = 11 : i64} {
  func.func @_mel_distance_kernel(%arg0: i32, %arg1: memref<64x512xbf16, #tpu.memory_space<vmem>>, %arg2: memref<64x512xbf16, #tpu.memory_space<vmem>>, %arg3: memref<512x256xbf16, #tpu.memory_space<vmem>>, %arg4: memref<512x256xbf16, #tpu.memory_space<vmem>>, %arg5: memref<256x128xbf16, #tpu.memory_space<vmem>>, %arg6: memref<8x128xf32, #tpu.memory_space<vmem>>) attributes {dimension_semantics = [#tpu.dimension_semantics<parallel>], iteration_bounds = array<i64: 2>, scalar_prefetch = 0 : i64, scratch_operands = 0 : i64, tpu.core_type = #tpu.core_type<tc>, window_params = [{transform_indices = @transform_0, window_bounds = array<i64: 64, 512>}, {transform_indices = @transform_1, window_bounds = array<i64: 64, 512>}, {pipeline_mode = #tpu.pipeline_mode<synchronous>, transform_indices = @transform_2, window_bounds = array<i64: 512, 256>}, {pipeline_mode = #tpu.pipeline_mode<synchronous>, transform_indices = @transform_3, window_bounds = array<i64: 512, 256>}, {pipeline_mode = #tpu.pipeline_mode<synchronous>, transform_indices = @transform_4, window_bounds = array<i64: 256, 128>}, {transform_indices = @transform_5, window_bounds = array<i64: 8, 128>}]} {
    %c0 = arith.constant 0 : index
    %c0_0 = arith.constant 0 : index
    %0 = vector.load %arg1[%c0, %c0_0] : memref<64x512xbf16, #tpu.memory_space<vmem>>, vector<64x512xbf16>
    %c0_1 = arith.constant 0 : index
    %c0_2 = arith.constant 0 : index
    %1 = vector.load %arg2[%c0_1, %c0_2] : memref<64x512xbf16, #tpu.memory_space<vmem>>, vector<64x512xbf16>
    %2 = tpu.concatenate %0, %1 in 0 : vector<64x512xbf16>, vector<64x512xbf16> -> vector<128x512xbf16>
    %c0_3 = arith.constant 0 : index
    %c0_4 = arith.constant 0 : index
    %3 = vector.load %arg3[%c0_3, %c0_4] : memref<512x256xbf16, #tpu.memory_space<vmem>>, vector<512x256xbf16>
    %cst = arith.constant dense<0.000000e+00> : vector<128x256xf32>
    %4 = tpu.matmul %2, %3, %cst {dimension_numbers = #tpu.dot_dimension_numbers<[1], [0], [0], [1], [0, 0, 1, 1], [], []>} : vector<128x512xbf16>, vector<512x256xbf16>, vector<128x256xf32> -> vector<128x256xf32>
    %c0_5 = arith.constant 0 : index
    %c0_6 = arith.constant 0 : index
    %5 = vector.load %arg4[%c0_5, %c0_6] : memref<512x256xbf16, #tpu.memory_space<vmem>>, vector<512x256xbf16>
    %cst_7 = arith.constant dense<0.000000e+00> : vector<128x256xf32>
    %6 = tpu.matmul %2, %5, %cst_7 {dimension_numbers = #tpu.dot_dimension_numbers<[1], [0], [0], [1], [0, 0, 1, 1], [], []>} : vector<128x512xbf16>, vector<512x256xbf16>, vector<128x256xf32> -> vector<128x256xf32>
    %7 = arith.mulf %4, %4 : vector<128x256xf32>
    %8 = arith.mulf %6, %6 : vector<128x256xf32>
    %9 = arith.addf %7, %8 : vector<128x256xf32>
    %10 = math.sqrt %9 : vector<128x256xf32>
    %11 = arith.truncf %10 : vector<128x256xf32> to vector<128x256xbf16>
    %c0_8 = arith.constant 0 : index
    %c0_9 = arith.constant 0 : index
    %12 = vector.load %arg5[%c0_8, %c0_9] : memref<256x128xbf16, #tpu.memory_space<vmem>>, vector<256x128xbf16>
    %cst_10 = arith.constant dense<0.000000e+00> : vector<128x128xf32>
    %13 = tpu.matmul %11, %12, %cst_10 {dimension_numbers = #tpu.dot_dimension_numbers<[1], [0], [0], [1], [0, 0, 1, 1], [], []>} : vector<128x256xbf16>, vector<256x128xbf16>, vector<128x128xf32> -> vector<128x128xf32>
    %14 = vector.extract_strided_slice %13 {offsets = [0, 0], sizes = [64, 128], strides = [1, 1]} : vector<128x128xf32> to vector<64x128xf32>
    %15 = vector.extract_strided_slice %13 {offsets = [64, 0], sizes = [64, 128], strides = [1, 1]} : vector<128x128xf32> to vector<64x128xf32>
    %16 = arith.subf %14, %15 : vector<64x128xf32>
    %17 = arith.mulf %16, %16 : vector<64x128xf32>
    %cst_11 = arith.constant 1.000000e-07 : f32
    %18 = vector.broadcast %cst_11 : f32 to vector<64x128xf32>
    %19 = arith.addf %14, %18 : vector<64x128xf32>
    %20 = math.log %19 : vector<64x128xf32>
    %cst_12 = arith.constant 1.000000e-07 : f32
    %21 = vector.broadcast %cst_12 : f32 to vector<64x128xf32>
    %22 = arith.addf %15, %21 : vector<64x128xf32>
    %23 = math.log %22 : vector<64x128xf32>
    %24 = arith.subf %20, %23 : vector<64x128xf32>
    %25 = math.absf %24 : vector<64x128xf32>
    %26 = arith.addf %17, %25 : vector<64x128xf32>
    %27 = vector.shape_cast %26 : vector<64x128xf32> to vector<8x8x128xf32>
    %cst_13 = arith.constant dense<0.000000e+00> : vector<8x128xf32>
    %28 = vector.multi_reduction <add>, %27, %cst_13 [0] : vector<8x8x128xf32> to vector<8x128xf32>
    %c0_14 = arith.constant 0 : index
    %c0_15 = arith.constant 0 : index
    %29 = vector.load %arg6[%c0_14, %c0_15] : memref<8x128xf32, #tpu.memory_space<vmem>>, vector<8x128xf32>
    tpu.vector_store %arg6[%c0_14, %c0_15], %28 {strides = array<i32>} : memref<8x128xf32, #tpu.memory_space<vmem>>, vector<8x128xf32>,
    return
  }
  func.func @transform_0(%arg0: i32) -> (i32, i32) {
    %c0_i32 = arith.constant 0 : i32
    %c0_i32_0 = arith.constant 0 : i32
    return %arg0, %c0_i32 : i32, i32
  }
  func.func @transform_1(%arg0: i32) -> (i32, i32) {
    %c0_i32 = arith.constant 0 : i32
    %c0_i32_0 = arith.constant 0 : i32
    return %arg0, %c0_i32 : i32, i32
  }
  func.func @transform_2(%arg0: i32) -> (i32, i32) {
    %c0_i32 = arith.constant 0 : i32
    %c0_i32_0 = arith.constant 0 : i32
    %c0_i32_1 = arith.constant 0 : i32
    return %c0_i32, %c0_i32_0 : i32, i32
  }
  func.func @transform_3(%arg0: i32) -> (i32, i32) {
    %c0_i32 = arith.constant 0 : i32
    %c0_i32_0 = arith.constant 0 : i32
    %c0_i32_1 = arith.constant 0 : i32
    return %c0_i32, %c0_i32_0 : i32, i32
  }
  func.func @transform_4(%arg0: i32) -> (i32, i32) {
    %c0_i32 = arith.constant 0 : i32
    %c0_i32_0 = arith.constant 0 : i32
    %c0_i32_1 = arith.constant 0 : i32
    return %c0_i32, %c0_i32_0 : i32, i32
  }
  func.func @transform_5(%arg0: i32) -> (i32, i32) {
    %c0_i32 = arith.constant 0 : i32
    %c0_i32_0 = arith.constant 0 : i32
    return %arg0, %c0_i32 : i32, i32
  }
}

module attributes {stable_mosaic.version = 11 : i64} {
  func.func @_mel_distance_kernel(%arg0: i32, %arg1: memref<64x256xbf16, #tpu.memory_space<vmem>>, %arg2: memref<64x256xbf16, #tpu.memory_space<vmem>>, %arg3: memref<256x128xbf16, #tpu.memory_space<vmem>>, %arg4: memref<256x128xbf16, #tpu.memory_space<vmem>>, %arg5: memref<128x128xbf16, #tpu.memory_space<vmem>>, %arg6: memref<8x128xf32, #tpu.memory_space<vmem>>) attributes {dimension_semantics = [#tpu.dimension_semantics<parallel>], iteration_bounds = array<i64: 3>, scalar_prefetch = 0 : i64, scratch_operands = 0 : i64, tpu.core_type = #tpu.core_type<tc>, window_params = [{transform_indices = @transform_0, window_bounds = array<i64: 64, 256>}, {transform_indices = @transform_1, window_bounds = array<i64: 64, 256>}, {pipeline_mode = #tpu.pipeline_mode<synchronous>, transform_indices = @transform_2, window_bounds = array<i64: 256, 128>}, {pipeline_mode = #tpu.pipeline_mode<synchronous>, transform_indices = @transform_3, window_bounds = array<i64: 256, 128>}, {pipeline_mode = #tpu.pipeline_mode<synchronous>, transform_indices = @transform_4, window_bounds = array<i64: 128, 128>}, {transform_indices = @transform_5, window_bounds = array<i64: 8, 128>}]} {
    %c0 = arith.constant 0 : index
    %c0_0 = arith.constant 0 : index
    %0 = vector.load %arg1[%c0, %c0_0] : memref<64x256xbf16, #tpu.memory_space<vmem>>, vector<64x256xbf16>
    %c0_1 = arith.constant 0 : index
    %c0_2 = arith.constant 0 : index
    %1 = vector.load %arg2[%c0_1, %c0_2] : memref<64x256xbf16, #tpu.memory_space<vmem>>, vector<64x256xbf16>
    %2 = tpu.concatenate %0, %1 in 0 : vector<64x256xbf16>, vector<64x256xbf16> -> vector<128x256xbf16>
    %c0_3 = arith.constant 0 : index
    %c0_4 = arith.constant 0 : index
    %3 = vector.load %arg3[%c0_3, %c0_4] : memref<256x128xbf16, #tpu.memory_space<vmem>>, vector<256x128xbf16>
    %cst = arith.constant dense<0.000000e+00> : vector<128x128xf32>
    %4 = tpu.matmul %2, %3, %cst {dimension_numbers = #tpu.dot_dimension_numbers<[1], [0], [0], [1], [0, 0, 1, 1], [], []>} : vector<128x256xbf16>, vector<256x128xbf16>, vector<128x128xf32> -> vector<128x128xf32>
    %c0_5 = arith.constant 0 : index
    %c0_6 = arith.constant 0 : index
    %5 = vector.load %arg4[%c0_5, %c0_6] : memref<256x128xbf16, #tpu.memory_space<vmem>>, vector<256x128xbf16>
    %cst_7 = arith.constant dense<0.000000e+00> : vector<128x128xf32>
    %6 = tpu.matmul %2, %5, %cst_7 {dimension_numbers = #tpu.dot_dimension_numbers<[1], [0], [0], [1], [0, 0, 1, 1], [], []>} : vector<128x256xbf16>, vector<256x128xbf16>, vector<128x128xf32> -> vector<128x128xf32>
    %7 = arith.mulf %4, %4 : vector<128x128xf32>
    %8 = arith.mulf %6, %6 : vector<128x128xf32>
    %9 = arith.addf %7, %8 : vector<128x128xf32>
    %10 = math.sqrt %9 : vector<128x128xf32>
    %11 = arith.truncf %10 : vector<128x128xf32> to vector<128x128xbf16>
    %c0_8 = arith.constant 0 : index
    %c0_9 = arith.constant 0 : index
    %12 = vector.load %arg5[%c0_8, %c0_9] : memref<128x128xbf16, #tpu.memory_space<vmem>>, vector<128x128xbf16>
    %cst_10 = arith.constant dense<0.000000e+00> : vector<128x128xf32>
    %13 = tpu.matmul %11, %12, %cst_10 {dimension_numbers = #tpu.dot_dimension_numbers<[1], [0], [0], [1], [0, 0, 1, 1], [], []>} : vector<128x128xbf16>, vector<128x128xbf16>, vector<128x128xf32> -> vector<128x128xf32>
    %14 = vector.extract_strided_slice %13 {offsets = [0, 0], sizes = [64, 128], strides = [1, 1]} : vector<128x128xf32> to vector<64x128xf32>
    %15 = vector.extract_strided_slice %13 {offsets = [64, 0], sizes = [64, 128], strides = [1, 1]} : vector<128x128xf32> to vector<64x128xf32>
    %16 = arith.subf %14, %15 : vector<64x128xf32>
    %17 = arith.mulf %16, %16 : vector<64x128xf32>
    %cst_11 = arith.constant 1.000000e-07 : f32
    %18 = vector.broadcast %cst_11 : f32 to vector<64x128xf32>
    %19 = arith.addf %14, %18 : vector<64x128xf32>
    %20 = math.log %19 : vector<64x128xf32>
    %cst_12 = arith.constant 1.000000e-07 : f32
    %21 = vector.broadcast %cst_12 : f32 to vector<64x128xf32>
    %22 = arith.addf %15, %21 : vector<64x128xf32>
    %23 = math.log %22 : vector<64x128xf32>
    %24 = arith.subf %20, %23 : vector<64x128xf32>
    %25 = math.absf %24 : vector<64x128xf32>
    %26 = arith.addf %17, %25 : vector<64x128xf32>
    %27 = vector.shape_cast %26 : vector<64x128xf32> to vector<8x8x128xf32>
    %cst_13 = arith.constant dense<0.000000e+00> : vector<8x128xf32>
    %28 = vector.multi_reduction <add>, %27, %cst_13 [0] : vector<8x8x128xf32> to vector<8x128xf32>
    %c0_14 = arith.constant 0 : index
    %c0_15 = arith.constant 0 : index
    %29 = vector.load %arg6[%c0_14, %c0_15] : memref<8x128xf32, #tpu.memory_space<vmem>>, vector<8x128xf32>
    tpu.vector_store %arg6[%c0_14, %c0_15], %28 {strides = array<i32>} : memref<8x128xf32, #tpu.memory_space<vmem>>, vector<8x128xf32>,
    return
  }
  func.func @transform_0(%arg0: i32) -> (i32, i32) {
    %c0_i32 = arith.constant 0 : i32
    %c0_i32_0 = arith.constant 0 : i32
    return %arg0, %c0_i32 : i32, i32
  }
  func.func @transform_1(%arg0: i32) -> (i32, i32) {
    %c0_i32 = arith.constant 0 : i32
    %c0_i32_0 = arith.constant 0 : i32
    return %arg0, %c0_i32 : i32, i32
  }
  func.func @transform_2(%arg0: i32) -> (i32, i32) {
    %c0_i32 = arith.constant 0 : i32
    %c0_i32_0 = arith.constant 0 : i32
    %c0_i32_1 = arith.constant 0 : i32
    return %c0_i32, %c0_i32_0 : i32, i32
  }
  func.func @transform_3(%arg0: i32) -> (i32, i32) {
    %c0_i32 = arith.constant 0 : i32
    %c0_i32_0 = arith.constant 0 : i32
    %c0_i32_1 = arith.constant 0 : i32
    return %c0_i32, %c0_i32_0 : i32, i32
  }
  func.func @transform_4(%arg0: i32) -> (i32, i32) {
    %c0_i32 = arith.constant 0 : i32
    %c0_i32_0 = arith.constant 0 : i32
    %c0_i32_1 = arith.constant 0 : i32
    return %c0_i32, %c0_i32_0 : i32, i32
  }
  func.func @transform_5(%arg0: i32) -> (i32, i32) {
    %c0_i32 = arith.constant 0 : i32
    %c0_i32_0 = arith.constant 0 : i32
    return %arg0, %c0_i32 : i32, i32
  }
}

module attributes {stable_mosaic.version = 11 : i64} {
  func.func @_mel_distance_kernel(%arg0: i32, %arg1: memref<128x128xbf16, #tpu.memory_space<vmem>>, %arg2: memref<128x128xbf16, #tpu.memory_space<vmem>>, %arg3: memref<128x128xbf16, #tpu.memory_space<vmem>>, %arg4: memref<128x128xbf16, #tpu.memory_space<vmem>>, %arg5: memref<128x128xbf16, #tpu.memory_space<vmem>>, %arg6: memref<8x128xf32, #tpu.memory_space<vmem>>) attributes {dimension_semantics = [#tpu.dimension_semantics<parallel>], iteration_bounds = array<i64: 3>, scalar_prefetch = 0 : i64, scratch_operands = 0 : i64, tpu.core_type = #tpu.core_type<tc>, window_params = [{transform_indices = @transform_0, window_bounds = array<i64: 128, 128>}, {transform_indices = @transform_1, window_bounds = array<i64: 128, 128>}, {pipeline_mode = #tpu.pipeline_mode<synchronous>, transform_indices = @transform_2, window_bounds = array<i64: 128, 128>}, {pipeline_mode = #tpu.pipeline_mode<synchronous>, transform_indices = @transform_3, window_bounds = array<i64: 128, 128>}, {pipeline_mode = #tpu.pipeline_mode<synchronous>, transform_indices = @transform_4, window_bounds = array<i64: 128, 128>}, {transform_indices = @transform_5, window_bounds = array<i64: 8, 128>}]} {
    %c0 = arith.constant 0 : index
    %c0_0 = arith.constant 0 : index
    %0 = vector.load %arg1[%c0, %c0_0] : memref<128x128xbf16, #tpu.memory_space<vmem>>, vector<128x128xbf16>
    %c0_1 = arith.constant 0 : index
    %c0_2 = arith.constant 0 : index
    %1 = vector.load %arg2[%c0_1, %c0_2] : memref<128x128xbf16, #tpu.memory_space<vmem>>, vector<128x128xbf16>
    %2 = tpu.concatenate %0, %1 in 0 : vector<128x128xbf16>, vector<128x128xbf16> -> vector<256x128xbf16>
    %c0_3 = arith.constant 0 : index
    %c0_4 = arith.constant 0 : index
    %3 = vector.load %arg3[%c0_3, %c0_4] : memref<128x128xbf16, #tpu.memory_space<vmem>>, vector<128x128xbf16>
    %cst = arith.constant dense<0.000000e+00> : vector<256x128xf32>
    %4 = tpu.matmul %2, %3, %cst {dimension_numbers = #tpu.dot_dimension_numbers<[1], [0], [0], [1], [0, 0, 1, 1], [], []>} : vector<256x128xbf16>, vector<128x128xbf16>, vector<256x128xf32> -> vector<256x128xf32>
    %c0_5 = arith.constant 0 : index
    %c0_6 = arith.constant 0 : index
    %5 = vector.load %arg4[%c0_5, %c0_6] : memref<128x128xbf16, #tpu.memory_space<vmem>>, vector<128x128xbf16>
    %cst_7 = arith.constant dense<0.000000e+00> : vector<256x128xf32>
    %6 = tpu.matmul %2, %5, %cst_7 {dimension_numbers = #tpu.dot_dimension_numbers<[1], [0], [0], [1], [0, 0, 1, 1], [], []>} : vector<256x128xbf16>, vector<128x128xbf16>, vector<256x128xf32> -> vector<256x128xf32>
    %7 = arith.mulf %4, %4 : vector<256x128xf32>
    %8 = arith.mulf %6, %6 : vector<256x128xf32>
    %9 = arith.addf %7, %8 : vector<256x128xf32>
    %10 = math.sqrt %9 : vector<256x128xf32>
    %11 = arith.truncf %10 : vector<256x128xf32> to vector<256x128xbf16>
    %c0_8 = arith.constant 0 : index
    %c0_9 = arith.constant 0 : index
    %12 = vector.load %arg5[%c0_8, %c0_9] : memref<128x128xbf16, #tpu.memory_space<vmem>>, vector<128x128xbf16>
    %cst_10 = arith.constant dense<0.000000e+00> : vector<256x128xf32>
    %13 = tpu.matmul %11, %12, %cst_10 {dimension_numbers = #tpu.dot_dimension_numbers<[1], [0], [0], [1], [0, 0, 1, 1], [], []>} : vector<256x128xbf16>, vector<128x128xbf16>, vector<256x128xf32> -> vector<256x128xf32>
    %14 = vector.extract_strided_slice %13 {offsets = [0, 0], sizes = [128, 128], strides = [1, 1]} : vector<256x128xf32> to vector<128x128xf32>
    %15 = vector.extract_strided_slice %13 {offsets = [128, 0], sizes = [128, 128], strides = [1, 1]} : vector<256x128xf32> to vector<128x128xf32>
    %16 = arith.subf %14, %15 : vector<128x128xf32>
    %17 = arith.mulf %16, %16 : vector<128x128xf32>
    %cst_11 = arith.constant 1.000000e-07 : f32
    %18 = vector.broadcast %cst_11 : f32 to vector<128x128xf32>
    %19 = arith.addf %14, %18 : vector<128x128xf32>
    %20 = math.log %19 : vector<128x128xf32>
    %cst_12 = arith.constant 1.000000e-07 : f32
    %21 = vector.broadcast %cst_12 : f32 to vector<128x128xf32>
    %22 = arith.addf %15, %21 : vector<128x128xf32>
    %23 = math.log %22 : vector<128x128xf32>
    %24 = arith.subf %20, %23 : vector<128x128xf32>
    %25 = math.absf %24 : vector<128x128xf32>
    %26 = arith.addf %17, %25 : vector<128x128xf32>
    %27 = vector.shape_cast %26 : vector<128x128xf32> to vector<16x8x128xf32>
    %cst_13 = arith.constant dense<0.000000e+00> : vector<8x128xf32>
    %28 = vector.multi_reduction <add>, %27, %cst_13 [0] : vector<16x8x128xf32> to vector<8x128xf32>
    %c0_14 = arith.constant 0 : index
    %c0_15 = arith.constant 0 : index
    %29 = vector.load %arg6[%c0_14, %c0_15] : memref<8x128xf32, #tpu.memory_space<vmem>>, vector<8x128xf32>
    tpu.vector_store %arg6[%c0_14, %c0_15], %28 {strides = array<i32>} : memref<8x128xf32, #tpu.memory_space<vmem>>, vector<8x128xf32>,
    return
  }
  func.func @transform_0(%arg0: i32) -> (i32, i32) {
    %c0_i32 = arith.constant 0 : i32
    %c0_i32_0 = arith.constant 0 : i32
    return %arg0, %c0_i32 : i32, i32
  }
  func.func @transform_1(%arg0: i32) -> (i32, i32) {
    %c0_i32 = arith.constant 0 : i32
    %c0_i32_0 = arith.constant 0 : i32
    return %arg0, %c0_i32 : i32, i32
  }
  func.func @transform_2(%arg0: i32) -> (i32, i32) {
    %c0_i32 = arith.constant 0 : i32
    %c0_i32_0 = arith.constant 0 : i32
    %c0_i32_1 = arith.constant 0 : i32
    return %c0_i32, %c0_i32_0 : i32, i32
  }
  func.func @transform_3(%arg0: i32) -> (i32, i32) {
    %c0_i32 = arith.constant 0 : i32
    %c0_i32_0 = arith.constant 0 : i32
    %c0_i32_1 = arith.constant 0 : i32
    return %c0_i32, %c0_i32_0 : i32, i32
  }
  func.func @transform_4(%arg0: i32) -> (i32, i32) {
    %c0_i32 = arith.constant 0 : i32
    %c0_i32_0 = arith.constant 0 : i32
    %c0_i32_1 = arith.constant 0 : i32
    return %c0_i32, %c0_i32_0 : i32, i32
  }
  func.func @transform_5(%arg0: i32) -> (i32, i32) {
    %c0_i32 = arith.constant 0 : i32
    %c0_i32_0 = arith.constant 0 : i32
    return %arg0, %c0_i32 : i32, i32
  }
}

</mosaic_0001>

<llo_original>
// kernel: audio_distance.4
$region0: #{audio_distance.4}
  #allocation0 [shape = 'u32[]', space=smem, size = 0x4, offset = 0x4, fixed_abs, tag = 'smem constant byte address 0x4 - core index']
  #allocation1 [shape = 'u32[72,128]{1,0:T(1,128)}', space=vmem, size = 0x9000, scoped, tag = 'internal scratch']
  %s0 = inlined_call_operand.vmem [shape: bf16[192,256], index: 0, kind: input, shape index: {}]
  %s1 = inlined_call_operand.vmem [shape: bf16[192,256], index: 1, kind: input, shape index: {}]
  %s2 = inlined_call_operand.vmem [shape: bf16[256,128], index: 2, kind: input, shape index: {}]
  %s3 = inlined_call_operand.vmem [shape: bf16[256,128], index: 3, kind: input, shape index: {}]
  %s4 = inlined_call_operand.vmem [shape: bf16[128,128], index: 4, kind: input, shape index: {}]
  %s5 = inlined_call_operand.vmem [shape: f32[24,128], index: 5, kind: output, shape index: {}]
  %s6 = sld [smem:[#allocation0]]
  $region53: #{audio_distance.4} parent=0
    _
  %s8 = ssub.s32 1, %s6
  %s9 = scalar_select 0, %s8, %s6
  loop: start=0, step=1, limit=5
  $region2: #{audio_distance.4} parent=0 // loop_pre_header
    _
  $region3: #{audio_distance.4} parent=0 // loop_header
    %s11 = sphi 0, %s15
    %p12 = scmp.ge.s32.totalorder %s11, 5
    %s21 = sphi 0, %s23
    %s24 = sphi 0, %s21
    %s25 = sphi 0, %s24
    %s41 = sphi 0, %s25
    %s47 = sphi 0, %s49
    %s50 = sphi 0, %s47
    %s51 = sphi 0, %s50
    %s67 = sphi 0, %s51
    %s71 = sphi 0, %s71
    %s73 = sphi 0, %s71
    %s74 = sphi 0, %s73
    %s88 = sphi 0, %s74
    %s92 = sphi 0, %s92
    %s94 = sphi 0, %s92
    %s95 = sphi 0, %s94
    %s109 = sphi 0, %s95
    %s113 = sphi 0, %s113
    %s115 = sphi 0, %s113
    %s116 = sphi 0, %s115
    %s130 = sphi 0, %s116
    %s136 = sphi 0, %s138
    %s139 = sphi 0, %s136
    %s140 = sphi 0, %s139
    %s156 = sphi 0, %s140
  $region4: #{audio_distance.4} parent=0 // loop_header_branch
    %14 = sbr.rel (%p12) target = $region8
  $region5: #{audio_distance.4} parent=0 // loop_body
    %s16 = ssub.s32 %s11, 1
    %s17 = ssub.s32 %s11, 2
    %s18 = sadd.s32 %s11, 1
    %s19 = ssub.s32 %s11, %s18
    %p20 = scmp.eq.s32.totalorder %s19, 0
    %s22 = sadd.s32 %s21, 1
    %s23 = scalar_select %p20, %s21, %s22
    %p26 = pneg %p20
    %p27 = scmp.eq.s32.totalorder %s11, 2
    %p28 = por %p26, %p27
    %p29 = scmp.ne.s32.totalorder %s21, %s24
    %p30 = scmp.eq.s32.totalorder %s11, 0
    %p31 = por %p29, %p30
    %p32 = scmp.ne.s32.totalorder %s21, %s24
    %p33 = scmp.eq.s32.totalorder %s16, 2
    %p34 = por %p32, %p33
    %p35 = scmp.ne.s32.totalorder %s24, %s25
    %p36 = scmp.eq.s32.totalorder %s16, 0
    %p37 = por %p35, %p36
    %p38 = scmp.ne.s32.totalorder %s24, %s25
    %p39 = scmp.eq.s32.totalorder %s17, 2
    %p40 = por %p38, %p39
    %p42 = scmp.ne.s32.totalorder %s25, %s41
    %p43 = scmp.eq.s32.totalorder %s17, 0
    %p44 = por %p42, %p43
    %s45 = ssub.s32 %s11, %s18
    %p46 = scmp.eq.s32.totalorder %s45, 0
    %s48 = sadd.s32 %s47, 1
    %s49 = scalar_select %p46, %s47, %s48
    %p52 = pneg %p46
    %p53 = scmp.eq.s32.totalorder %s11, 2
    %p54 = por %p52, %p53
    %p55 = scmp.ne.s32.totalorder %s47, %s50
    %p56 = scmp.eq.s32.totalorder %s11, 0
    %p57 = por %p55, %p56
    %p58 = scmp.ne.s32.totalorder %s47, %s50
    %p59 = scmp.eq.s32.totalorder %s16, 2
    %p60 = por %p58, %p59
    %p61 = scmp.ne.s32.totalorder %s50, %s51
    %p62 = scmp.eq.s32.totalorder %s16, 0
    %p63 = por %p61, %p62
    %p64 = scmp.ne.s32.totalorder %s50, %s51
    %p65 = scmp.eq.s32.totalorder %s17, 2
    %p66 = por %p64, %p65
    %p68 = scmp.ne.s32.totalorder %s51, %s67
    %p69 = scmp.eq.s32.totalorder %s17, 0
    %p70 = por %p68, %p69
    %s72 = sadd.s32 %s71, 1
    %p75 = scmp.eq.s32.totalorder %s11, 2
    %p76 = scmp.ne.s32.totalorder %s71, %s73
    %p77 = scmp.eq.s32.totalorder %s11, 0
    %p78 = por %p76, %p77
    %p79 = scmp.ne.s32.totalorder %s71, %s73
    %p80 = scmp.eq.s32.totalorder %s16, 2
    %p81 = por %p79, %p80
    %p82 = scmp.ne.s32.totalorder %s73, %s74
    %p83 = scmp.eq.s32.totalorder %s16, 0
    %p84 = por %p82, %p83
    %p85 = scmp.ne.s32.totalorder %s73, %s74
    %p86 = scmp.eq.s32.totalorder %s17, 2
    %p87 = por %p85, %p86
    %p89 = scmp.ne.s32.totalorder %s74, %s88
    %p90 = scmp.eq.s32.totalorder %s17, 0
    %p91 = por %p89, %p90
    %s93 = sadd.s32 %s92, 1
    %p96 = scmp.eq.s32.totalorder %s11, 2
    %p97 = scmp.ne.s32.totalorder %s92, %s94
    %p98 = scmp.eq.s32.totalorder %s11, 0
    %p99 = por %p97, %p98
    %p100 = scmp.ne.s32.totalorder %s92, %s94
    %p101 = scmp.eq.s32.totalorder %s16, 2
    %p102 = por %p100, %p101
    %p103 = scmp.ne.s32.totalorder %s94, %s95
    %p104 = scmp.eq.s32.totalorder %s16, 0
    %p105 = por %p103, %p104
    %p106 = scmp.ne.s32.totalorder %s94, %s95
    %p107 = scmp.eq.s32.totalorder %s17, 2
    %p108 = por %p106, %p107
    %p110 = scmp.ne.s32.totalorder %s95, %s109
    %p111 = scmp.eq.s32.totalorder %s17, 0
    %p112 = por %p110, %p111
    %s114 = sadd.s32 %s113, 1
    %p117 = scmp.eq.s32.totalorder %s11, 2
    %p118 = scmp.ne.s32.totalorder %s113, %s115
    %p119 = scmp.eq.s32.totalorder %s11, 0
    %p120 = por %p118, %p119
    %p121 = scmp.ne.s32.totalorder %s113, %s115
    %p122 = scmp.eq.s32.totalorder %s16, 2
    %p123 = por %p121, %p122
    %p124 = scmp.ne.s32.totalorder %s115, %s116
    %p125 = scmp.eq.s32.totalorder %s16, 0
    %p126 = por %p124, %p125
    %p127 = scmp.ne.s32.totalorder %s115, %s116
    %p128 = scmp.eq.s32.totalorder %s17, 2
    %p129 = por %p127, %p128
    %p131 = scmp.ne.s32.totalorder %s116, %s130
    %p132 = scmp.eq.s32.totalorder %s17, 0
    %p133 = por %p131, %p132
    %s134 = ssub.s32 %s11, %s18
    %p135 = scmp.eq.s32.totalorder %s134, 0
    %s137 = sadd.s32 %s136, 1
    %s138 = scalar_select %p135, %s136, %s137
    %p141 = pneg %p135
    %p142 = scmp.eq.s32.totalorder %s11, 2
    %p143 = por %p141, %p142
    %p144 = scmp.ne.s32.totalorder %s136, %s139
    %p145 = scmp.eq.s32.totalorder %s11, 0
    %p146 = por %p144, %p145
    %p147 = scmp.ne.s32.totalorder %s136, %s139
    %p148 = scmp.eq.s32.totalorder %s16, 2
    %p149 = por %p147, %p148
    %p150 = scmp.ne.s32.totalorder %s139, %s140
    %p151 = scmp.eq.s32.totalorder %s16, 0
    %p152 = por %p150, %p151
    %p153 = scmp.ne.s32.totalorder %s139, %s140
    %p154 = scmp.eq.s32.totalorder %s17, 2
    %p155 = por %p153, %p154
    %p157 = scmp.ne.s32.totalorder %s140, %s156
    %p158 = scmp.eq.s32.totalorder %s17, 0
    %p159 = por %p157, %p158
    %p160 = scmp.le.s32.totalorder 1, %s11
    %p161 = scmp.lt.s32.totalorder %s11, 4
    %p162 = pnand %p160, %p161
    %p163 = pneg %p162
    // Predicated region
    $region9: #{audio_distance.4} parent=5 // pred_check
      _
    $region10: #{audio_distance.4} parent=5 // pred_check_branch
      %165 = sbr.rel (%p162) target = $region12
    $region11: #{audio_distance.4} parent=5 // pred_region
      %s166 = ssub.s32 %s11, 1
      // Predicated region
      $region13: #{audio_distance.4} parent=11 // pred_check
        %p167 = pneg %p84
      $region14: #{audio_distance.4} parent=11 // pred_check_branch
        %169 = sbr.rel (%p167) target = $region16
      $region15: #{audio_distance.4} parent=11 // pred_region
        _
      $region16: #{audio_distance.4} parent=11 // pred_fallthru
        _
      // Predicated region
      $region17: #{audio_distance.4} parent=11 // pred_check
        %p170 = pneg %p105
      $region18: #{audio_distance.4} parent=11 // pred_check_branch
        %172 = sbr.rel (%p170) target = $region20
      $region19: #{audio_distance.4} parent=11 // pred_region
        _
      $region20: #{audio_distance.4} parent=11 // pred_fallthru
        _
      // Predicated region
      $region21: #{audio_distance.4} parent=11 // pred_check
        %p173 = pneg %p126
      $region22: #{audio_distance.4} parent=11 // pred_check_branch
        %175 = sbr.rel (%p173) target = $region24
      $region23: #{audio_distance.4} parent=11 // pred_region
        _
      $region24: #{audio_distance.4} parent=11 // pred_fallthru
        _
    $region12: #{audio_distance.4} parent=5 // pred_fallthru
      _
    %p176 = scmp.lt.s32.totalorder %s11, 3
    // Predicated region
    $region25: #{audio_distance.4} parent=5 // pred_check
      %p177 = pneg %p176
    $region26: #{audio_distance.4} parent=5 // pred_check_branch
      %179 = sbr.rel (%p177) target = $region28
    $region27: #{audio_distance.4} parent=5 // pred_region
      // Predicated region
      $region29: #{audio_distance.4} parent=27 // pred_check
        %p180 = pneg %p31
      $region30: #{audio_distance.4} parent=27 // pred_check_branch
        %182 = sbr.rel (%p180) target = $region32
      $region31: #{audio_distance.4} parent=27 // pred_region
        %s183 = smul.u32 8, %s11
        %p184 = scmp.lt.s32.totalorder %s183, 23
        %s185 = scalar_select %p184, %s183, 23
        %s186 = smul.addr %s185, 2
        %s187 = smul.addr %s186, 4
        %s188 = scalar_lea.vmem %s0, %s187
        %s189 = smul.u32 8, %s11
      $region32: #{audio_distance.4} parent=27 // pred_fallthru
        _
      // Predicated region
      $region33: #{audio_distance.4} parent=27 // pred_check
        %p190 = pneg %p57
      $region34: #{audio_distance.4} parent=27 // pred_check_branch
        %192 = sbr.rel (%p190) target = $region36
      $region35: #{audio_distance.4} parent=27 // pred_region
        %s193 = smul.u32 8, %s11
        %p194 = scmp.lt.s32.totalorder %s193, 23
        %s195 = scalar_select %p194, %s193, 23
        %s196 = smul.addr %s195, 2
        %s197 = smul.addr %s196, 4
        %s198 = scalar_lea.vmem %s1, %s197
        %s199 = smul.u32 8, %s11
      $region36: #{audio_distance.4} parent=27 // pred_fallthru
        _
    $region28: #{audio_distance.4} parent=5 // pred_fallthru
      _
    %p200 = scmp.le.s32.totalorder 1, %s11
    %p201 = scmp.lt.s32.totalorder %s11, 4
    %p202 = pnand %p200, %p201
    %p203 = pneg %p202
    // Predicated region
    $region37: #{audio_distance.4} parent=5 // pred_check
      _
    $region38: #{audio_distance.4} parent=5 // pred_check_branch
      %205 = sbr.rel (%p202) target = $region40
    $region39: #{audio_distance.4} parent=5 // pred_region
      %s206 = ssub.s32 %s11, 1
      %s207 = smul.u32 8, %s16
      %p208 = scmp.lt.s32.totalorder %s207, 23
      %s209 = scalar_select %p208, %s207, 23
      %s210 = smul.addr %s209, 2
      %s211 = smul.addr %s210, 4
      %s212 = scalar_lea.vmem %s0, %s211
      %p213 = pneg %p37
      %p214 = pneg %p34
      %s215 = smul.u32 8, %s16
      %p216 = scmp.lt.s32.totalorder %s215, 23
      %s217 = scalar_select %p216, %s215, 23
      %s218 = smul.addr %s217, 2
      %s219 = smul.addr %s218, 4
      %s220 = scalar_lea.vmem %s1, %s219
      %p221 = pneg %p63
      %p222 = pneg %p60
      %p223 = pneg %p84
      %p224 = pneg %p81
      %p225 = pneg %p105
      %p226 = pneg %p102
      %p227 = pneg %p126
      %p228 = pneg %p123
      %p229 = pneg %p152
      %p230 = pneg %p149
      %p231 = scmp.lt.s32.totalorder %s16, 2
      %s232 = scalar_select %p231, %s16, 2
      %s233 = smul.addr %s232, 8
      %s234 = scalar_lea.vmem %s5, %s233
      %s235 = smul.u32 8, %s16
      %p236 = scmp.lt.s32.totalorder %s235, 23
      %s237 = scalar_select %p236, %s235, 23
      %s238 = smul.addr %s237, 2
      %s239 = smul.addr %s238, 4
      %s240 = scalar_lea.vmem %s0, %s239
      %s241 = smul.u32 8, %s16
      %s242 = smul.u32 8, %s16
      %p243 = scmp.lt.s32.totalorder %s242, 23
      %s244 = scalar_select %p243, %s242, 23
      %s245 = smul.addr %s244, 2
      %s246 = smul.addr %s245, 4
      %s247 = scalar_lea.vmem %s1, %s246
      %s248 = smul.u32 8, %s16
      %p249 = scmp.lt.s32.totalorder %s16, 2
      %s250 = scalar_select %p249, %s16, 2
      %s251 = smul.addr %s250, 8
      %s252 = scalar_lea.vmem %s5, %s251
      %v253 = vld [vmem:[%s240] sm:$0xff]
      %v254 = vld [vmem:[%s240 + $0x8] sm:$0xff]
      %v255 = vld [vmem:[%s240 + $0x10] sm:$0xff]
      %v256 = vld [vmem:[%s240 + $0x18] sm:$0xff]
      %v257 = vld [vmem:[%s240 + $0x20] sm:$0xff]
      %v258 = vld [vmem:[%s240 + $0x28] sm:$0xff]
      %v259 = vld [vmem:[%s240 + $0x30] sm:$0xff]
      %v260 = vld [vmem:[%s240 + $0x38] sm:$0xff]
      %v261 = vld [vmem:[%s247] sm:$0xff]
      %v262 = vld [vmem:[%s247 + $0x8] sm:$0xff]
      %v263 = vld [vmem:[%s247 + $0x10] sm:$0xff]
      %v264 = vld [vmem:[%s247 + $0x18] sm:$0xff]
      %v265 = vld [vmem:[%s247 + $0x20] sm:$0xff]
      %v266 = vld [vmem:[%s247 + $0x28] sm:$0xff]
      %v267 = vld [vmem:[%s247 + $0x30] sm:$0xff]
      %v268 = vld [vmem:[%s247 + $0x38] sm:$0xff]
      %v277 = vunpack.c.l.b16 %v253
      %v278 = vunpack.c.h.b16 %v253
      %v279 = vunpack.c.l.b16 %v254
      %v280 = vunpack.c.h.b16 %v254
      %v281 = vunpack.c.l.b16 %v255
      %v282 = vunpack.c.h.b16 %v255
      %v283 = vunpack.c.l.b16 %v256
      %v284 = vunpack.c.h.b16 %v256
      %v285 = vunpack.c.l.b16 %v257
      %v286 = vunpack.c.h.b16 %v257
      %v287 = vunpack.c.l.b16 %v258
      %v288 = vunpack.c.h.b16 %v258
      %v289 = vunpack.c.l.b16 %v259
      %v290 = vunpack.c.h.b16 %v259
      %v291 = vunpack.c.l.b16 %v260
      %v292 = vunpack.c.h.b16 %v260
      %v293 = vpack.c.b16 %v279, %v277
      %v294 = vpack.c.b16 %v280, %v278
      %v295 = vpack.c.b16 %v283, %v281
      %v296 = vpack.c.b16 %v284, %v282
      %v297 = vpack.c.b16 %v287, %v285
      %v298 = vpack.c.b16 %v288, %v286
      %v299 = vpack.c.b16 %v291, %v289
      %v300 = vpack.c.b16 %v292, %v290
      %v317 = vunpack.c.l.b16 %v261
      %v318 = vunpack.c.h.b16 %v261
      %v319 = vunpack.c.l.b16 %v262
      %v320 = vunpack.c.h.b16 %v262
      %v321 = vunpack.c.l.b16 %v263
      %v322 = vunpack.c.h.b16 %v263
      %v323 = vunpack.c.l.b16 %v264
      %v324 = vunpack.c.h.b16 %v264
      %v325 = vunpack.c.l.b16 %v265
      %v326 = vunpack.c.h.b16 %v265
      %v327 = vunpack.c.l.b16 %v266
      %v328 = vunpack.c.h.b16 %v266
      %v329 = vunpack.c.l.b16 %v267
      %v330 = vunpack.c.h.b16 %v267
      %v331 = vunpack.c.l.b16 %v268
      %v332 = vunpack.c.h.b16 %v268
      %v333 = vpack.c.b16 %v319, %v317
      %v334 = vpack.c.b16 %v320, %v318
      %v335 = vpack.c.b16 %v323, %v321
      %v336 = vpack.c.b16 %v324, %v322
      %v337 = vpack.c.b16 %v327, %v325
      %v338 = vpack.c.b16 %v328, %v326
      %v339 = vpack.c.b16 %v331, %v329
      %v340 = vpack.c.b16 %v332, %v330
      %v349 = vld [vmem:[%s2] sm:$0xf]
      %v350 = vld [vmem:[%s2 + $0x4] sm:$0xf]
      %v351 = vld [vmem:[%s2 + $0x8] sm:$0xf]
      %v352 = vld [vmem:[%s2 + $0xc] sm:$0xf]
      %v353 = vld [vmem:[%s2 + $0x10] sm:$0xf]
      %v354 = vld [vmem:[%s2 + $0x14] sm:$0xf]
      %v355 = vld [vmem:[%s2 + $0x18] sm:$0xf]
      %v356 = vld [vmem:[%s2 + $0x1c] sm:$0xf]
      %v357 = vld [vmem:[%s2 + $0x20] sm:$0xf]
      %v358 = vld [vmem:[%s2 + $0x24] sm:$0xf]
      %v359 = vld [vmem:[%s2 + $0x28] sm:$0xf]
      %v360 = vld [vmem:[%s2 + $0x2c] sm:$0xf]
      %v361 = vld [vmem:[%s2 + $0x30] sm:$0xf]
      %v362 = vld [vmem:[%s2 + $0x34] sm:$0xf]
      %v363 = vld [vmem:[%s2 + $0x38] sm:$0xf]
      %v364 = vld [vmem:[%s2 + $0x3c] sm:$0xf]
      %v365 = vld [vmem:[%s2 + $0x40] sm:$0xf]
      %v366 = vld [vmem:[%s2 + $0x44] sm:$0xf]
      %v367 = vld [vmem:[%s2 + $0x48] sm:$0xf]
      %v368 = vld [vmem:[%s2 + $0x4c] sm:$0xf]
      %v369 = vld [vmem:[%s2 + $0x50] sm:$0xf]
      %v370 = vld [vmem:[%s2 + $0x54] sm:$0xf]
      %v371 = vld [vmem:[%s2 + $0x58] sm:$0xf]
      %v372 = vld [vmem:[%s2 + $0x5c] sm:$0xf]
      %v373 = vld [vmem:[%s2 + $0x60] sm:$0xf]
      %v374 = vld [vmem:[%s2 + $0x64] sm:$0xf]
      %v375 = vld [vmem:[%s2 + $0x68] sm:$0xf]
      %v376 = vld [vmem:[%s2 + $0x6c] sm:$0xf]
      %v377 = vld [vmem:[%s2 + $0x70] sm:$0xf]
      %v378 = vld [vmem:[%s2 + $0x74] sm:$0xf]
      %v379 = vld [vmem:[%s2 + $0x78] sm:$0xf]
      %v380 = vld [vmem:[%s2 + $0x7c] sm:$0xf]
      %v413 = vunpack.c.l.b16 %v349
      %v414 = vunpack.c.l.b16 %v350
      %v415 = vunpack.c.l.b16 %v351
      %v416 = vunpack.c.l.b16 %v352
      %v417 = vunpack.c.l.b16 %v353
      %v418 = vunpack.c.l.b16 %v354
      %v419 = vunpack.c.l.b16 %v355
      %v420 = vunpack.c.l.b16 %v356
      %v421 = vunpack.c.l.b16 %v357
      %v422 = vunpack.c.l.b16 %v358
      %v423 = vunpack.c.l.b16 %v359
      %v424 = vunpack.c.l.b16 %v360
      %v425 = vunpack.c.l.b16 %v361
      %v426 = vunpack.c.l.b16 %v362
      %v427 = vunpack.c.l.b16 %v363
      %v428 = vunpack.c.l.b16 %v364
      %v429 = vunpack.c.l.b16 %v365
      %v430 = vunpack.c.l.b16 %v366
      %v431 = vunpack.c.l.b16 %v367
      %v432 = vunpack.c.l.b16 %v368
      %v433 = vunpack.c.l.b16 %v369
      %v434 = vunpack.c.l.b16 %v370
      %v435 = vunpack.c.l.b16 %v371
      %v436 = vunpack.c.l.b16 %v372
      %v437 = vunpack.c.l.b16 %v373
      %v438 = vunpack.c.l.b16 %v374
      %v439 = vunpack.c.l.b16 %v375
      %v440 = vunpack.c.l.b16 %v376
      %v441 = vunpack.c.l.b16 %v377
      %v442 = vunpack.c.l.b16 %v378
      %v443 = vunpack.c.l.b16 %v379
      %v444 = vunpack.c.l.b16 %v380
      %v445 = vpack.c.b16 %v414, %v413
      %v446 = vpack.c.b16 %v416, %v415
      %v447 = vpack.c.b16 %v418, %v417
      %v448 = vpack.c.b16 %v420, %v419
      %v449 = vpack.c.b16 %v422, %v421
      %v450 = vpack.c.b16 %v424, %v423
      %v451 = vpack.c.b16 %v426, %v425
      %v452 = vpack.c.b16 %v428, %v427
      %v453 = vpack.c.b16 %v430, %v429
      %v454 = vpack.c.b16 %v432, %v431
      %v455 = vpack.c.b16 %v434, %v433
      %v456 = vpack.c.b16 %v436, %v435
      %v457 = vpack.c.b16 %v438, %v437
      %v458 = vpack.c.b16 %v440, %v439
      %v459 = vpack.c.b16 %v442, %v441
      %v460 = vpack.c.b16 %v444, %v443
      %477 = vmatpush.bf16.msra.mxu0 %v452
      %478 = vmatpush.bf16.msra.mxu0 %v451
      %479 = vmatpush.bf16.msra.mxu0 %v450
      %480 = vmatpush.bf16.msra.mxu0 %v449
      %481 = vmatpush.bf16.msra.mxu0 %v448
      %482 = vmatpush.bf16.msra.mxu0 %v447
      %483 = vmatpush.bf16.msra.mxu0 %v446
      %484 = vmatpush.bf16.msra.mxu0 %v445
      %485 = vmatmul.bf16.gmra.mxu0 %v293
      %v486 = vpop.f32.mrf.mxu0
      %v487 = vadd.f32 0.0, %v486
      %v488 = vpop.f32.mrf.mxu0
      %v489 = vadd.f32 0.0, %v488
      %490 = vmatmul.bf16.gmra.mxu0 %v295
      %v491 = vpop.f32.mrf.mxu0
      %v492 = vadd.f32 0.0, %v491
      %v493 = vpop.f32.mrf.mxu0
      %v494 = vadd.f32 0.0, %v493
      %495 = vmatmul.bf16.gmra.mxu0 %v297
      %v496 = vpop.f32.mrf.mxu0
      %v497 = vadd.f32 0.0, %v496
      %v498 = vpop.f32.mrf.mxu0
      %v499 = vadd.f32 0.0, %v498
      %500 = vmatmul.bf16.gmra.mxu0 %v299
      %v501 = vpop.f32.mrf.mxu0
      %v502 = vadd.f32 0.0, %v501
      %v503 = vpop.f32.mrf.mxu0
      %v504 = vadd.f32 0.0, %v503
      %505 = vmatmul.bf16.gmra.mxu0 %v333
      %v506 = vpop.f32.mrf.mxu0
      %v507 = vadd.f32 0.0, %v506
      %v508 = vpop.f32.mrf.mxu0
      %v509 = vadd.f32 0.0, %v508
      %510 = vmatmul.bf16.gmra.mxu0 %v335
      %v511 = vpop.f32.mrf.mxu0
      %v512 = vadd.f32 0.0, %v511
      %v513 = vpop.f32.mrf.mxu0
      %v514 = vadd.f32 0.0, %v513
      %515 = vmatmul.bf16.gmra.mxu0 %v337
      %v516 = vpop.f32.mrf.mxu0
      %v517 = vadd.f32 0.0, %v516
      %v518 = vpop.f32.mrf.mxu0
      %v519 = vadd.f32 0.0, %v518
      %520 = vmatmul.bf16.gmra.mxu0 %v339
      %v521 = vpop.f32.mrf.mxu0
      %v522 = vadd.f32 0.0, %v521
      %v523 = vpop.f32.mrf.mxu0
      %v524 = vadd.f32 0.0, %v523
      %525 = vdwg.mxu0
      %526 = vmatpush.bf16.msra.mxu0 %v460
      %527 = vmatpush.bf16.msra.mxu0 %v459
      %528 = vmatpush.bf16.msra.mxu0 %v458
      %529 = vmatpush.bf16.msra.mxu0 %v457
      %530 = vmatpush.bf16.msra.mxu0 %v456
      %531 = vmatpush.bf16.msra.mxu0 %v455
      %532 = vmatpush.bf16.msra.mxu0 %v454
      %533 = vmatpush.bf16.msra.mxu0 %v453
      %534 = vmatmul.bf16.gmra.mxu0 %v294
      %v535 = vpop.f32.mrf.mxu0
      %v536 = vadd.f32 %v487, %v535
      %v537 = vpop.f32.mrf.mxu0
      %v538 = vadd.f32 %v489, %v537
      %539 = vmatmul.bf16.gmra.mxu0 %v296
      %v540 = vpop.f32.mrf.mxu0
      %v541 = vadd.f32 %v492, %v540
      %v542 = vpop.f32.mrf.mxu0
      %v543 = vadd.f32 %v494, %v542
      %544 = vmatmul.bf16.gmra.mxu0 %v298
      %v545 = vpop.f32.mrf.mxu0
      %v546 = vadd.f32 %v497, %v545
      %v547 = vpop.f32.mrf.mxu0
      %v548 = vadd.f32 %v499, %v547
      %549 = vmatmul.bf16.gmra.mxu0 %v300
      %v550 = vpop.f32.mrf.mxu0
      %v551 = vadd.f32 %v502, %v550
      %v552 = vpop.f32.mrf.mxu0
      %v553 = vadd.f32 %v504, %v552
      %554 = vmatmul.bf16.gmra.mxu0 %v334
      %v555 = vpop.f32.mrf.mxu0
      %v556 = vadd.f32 %v507, %v555
      %v557 = vpop.f32.mrf.mxu0
      %v558 = vadd.f32 %v509, %v557
      %559 = vmatmul.bf16.gmra.mxu0 %v336
      %v560 = vpop.f32.mrf.mxu0
      %v561 = vadd.f32 %v512, %v560
      %v562 = vpop.f32.mrf.mxu0
      %v563 = vadd.f32 %v514, %v562
      %564 = vmatmul.bf16.gmra.mxu0 %v338
      %v565 = vpop.f32.mrf.mxu0
      %v566 = vadd.f32 %v517, %v565
      %v567 = vpop.f32.mrf.mxu0
      %v568 = vadd.f32 %v519, %v567
      %569 = vmatmul.bf16.gmra.mxu0 %v340
      %v570 = vpop.f32.mrf.mxu0
      %v571 = vadd.f32 %v522, %v570
      %v572 = vpop.f32.mrf.mxu0
      %v573 = vadd.f32 %v524, %v572
      %574 = vdwg.mxu0
      %v575 = vld [vmem:[%s3] sm:$0xf]
      %v576 = vld [vmem:[%s3 + $0x4] sm:$0xf]
      %v577 = vld [vmem:[%s3 + $0x8] sm:$0xf]
      %v578 = vld [vmem:[%s3 + $0xc] sm:$0xf]
      %v579 = vld [vmem:[%s3 + $0x10] sm:$0xf]
      %v580 = vld [vmem:[%s3 + $0x14] sm:$0xf]
      %v581 = vld [vmem:[%s3 + $0x18] sm:$0xf]
      %v582 = vld [vmem:[%s3 + $0x1c] sm:$0xf]
      %v583 = vld [vmem:[%s3 + $0x20] sm:$0xf]
      %v584 = vld [vmem:[%s3 + $0x24] sm:$0xf]
      %v585 = vld [vmem:[%s3 + $0x28] sm:$0xf]
      %v586 = vld [vmem:[%s3 + $0x2c] sm:$0xf]
      %v587 = vld [vmem:[%s3 + $0x30] sm:$0xf]
      %v588 = vld [vmem:[%s3 + $0x34] sm:$0xf]
      %v589 = vld [vmem:[%s3 + $0x38] sm:$0xf]
      %v590 = vld [vmem:[%s3 + $0x3c] sm:$0xf]
      %v591 = vld [vmem:[%s3 + $0x40] sm:$0xf]
      %v592 = vld [vmem:[%s3 + $0x44] sm:$0xf]
      %v593 = vld [vmem:[%s3 + $0x48] sm:$0xf]
      %v594 = vld [vmem:[%s3 + $0x4c] sm:$0xf]
      %v595 = vld [vmem:[%s3 + $0x50] sm:$0xf]
      %v596 = vld [vmem:[%s3 + $0x54] sm:$0xf]
      %v597 = vld [vmem:[%s3 + $0x58] sm:$0xf]
      %v598 = vld [vmem:[%s3 + $0x5c] sm:$0xf]
      %v599 = vld [vmem:[%s3 + $0x60] sm:$0xf]
      %v600 = vld [vmem:[%s3 + $0x64] sm:$0xf]
      %v601 = vld [vmem:[%s3 + $0x68] sm:$0xf]
      %v602 = vld [vmem:[%s3 + $0x6c] sm:$0xf]
      %v603 = vld [vmem:[%s3 + $0x70] sm:$0xf]
      %v604 = vld [vmem:[%s3 + $0x74] sm:$0xf]
      %v605 = vld [vmem:[%s3 + $0x78] sm:$0xf]
      %v606 = vld [vmem:[%s3 + $0x7c] sm:$0xf]
      %v639 = vunpack.c.l.b16 %v575
      %v640 = vunpack.c.l.b16 %v576
      %v641 = vunpack.c.l.b16 %v577
      %v642 = vunpack.c.l.b16 %v578
      %v643 = vunpack.c.l.b16 %v579
      %v644 = vunpack.c.l.b16 %v580
      %v645 = vunpack.c.l.b16 %v581
      %v646 = vunpack.c.l.b16 %v582
      %v647 = vunpack.c.l.b16 %v583
      %v648 = vunpack.c.l.b16 %v584
      %v649 = vunpack.c.l.b16 %v585
      %v650 = vunpack.c.l.b16 %v586
      %v651 = vunpack.c.l.b16 %v587
      %v652 = vunpack.c.l.b16 %v588
      %v653 = vunpack.c.l.b16 %v589
      %v654 = vunpack.c.l.b16 %v590
      %v655 = vunpack.c.l.b16 %v591
      %v656 = vunpack.c.l.b16 %v592
      %v657 = vunpack.c.l.b16 %v593
      %v658 = vunpack.c.l.b16 %v594
      %v659 = vunpack.c.l.b16 %v595
      %v660 = vunpack.c.l.b16 %v596
      %v661 = vunpack.c.l.b16 %v597
      %v662 = vunpack.c.l.b16 %v598
      %v663 = vunpack.c.l.b16 %v599
      %v664 = vunpack.c.l.b16 %v600
      %v665 = vunpack.c.l.b16 %v601
      %v666 = vunpack.c.l.b16 %v602
      %v667 = vunpack.c.l.b16 %v603
      %v668 = vunpack.c.l.b16 %v604
      %v669 = vunpack.c.l.b16 %v605
      %v670 = vunpack.c.l.b16 %v606
      %v671 = vpack.c.b16 %v640, %v639
      %v672 = vpack.c.b16 %v642, %v641
      %v673 = vpack.c.b16 %v644, %v643
      %v674 = vpack.c.b16 %v646, %v645
      %v675 = vpack.c.b16 %v648, %v647
      %v676 = vpack.c.b16 %v650, %v649
      %v677 = vpack.c.b16 %v652, %v651
      %v678 = vpack.c.b16 %v654, %v653
      %v679 = vpack.c.b16 %v656, %v655
      %v680 = vpack.c.b16 %v658, %v657
      %v681 = vpack.c.b16 %v660, %v659
      %v682 = vpack.c.b16 %v662, %v661
      %v683 = vpack.c.b16 %v664, %v663
      %v684 = vpack.c.b16 %v666, %v665
      %v685 = vpack.c.b16 %v668, %v667
      %v686 = vpack.c.b16 %v670, %v669
      %703 = vmatpush.bf16.msra.mxu0 %v678
      %704 = vmatpush.bf16.msra.mxu0 %v677
      %705 = vmatpush.bf16.msra.mxu0 %v676
      %706 = vmatpush.bf16.msra.mxu0 %v675
      %707 = vmatpush.bf16.msra.mxu0 %v674
      %708 = vmatpush.bf16.msra.mxu0 %v673
      %709 = vmatpush.bf16.msra.mxu0 %v672
      %710 = vmatpush.bf16.msra.mxu0 %v671
      %711 = vmatmul.bf16.gmra.mxu0 %v293
      %v712 = vpop.f32.mrf.mxu0
      %v713 = vadd.f32 0.0, %v712
      %v714 = vpop.f32.mrf.mxu0
      %v715 = vadd.f32 0.0, %v714
      %716 = vmatmul.bf16.gmra.mxu0 %v295
      %v717 = vpop.f32.mrf.mxu0
      %v718 = vadd.f32 0.0, %v717
      %v719 = vpop.f32.mrf.mxu0
      %v720 = vadd.f32 0.0, %v719
      %721 = vmatmul.bf16.gmra.mxu0 %v297
      %v722 = vpop.f32.mrf.mxu0
      %v723 = vadd.f32 0.0, %v722
      %v724 = vpop.f32.mrf.mxu0
      %v725 = vadd.f32 0.0, %v724
      %726 = vmatmul.bf16.gmra.mxu0 %v299
      %v727 = vpop.f32.mrf.mxu0
      %v728 = vadd.f32 0.0, %v727
      %v729 = vpop.f32.mrf.mxu0
      %v730 = vadd.f32 0.0, %v729
      %731 = vmatmul.bf16.gmra.mxu0 %v333
      %v732 = vpop.f32.mrf.mxu0
      %v733 = vadd.f32 0.0, %v732
      %v734 = vpop.f32.mrf.mxu0
      %v735 = vadd.f32 0.0, %v734
      %736 = vmatmul.bf16.gmra.mxu0 %v335
      %v737 = vpop.f32.mrf.mxu0
      %v738 = vadd.f32 0.0, %v737
      %v739 = vpop.f32.mrf.mxu0
      %v740 = vadd.f32 0.0, %v739
      %741 = vmatmul.bf16.gmra.mxu0 %v337
      %v742 = vpop.f32.mrf.mxu0
      %v743 = vadd.f32 0.0, %v742
      %v744 = vpop.f32.mrf.mxu0
      %v745 = vadd.f32 0.0, %v744
      %746 = vmatmul.bf16.gmra.mxu0 %v339
      %v747 = vpop.f32.mrf.mxu0
      %v748 = vadd.f32 0.0, %v747
      %v749 = vpop.f32.mrf.mxu0
      %v750 = vadd.f32 0.0, %v749
      %751 = vdwg.mxu0
      %752 = vmatpush.bf16.msra.mxu0 %v686
      %753 = vmatpush.bf16.msra.mxu0 %v685
      %754 = vmatpush.bf16.msra.mxu0 %v684
      %755 = vmatpush.bf16.msra.mxu0 %v683
      %756 = vmatpush.bf16.msra.mxu0 %v682
      %757 = vmatpush.bf16.msra.mxu0 %v681
      %758 = vmatpush.bf16.msra.mxu0 %v680
      %759 = vmatpush.bf16.msra.mxu0 %v679
      %760 = vmatmul.bf16.gmra.mxu0 %v294
      %v761 = vpop.f32.mrf.mxu0
      %v762 = vadd.f32 %v713, %v761
      %v763 = vpop.f32.mrf.mxu0
      %v764 = vadd.f32 %v715, %v763
      %765 = vmatmul.bf16.gmra.mxu0 %v296
      %v766 = vpop.f32.mrf.mxu0
      %v767 = vadd.f32 %v718, %v766
      %v768 = vpop.f32.mrf.mxu0
      %v769 = vadd.f32 %v720, %v768
      %770 = vmatmul.bf16.gmra.mxu0 %v298
      %v771 = vpop.f32.mrf.mxu0
      %v772 = vadd.f32 %v723, %v771
      %v773 = vpop.f32.mrf.mxu0
      %v774 = vadd.f32 %v725, %v773
      %775 = vmatmul.bf16.gmra.mxu0 %v300
      %v776 = vpop.f32.mrf.mxu0
      %v777 = vadd.f32 %v728, %v776
      %v778 = vpop.f32.mrf.mxu0
      %v779 = vadd.f32 %v730, %v778
      %780 = vmatmul.bf16.gmra.mxu0 %v334
      %v781 = vpop.f32.mrf.mxu0
      %v782 = vadd.f32 %v733, %v781
      %v783 = vpop.f32.mrf.mxu0
      %v784 = vadd.f32 %v735, %v783
      %785 = vmatmul.bf16.gmra.mxu0 %v336
      %v786 = vpop.f32.mrf.mxu0
      %v787 = vadd.f32 %v738, %v786
      %v788 = vpop.f32.mrf.mxu0
      %v789 = vadd.f32 %v740, %v788
      %790 = vmatmul.bf16.gmra.mxu0 %v338
      %v791 = vpop.f32.mrf.mxu0
      %v792 = vadd.f32 %v743, %v791
      %v793 = vpop.f32.mrf.mxu0
      %v794 = vadd.f32 %v745, %v793
      %795 = vmatmul.bf16.gmra.mxu0 %v340
      %v796 = vpop.f32.mrf.mxu0
      %v797 = vadd.f32 %v748, %v796
      %v798 = vpop.f32.mrf.mxu0
      %v799 = vadd.f32 %v750, %v798
      %800 = vdwg.mxu0
      %v801 = vmul.f32 %v536, %v536
      %v802 = vmul.f32 %v538, %v538
      %v803 = vmul.f32 %v541, %v541
      %v804 = vmul.f32 %v543, %v543
      %v805 = vmul.f32 %v546, %v546
      %v806 = vmul.f32 %v548, %v548
      %v807 = vmul.f32 %v551, %v551
      %v808 = vmul.f32 %v553, %v553
      %v809 = vmul.f32 %v556, %v556
      %v810 = vmul.f32 %v558, %v558
      %v811 = vmul.f32 %v561, %v561
      %v812 = vmul.f32 %v563, %v563
      %v813 = vmul.f32 %v566, %v566
      %v814 = vmul.f32 %v568, %v568
      %v815 = vmul.f32 %v571, %v571
      %v816 = vmul.f32 %v573, %v573
      %v817 = vmul.f32 %v762, %v762
      %v818 = vmul.f32 %v764, %v764
      %v819 = vmul.f32 %v767, %v767
      %v820 = vmul.f32 %v769, %v769
      %v821 = vmul.f32 %v772, %v772
      %v822 = vmul.f32 %v774, %v774
      %v823 = vmul.f32 %v777, %v777
      %v824 = vmul.f32 %v779, %v779
      %v825 = vmul.f32 %v782, %v782
      %v826 = vmul.f32 %v784, %v784
      %v827 = vmul.f32 %v787, %v787
      %v828 = vmul.f32 %v789, %v789
      %v829 = vmul.f32 %v792, %v792
      %v830 = vmul.f32 %v794, %v794
      %v831 = vmul.f32 %v797, %v797
      %v832 = vmul.f32 %v799, %v799
      %v833 = vadd.f32 %v801, %v817
      %v834 = vadd.f32 %v802, %v818
      %v835 = vadd.f32 %v803, %v819
      %v836 = vadd.f32 %v804, %v820
      %v837 = vadd.f32 %v805, %v821
      %v838 = vadd.f32 %v806, %v822
      %v839 = vadd.f32 %v807, %v823
      %v840 = vadd.f32 %v808, %v824
      %v841 = vadd.f32 %v809, %v825
      %v842 = vadd.f32 %v810, %v826
      %v843 = vadd.f32 %v811, %v827
      %v844 = vadd.f32 %v812, %v828
      %v845 = vadd.f32 %v813, %v829
      %v846 = vadd.f32 %v814, %v830
      %v847 = vadd.f32 %v815, %v831
      %v848 = vadd.f32 %v816, %v832
      %v849 = vrsqrt.pop %v833
      %v850 = vmul.f32 %v849, %v833
      %v851 = vmul.f32 %v850, %v849
      %v852 = vmul.f32 0.5, %v851
      %v853 = vsub.f32 1.5, %v852
      %v854 = vmul.f32 %v849, %v853
      %v855 = vmul.f32 %v833, %v854
      %vm856 = vcmp.eq.f32.partialorder %v833, inf
      %v857 = vsel %vm856, %v833, %v855
      %vm858 = vcmp.eq.f32.partialorder %v833, 0.0
      %v859 = vand.u32 %v833, 2147483648
      %v860 = vsel %vm858, %v859, %v857
      %v861 = vrsqrt.pop %v834
      %v862 = vmul.f32 %v861, %v834
      %v863 = vmul.f32 %v862, %v861
      %v864 = vmul.f32 0.5, %v863
      %v865 = vsub.f32 1.5, %v864
      %v866 = vmul.f32 %v861, %v865
      %v867 = vmul.f32 %v834, %v866
      %vm868 = vcmp.eq.f32.partialorder %v834, inf
      %v869 = vsel %vm868, %v834, %v867
      %vm870 = vcmp.eq.f32.partialorder %v834, 0.0
      %v871 = vand.u32 %v834, 2147483648
      %v872 = vsel %vm870, %v871, %v869
      %v873 = vrsqrt.pop %v835
      %v874 = vmul.f32 %v873, %v835
      %v875 = vmul.f32 %v874, %v873
      %v876 = vmul.f32 0.5, %v875
      %v877 = vsub.f32 1.5, %v876
      %v878 = vmul.f32 %v873, %v877
      %v879 = vmul.f32 %v835, %v878
      %vm880 = vcmp.eq.f32.partialorder %v835, inf
      %v881 = vsel %vm880, %v835, %v879
      %vm882 = vcmp.eq.f32.partialorder %v835, 0.0
      %v883 = vand.u32 %v835, 2147483648
      %v884 = vsel %vm882, %v883, %v881
      %v885 = vrsqrt.pop %v836
      %v886 = vmul.f32 %v885, %v836
      %v887 = vmul.f32 %v886, %v885
      %v888 = vmul.f32 0.5, %v887
      %v889 = vsub.f32 1.5, %v888
      %v890 = vmul.f32 %v885, %v889
      %v891 = vmul.f32 %v836, %v890
      %vm892 = vcmp.eq.f32.partialorder %v836, inf
      %v893 = vsel %vm892, %v836, %v891
      %vm894 = vcmp.eq.f32.partialorder %v836, 0.0
      %v895 = vand.u32 %v836, 2147483648
      %v896 = vsel %vm894, %v895, %v893
      %v897 = vrsqrt.pop %v837
      %v898 = vmul.f32 %v897, %v837
      %v899 = vmul.f32 %v898, %v897
      %v900 = vmul.f32 0.5, %v899
      %v901 = vsub.f32 1.5, %v900
      %v902 = vmul.f32 %v897, %v901
      %v903 = vmul.f32 %v837, %v902
      %vm904 = vcmp.eq.f32.partialorder %v837, inf
      %v905 = vsel %vm904, %v837, %v903
      %vm906 = vcmp.eq.f32.partialorder %v837, 0.0
      %v907 = vand.u32 %v837, 2147483648
      %v908 = vsel %vm906, %v907, %v905
      %v909 = vrsqrt.pop %v838
      %v910 = vmul.f32 %v909, %v838
      %v911 = vmul.f32 %v910, %v909
      %v912 = vmul.f32 0.5, %v911
      %v913 = vsub.f32 1.5, %v912
      %v914 = vmul.f32 %v909, %v913
      %v915 = vmul.f32 %v838, %v914
      %vm916 = vcmp.eq.f32.partialorder %v838, inf
      %v917 = vsel %vm916, %v838, %v915
      %vm918 = vcmp.eq.f32.partialorder %v838, 0.0
      %v919 = vand.u32 %v838, 2147483648
      %v920 = vsel %vm918, %v919, %v917
      %v921 = vrsqrt.pop %v839
      %v922 = vmul.f32 %v921, %v839
      %v923 = vmul.f32 %v922, %v921
      %v924 = vmul.f32 0.5, %v923
      %v925 = vsub.f32 1.5, %v924
      %v926 = vmul.f32 %v921, %v925
      %v927 = vmul.f32 %v839, %v926
      %vm928 = vcmp.eq.f32.partialorder %v839, inf
      %v929 = vsel %vm928, %v839, %v927
      %vm930 = vcmp.eq.f32.partialorder %v839, 0.0
      %v931 = vand.u32 %v839, 2147483648
      %v932 = vsel %vm930, %v931, %v929
      %v933 = vrsqrt.pop %v840
      %v934 = vmul.f32 %v933, %v840
      %v935 = vmul.f32 %v934, %v933
      %v936 = vmul.f32 0.5, %v935
      %v937 = vsub.f32 1.5, %v936
      %v938 = vmul.f32 %v933, %v937
      %v939 = vmul.f32 %v840, %v938
      %vm940 = vcmp.eq.f32.partialorder %v840, inf
      %v941 = vsel %vm940, %v840, %v939
      %vm942 = vcmp.eq.f32.partialorder %v840, 0.0
      %v943 = vand.u32 %v840, 2147483648
      %v944 = vsel %vm942, %v943, %v941
      %v945 = vrsqrt.pop %v841
      %v946 = vmul.f32 %v945, %v841
      %v947 = vmul.f32 %v946, %v945
      %v948 = vmul.f32 0.5, %v947
      %v949 = vsub.f32 1.5, %v948
      %v950 = vmul.f32 %v945, %v949
      %v951 = vmul.f32 %v841, %v950
      %vm952 = vcmp.eq.f32.partialorder %v841, inf
      %v953 = vsel %vm952, %v841, %v951
      %vm954 = vcmp.eq.f32.partialorder %v841, 0.0
      %v955 = vand.u32 %v841, 2147483648
      %v956 = vsel %vm954, %v955, %v953
      %v957 = vrsqrt.pop %v842
      %v958 = vmul.f32 %v957, %v842
      %v959 = vmul.f32 %v958, %v957
      %v960 = vmul.f32 0.5, %v959
      %v961 = vsub.f32 1.5, %v960
      %v962 = vmul.f32 %v957, %v961
      %v963 = vmul.f32 %v842, %v962
      %vm964 = vcmp.eq.f32.partialorder %v842, inf
      %v965 = vsel %vm964, %v842, %v963
      %vm966 = vcmp.eq.f32.partialorder %v842, 0.0
      %v967 = vand.u32 %v842, 2147483648
      %v968 = vsel %vm966, %v967, %v965
      %v969 = vrsqrt.pop %v843
      %v970 = vmul.f32 %v969, %v843
      %v971 = vmul.f32 %v970, %v969
      %v972 = vmul.f32 0.5, %v971
      %v973 = vsub.f32 1.5, %v972
      %v974 = vmul.f32 %v969, %v973
      %v975 = vmul.f32 %v843, %v974
      %vm976 = vcmp.eq.f32.partialorder %v843, inf
      %v977 = vsel %vm976, %v843, %v975
      %vm978 = vcmp.eq.f32.partialorder %v843, 0.0
      %v979 = vand.u32 %v843, 2147483648
      %v980 = vsel %vm978, %v979, %v977
      %v981 = vrsqrt.pop %v844
      %v982 = vmul.f32 %v981, %v844
      %v983 = vmul.f32 %v982, %v981
      %v984 = vmul.f32 0.5, %v983
      %v985 = vsub.f32 1.5, %v984
      %v986 = vmul.f32 %v981, %v985
      %v987 = vmul.f32 %v844, %v986
      %vm988 = vcmp.eq.f32.partialorder %v844, inf
      %v989 = vsel %vm988, %v844, %v987
      %vm990 = vcmp.eq.f32.partialorder %v844, 0.0
      %v991 = vand.u32 %v844, 2147483648
      %v992 = vsel %vm990, %v991, %v989
      %v993 = vrsqrt.pop %v845
      %v994 = vmul.f32 %v993, %v845
      %v995 = vmul.f32 %v994, %v993
      %v996 = vmul.f32 0.5, %v995
      %v997 = vsub.f32 1.5, %v996
      %v998 = vmul.f32 %v993, %v997
      %v999 = vmul.f32 %v845, %v998
      %vm1000 = vcmp.eq.f32.partialorder %v845, inf
      %v1001 = vsel %vm1000, %v845, %v999
      %vm1002 = vcmp.eq.f32.partialorder %v845, 0.0
      %v1003 = vand.u32 %v845, 2147483648
      %v1004 = vsel %vm1002, %v1003, %v1001
      %v1005 = vrsqrt.pop %v846
      %v1006 = vmul.f32 %v1005, %v846
      %v1007 = vmul.f32 %v1006, %v1005
      %v1008 = vmul.f32 0.5, %v1007
      %v1009 = vsub.f32 1.5, %v1008
      %v1010 = vmul.f32 %v1005, %v1009
      %v1011 = vmul.f32 %v846, %v1010
      %vm1012 = vcmp.eq.f32.partialorder %v846, inf
      %v1013 = vsel %vm1012, %v846, %v1011
      %vm1014 = vcmp.eq.f32.partialorder %v846, 0.0
      %v1015 = vand.u32 %v846, 2147483648
      %v1016 = vsel %vm1014, %v1015, %v1013
      %v1017 = vrsqrt.pop %v847
      %v1018 = vmul.f32 %v1017, %v847
      %v1019 = vmul.f32 %v1018, %v1017
      %v1020 = vmul.f32 0.5, %v1019
      %v1021 = vsub.f32 1.5, %v1020
      %v1022 = vmul.f32 %v1017, %v1021
      %v1023 = vmul.f32 %v847, %v1022
      %vm1024 = vcmp.eq.f32.partialorder %v847, inf
      %v1025 = vsel %vm1024, %v847, %v1023
      %vm1026 = vcmp.eq.f32.partialorder %v847, 0.0
      %v1027 = vand.u32 %v847, 2147483648
      %v1028 = vsel %vm1026, %v1027, %v1025
      %v1029 = vrsqrt.pop %v848
      %v1030 = vmul.f32 %v1029, %v848
      %v1031 = vmul.f32 %v1030, %v1029
      %v1032 = vmul.f32 0.5, %v1031
      %v1033 = vsub.f32 1.5, %v1032
      %v1034 = vmul.f32 %v1029, %v1033
      %v1035 = vmul.f32 %v848, %v1034
      %vm1036 = vcmp.eq.f32.partialorder %v848, inf
      %v1037 = vsel %vm1036, %v848, %v1035
      %vm1038 = vcmp.eq.f32.partialorder %v848, 0.0
      %v1039 = vand.u32 %v848, 2147483648
      %v1040 = vsel %vm1038, %v1039, %v1037
      %v1041 = vpack.c.bf16 %v872, %v860
      %v1042 = vpack.c.bf16 %v896, %v884
      %v1043 = vpack.c.bf16 %v920, %v908
      %v1044 = vpack.c.bf16 %v944, %v932
      %v1045 = vpack.c.bf16 %v968, %v956
      %v1046 = vpack.c.bf16 %v992, %v980
      %v1047 = vpack.c.bf16 %v1016, %v1004
      %v1048 = vpack.c.bf16 %v1040, %v1028
      %v1049 = vld [vmem:[%s4] sm:$0xf]
      %v1050 = vld [vmem:[%s4 + $0x4] sm:$0xf]
      %v1051 = vld [vmem:[%s4 + $0x8] sm:$0xf]
      %v1052 = vld [vmem:[%s4 + $0xc] sm:$0xf]
      %v1053 = vld [vmem:[%s4 + $0x10] sm:$0xf]
      %v1054 = vld [vmem:[%s4 + $0x14] sm:$0xf]
      %v1055 = vld [vmem:[%s4 + $0x18] sm:$0xf]
      %v1056 = vld [vmem:[%s4 + $0x1c] sm:$0xf]
      %v1057 = vld [vmem:[%s4 + $0x20] sm:$0xf]
      %v1058 = vld [vmem:[%s4 + $0x24] sm:$0xf]
      %v1059 = vld [vmem:[%s4 + $0x28] sm:$0xf]
      %v1060 = vld [vmem:[%s4 + $0x2c] sm:$0xf]
      %v1061 = vld [vmem:[%s4 + $0x30] sm:$0xf]
      %v1062 = vld [vmem:[%s4 + $0x34] sm:$0xf]
      %v1063 = vld [vmem:[%s4 + $0x38] sm:$0xf]
      %v1064 = vld [vmem:[%s4 + $0x3c] sm:$0xf]
      %v1081 = vunpack.c.l.b16 %v1049
      %v1082 = vunpack.c.l.b16 %v1050
      %v1083 = vunpack.c.l.b16 %v1051
      %v1084 = vunpack.c.l.b16 %v1052
      %v1085 = vunpack.c.l.b16 %v1053
      %v1086 = vunpack.c.l.b16 %v1054
      %v1087 = vunpack.c.l.b16 %v1055
      %v1088 = vunpack.c.l.b16 %v1056
      %v1089 = vunpack.c.l.b16 %v1057
      %v1090 = vunpack.c.l.b16 %v1058
      %v1091 = vunpack.c.l.b16 %v1059
      %v1092 = vunpack.c.l.b16 %v1060
      %v1093 = vunpack.c.l.b16 %v1061
      %v1094 = vunpack.c.l.b16 %v1062
      %v1095 = vunpack.c.l.b16 %v1063
      %v1096 = vunpack.c.l.b16 %v1064
      %v1097 = vpack.c.b16 %v1082, %v1081
      %v1098 = vpack.c.b16 %v1084, %v1083
      %v1099 = vpack.c.b16 %v1086, %v1085
      %v1100 = vpack.c.b16 %v1088, %v1087
      %v1101 = vpack.c.b16 %v1090, %v1089
      %v1102 = vpack.c.b16 %v1092, %v1091
      %v1103 = vpack.c.b16 %v1094, %v1093
      %v1104 = vpack.c.b16 %v1096, %v1095
      %1113 = vmatpush.bf16.msra.mxu0 %v1104
      %1114 = vmatpush.bf16.msra.mxu0 %v1103
      %1115 = vmatpush.bf16.msra.mxu0 %v1102
      %1116 = vmatpush.bf16.msra.mxu0 %v1101
      %1117 = vmatpush.bf16.msra.mxu0 %v1100
      %1118 = vmatpush.bf16.msra.mxu0 %v1099
      %1119 = vmatpush.bf16.msra.mxu0 %v1098
      %1120 = vmatpush.bf16.msra.mxu0 %v1097
      %1121 = vmatmul.bf16.gmra.mxu0 %v1041
      %v1122 = vpop.f32.mrf.mxu0
      %v1123 = vadd.f32 0.0, %v1122
      %v1124 = vpop.f32.mrf.mxu0
      %v1125 = vadd.f32 0.0, %v1124
      %1126 = vmatmul.bf16.gmra.mxu0 %v1042
      %v1127 = vpop.f32.mrf.mxu0
      %v1128 = vadd.f32 0.0, %v1127
      %v1129 = vpop.f32.mrf.mxu0
      %v1130 = vadd.f32 0.0, %v1129
      %1131 = vmatmul.bf16.gmra.mxu0 %v1043
      %v1132 = vpop.f32.mrf.mxu0
      %v1133 = vadd.f32 0.0, %v1132
      %v1134 = vpop.f32.mrf.mxu0
      %v1135 = vadd.f32 0.0, %v1134
      %1136 = vmatmul.bf16.gmra.mxu0 %v1044
      %v1137 = vpop.f32.mrf.mxu0
      %v1138 = vadd.f32 0.0, %v1137
      %v1139 = vpop.f32.mrf.mxu0
      %v1140 = vadd.f32 0.0, %v1139
      %1141 = vmatmul.bf16.gmra.mxu0 %v1045
      %v1142 = vpop.f32.mrf.mxu0
      %v1143 = vadd.f32 0.0, %v1142
      %v1144 = vpop.f32.mrf.mxu0
      %v1145 = vadd.f32 0.0, %v1144
      %1146 = vmatmul.bf16.gmra.mxu0 %v1046
      %v1147 = vpop.f32.mrf.mxu0
      %v1148 = vadd.f32 0.0, %v1147
      %v1149 = vpop.f32.mrf.mxu0
      %v1150 = vadd.f32 0.0, %v1149
      %1151 = vmatmul.bf16.gmra.mxu0 %v1047
      %v1152 = vpop.f32.mrf.mxu0
      %v1153 = vadd.f32 0.0, %v1152
      %v1154 = vpop.f32.mrf.mxu0
      %v1155 = vadd.f32 0.0, %v1154
      %1156 = vmatmul.bf16.gmra.mxu0 %v1048
      %v1157 = vpop.f32.mrf.mxu0
      %v1158 = vadd.f32 0.0, %v1157
      %v1159 = vpop.f32.mrf.mxu0
      %v1160 = vadd.f32 0.0, %v1159
      %1161 = vdwg.mxu0
      %v1162 = vsub.f32 %v1123, %v1143
      %v1163 = vsub.f32 %v1125, %v1145
      %v1164 = vsub.f32 %v1128, %v1148
      %v1165 = vsub.f32 %v1130, %v1150
      %v1166 = vsub.f32 %v1133, %v1153
      %v1167 = vsub.f32 %v1135, %v1155
      %v1168 = vsub.f32 %v1138, %v1158
      %v1169 = vsub.f32 %v1140, %v1160
      %v1170 = vmul.f32 %v1162, %v1162
      %v1171 = vmul.f32 %v1163, %v1163
      %v1172 = vmul.f32 %v1164, %v1164
      %v1173 = vmul.f32 %v1165, %v1165
      %v1174 = vmul.f32 %v1166, %v1166
      %v1175 = vmul.f32 %v1167, %v1167
      %v1176 = vmul.f32 %v1168, %v1168
      %v1177 = vmul.f32 %v1169, %v1169
      %v1178 = vadd.f32 %v1123, 1e-07
      %v1179 = vadd.f32 %v1125, 1e-07
      %v1180 = vadd.f32 %v1128, 1e-07
      %v1181 = vadd.f32 %v1130, 1e-07
      %v1182 = vadd.f32 %v1133, 1e-07
      %v1183 = vadd.f32 %v1135, 1e-07
      %v1184 = vadd.f32 %v1138, 1e-07
      %v1185 = vadd.f32 %v1140, 1e-07
      %v1186 = vlog2.pop %v1178
      %v1187 = vmul.f32 %v1186, 0.6931472
      %v1188 = vlog2.pop %v1179
      %v1189 = vmul.f32 %v1188, 0.6931472
      %v1190 = vlog2.pop %v1180
      %v1191 = vmul.f32 %v1190, 0.6931472
      %v1192 = vlog2.pop %v1181
      %v1193 = vmul.f32 %v1192, 0.6931472
      %v1194 = vlog2.pop %v1182
      %v1195 = vmul.f32 %v1194, 0.6931472
      %v1196 = vlog2.pop %v1183
      %v1197 = vmul.f32 %v1196, 0.6931472
      %v1198 = vlog2.pop %v1184
      %v1199 = vmul.f32 %v1198, 0.6931472
      %v1200 = vlog2.pop %v1185
      %v1201 = vmul.f32 %v1200, 0.6931472
      %v1202 = vadd.f32 %v1143, 1e-07
      %v1203 = vadd.f32 %v1145, 1e-07
      %v1204 = vadd.f32 %v1148, 1e-07
      %v1205 = vadd.f32 %v1150, 1e-07
      %v1206 = vadd.f32 %v1153, 1e-07
      %v1207 = vadd.f32 %v1155, 1e-07
      %v1208 = vadd.f32 %v1158, 1e-07
      %v1209 = vadd.f32 %v1160, 1e-07
      %v1210 = vlog2.pop %v1202
      %v1211 = vmul.f32 %v1210, 0.6931472
      %v1212 = vlog2.pop %v1203
      %v1213 = vmul.f32 %v1212, 0.6931472
      %v1214 = vlog2.pop %v1204
      %v1215 = vmul.f32 %v1214, 0.6931472
      %v1216 = vlog2.pop %v1205
      %v1217 = vmul.f32 %v1216, 0.6931472
      %v1218 = vlog2.pop %v1206
      %v1219 = vmul.f32 %v1218, 0.6931472
      %v1220 = vlog2.pop %v1207
      %v1221 = vmul.f32 %v1220, 0.6931472
      %v1222 = vlog2.pop %v1208
      %v1223 = vmul.f32 %v1222, 0.6931472
      %v1224 = vlog2.pop %v1209
      %v1225 = vmul.f32 %v1224, 0.6931472
      %v1226 = vsub.f32 %v1187, %v1211
      %v1227 = vsub.f32 %v1189, %v1213
      %v1228 = vsub.f32 %v1191, %v1215
      %v1229 = vsub.f32 %v1193, %v1217
      %v1230 = vsub.f32 %v1195, %v1219
      %v1231 = vsub.f32 %v1197, %v1221
      %v1232 = vsub.f32 %v1199, %v1223
      %v1233 = vsub.f32 %v1201, %v1225
      %v1234 = vand.u32 2147483647, %v1226
      %v1235 = vand.u32 2147483647, %v1227
      %v1236 = vand.u32 2147483647, %v1228
      %v1237 = vand.u32 2147483647, %v1229
      %v1238 = vand.u32 2147483647, %v1230
      %v1239 = vand.u32 2147483647, %v1231
      %v1240 = vand.u32 2147483647, %v1232
      %v1241 = vand.u32 2147483647, %v1233
      %v1242 = vadd.f32 %v1170, %v1234
      %v1243 = vadd.f32 %v1171, %v1235
      %v1244 = vadd.f32 %v1172, %v1236
      %v1245 = vadd.f32 %v1173, %v1237
      %v1246 = vadd.f32 %v1174, %v1238
      %v1247 = vadd.f32 %v1175, %v1239
      %v1248 = vadd.f32 %v1176, %v1240
      %v1249 = vadd.f32 %v1177, %v1241
      %v1250 = vadd.f32 %v1242, %v1243
      %v1251 = vadd.f32 %v1250, %v1244
      %v1252 = vadd.f32 %v1251, %v1245
      %v1253 = vadd.f32 %v1252, %v1246
      %v1254 = vadd.f32 %v1253, %v1247
      %v1255 = vadd.f32 %v1254, %v1248
      %v1256 = vadd.f32 %v1255, %v1249
      %1257 = vst [vmem:[%s252] sm:$0xff] %v1256
      %p1258 = scmp.lt.s32.totalorder %s16, 2
      %s1259 = scalar_select %p1258, %s16, 2
      %s1260 = smul.addr %s1259, 8
      %s1261 = scalar_lea.vmem %s5, %s1260
      // Predicated region
      $region41: #{audio_distance.4} parent=39 // pred_check
        %p1262 = pneg %p149
      $region42: #{audio_distance.4} parent=39 // pred_check_branch
        %1264 = sbr.rel (%p1262) target = $region44
      $region43: #{audio_distance.4} parent=39 // pred_region
        _
      $region44: #{audio_distance.4} parent=39 // pred_fallthru
        _
    $region40: #{audio_distance.4} parent=5 // pred_fallthru
      _
    %p1265 = scmp.le.s32.totalorder 2, %s11
    // Predicated region
    $region45: #{audio_distance.4} parent=5 // pred_check
      %p1266 = pneg %p1265
    $region46: #{audio_distance.4} parent=5 // pred_check_branch
      %1268 = sbr.rel (%p1266) target = $region48
    $region47: #{audio_distance.4} parent=5 // pred_region
      %s1269 = ssub.s32 %s11, 2
      // Predicated region
      $region49: #{audio_distance.4} parent=47 // pred_check
        %p1270 = pneg %p155
      $region50: #{audio_distance.4} parent=47 // pred_check_branch
        %1272 = sbr.rel (%p1270) target = $region52
      $region51: #{audio_distance.4} parent=47 // pred_region
        %p1273 = scmp.lt.s32.totalorder %s17, 2
        %s1274 = scalar_select %p1273, %s17, 2
        %s1275 = smul.addr %s1274, 8
        %s1276 = scalar_lea.vmem %s5, %s1275
      $region52: #{audio_distance.4} parent=47 // pred_fallthru
        _
    $region48: #{audio_distance.4} parent=5 // pred_fallthru
      _
  $region6: #{audio_distance.4} parent=0 // loop_footer
    %s15 = sadd.s32 1, %s11
  $region7: #{audio_distance.4} parent=0 // loop_footer_branch
    %10 = sbr.rel target = $region3
  $region8: #{audio_distance.4} parent=0 // loop_exit
    _

// kernel: audio_distance.3
$region0: #{audio_distance.3}
  #allocation0 [shape = 'u32[]', space=smem, size = 0x4, offset = 0x4, fixed_abs, tag = 'smem constant byte address 0x4 - core index']
  #allocation1 [shape = 'u32[72,128]{1,0:T(1,128)}', space=vmem, size = 0x9000, scoped, tag = 'internal scratch']
  %s0 = inlined_call_operand.vmem [shape: bf16[128,512], index: 0, kind: input, shape index: {}]
  %s1 = inlined_call_operand.vmem [shape: bf16[128,512], index: 1, kind: input, shape index: {}]
  %s2 = inlined_call_operand.vmem [shape: bf16[512,256], index: 2, kind: input, shape index: {}]
  %s3 = inlined_call_operand.vmem [shape: bf16[512,256], index: 3, kind: input, shape index: {}]
  %s4 = inlined_call_operand.vmem [shape: bf16[256,128], index: 4, kind: input, shape index: {}]
  %s5 = inlined_call_operand.vmem [shape: f32[16,128], index: 5, kind: output, shape index: {}]
  %s6 = sld [smem:[#allocation0]]
  $region53: #{audio_distance.3} parent=0
    _
  %s8 = ssub.s32 1, %s6
  %s9 = scalar_select 0, %s8, %s6
  loop: start=0, step=1, limit=4
  $region2: #{audio_distance.3} parent=0 // loop_pre_header
    _
  $region3: #{audio_distance.3} parent=0 // loop_header
    %s11 = sphi 0, %s15
    %p12 = scmp.ge.s32.totalorder %s11, 4
    %s21 = sphi 0, %s23
    %s24 = sphi 0, %s21
    %s25 = sphi 0, %s24
    %s41 = sphi 0, %s25
    %s47 = sphi 0, %s49
    %s50 = sphi 0, %s47
    %s51 = sphi 0, %s50
    %s67 = sphi 0, %s51
    %s71 = sphi 0, %s71
    %s73 = sphi 0, %s71
    %s74 = sphi 0, %s73
    %s88 = sphi 0, %s74
    %s92 = sphi 0, %s92
    %s94 = sphi 0, %s92
    %s95 = sphi 0, %s94
    %s109 = sphi 0, %s95
    %s113 = sphi 0, %s113
    %s115 = sphi 0, %s113
    %s116 = sphi 0, %s115
    %s130 = sphi 0, %s116
    %s136 = sphi 0, %s138
    %s139 = sphi 0, %s136
    %s140 = sphi 0, %s139
    %s156 = sphi 0, %s140
  $region4: #{audio_distance.3} parent=0 // loop_header_branch
    %14 = sbr.rel (%p12) target = $region8
  $region5: #{audio_distance.3} parent=0 // loop_body
    %s16 = ssub.s32 %s11, 1
    %s17 = ssub.s32 %s11, 2
    %s18 = sadd.s32 %s11, 1
    %s19 = ssub.s32 %s11, %s18
    %p20 = scmp.eq.s32.totalorder %s19, 0
    %s22 = sadd.s32 %s21, 1
    %s23 = scalar_select %p20, %s21, %s22
    %p26 = pneg %p20
    %p27 = scmp.eq.s32.totalorder %s11, 1
    %p28 = por %p26, %p27
    %p29 = scmp.ne.s32.totalorder %s21, %s24
    %p30 = scmp.eq.s32.totalorder %s11, 0
    %p31 = por %p29, %p30
    %p32 = scmp.ne.s32.totalorder %s21, %s24
    %p33 = scmp.eq.s32.totalorder %s16, 1
    %p34 = por %p32, %p33
    %p35 = scmp.ne.s32.totalorder %s24, %s25
    %p36 = scmp.eq.s32.totalorder %s16, 0
    %p37 = por %p35, %p36
    %p38 = scmp.ne.s32.totalorder %s24, %s25
    %p39 = scmp.eq.s32.totalorder %s17, 1
    %p40 = por %p38, %p39
    %p42 = scmp.ne.s32.totalorder %s25, %s41
    %p43 = scmp.eq.s32.totalorder %s17, 0
    %p44 = por %p42, %p43
    %s45 = ssub.s32 %s11, %s18
    %p46 = scmp.eq.s32.totalorder %s45, 0
    %s48 = sadd.s32 %s47, 1
    %s49 = scalar_select %p46, %s47, %s48
    %p52 = pneg %p46
    %p53 = scmp.eq.s32.totalorder %s11, 1
    %p54 = por %p52, %p53
    %p55 = scmp.ne.s32.totalorder %s47, %s50
    %p56 = scmp.eq.s32.totalorder %s11, 0
    %p57 = por %p55, %p56
    %p58 = scmp.ne.s32.totalorder %s47, %s50
    %p59 = scmp.eq.s32.totalorder %s16, 1
    %p60 = por %p58, %p59
    %p61 = scmp.ne.s32.totalorder %s50, %s51
    %p62 = scmp.eq.s32.totalorder %s16, 0
    %p63 = por %p61, %p62
    %p64 = scmp.ne.s32.totalorder %s50, %s51
    %p65 = scmp.eq.s32.totalorder %s17, 1
    %p66 = por %p64, %p65
    %p68 = scmp.ne.s32.totalorder %s51, %s67
    %p69 = scmp.eq.s32.totalorder %s17, 0
    %p70 = por %p68, %p69
    %s72 = sadd.s32 %s71, 1
    %p75 = scmp.eq.s32.totalorder %s11, 1
    %p76 = scmp.ne.s32.totalorder %s71, %s73
    %p77 = scmp.eq.s32.totalorder %s11, 0
    %p78 = por %p76, %p77
    %p79 = scmp.ne.s32.totalorder %s71, %s73
    %p80 = scmp.eq.s32.totalorder %s16, 1
    %p81 = por %p79, %p80
    %p82 = scmp.ne.s32.totalorder %s73, %s74
    %p83 = scmp.eq.s32.totalorder %s16, 0
    %p84 = por %p82, %p83
    %p85 = scmp.ne.s32.totalorder %s73, %s74
    %p86 = scmp.eq.s32.totalorder %s17, 1
    %p87 = por %p85, %p86
    %p89 = scmp.ne.s32.totalorder %s74, %s88
    %p90 = scmp.eq.s32.totalorder %s17, 0
    %p91 = por %p89, %p90
    %s93 = sadd.s32 %s92, 1
    %p96 = scmp.eq.s32.totalorder %s11, 1
    %p97 = scmp.ne.s32.totalorder %s92, %s94
    %p98 = scmp.eq.s32.totalorder %s11, 0
    %p99 = por %p97, %p98
    %p100 = scmp.ne.s32.totalorder %s92, %s94
    %p101 = scmp.eq.s32.totalorder %s16, 1
    %p102 = por %p100, %p101
    %p103 = scmp.ne.s32.totalorder %s94, %s95
    %p104 = scmp.eq.s32.totalorder %s16, 0
    %p105 = por %p103, %p104
    %p106 = scmp.ne.s32.totalorder %s94, %s95
    %p107 = scmp.eq.s32.totalorder %s17, 1
    %p108 = por %p106, %p107
    %p110 = scmp.ne.s32.totalorder %s95, %s109
    %p111 = scmp.eq.s32.totalorder %s17, 0
    %p112 = por %p110, %p111
    %s114 = sadd.s32 %s113, 1
    %p117 = scmp.eq.s32.totalorder %s11, 1
    %p118 = scmp.ne.s32.totalorder %s113, %s115
    %p119 = scmp.eq.s32.totalorder %s11, 0
    %p120 = por %p118, %p119
    %p121 = scmp.ne.s32.totalorder %s113, %s115
    %p122 = scmp.eq.s32.totalorder %s16, 1
    %p123 = por %p121, %p122
    %p124 = scmp.ne.s32.totalorder %s115, %s116
    %p125 = scmp.eq.s32.totalorder %s16, 0
    %p126 = por %p124, %p125
    %p127 = scmp.ne.s32.totalorder %s115, %s116
    %p128 = scmp.eq.s32.totalorder %s17, 1
    %p129 = por %p127, %p128
    %p131 = scmp.ne.s32.totalorder %s116, %s130
    %p132 = scmp.eq.s32.totalorder %s17, 0
    %p133 = por %p131, %p132
    %s134 = ssub.s32 %s11, %s18
    %p135 = scmp.eq.s32.totalorder %s134, 0
    %s137 = sadd.s32 %s136, 1
    %s138 = scalar_select %p135, %s136, %s137
    %p141 = pneg %p135
    %p142 = scmp.eq.s32.totalorder %s11, 1
    %p143 = por %p141, %p142
    %p144 = scmp.ne.s32.totalorder %s136, %s139
    %p145 = scmp.eq.s32.totalorder %s11, 0
    %p146 = por %p144, %p145
    %p147 = scmp.ne.s32.totalorder %s136, %s139
    %p148 = scmp.eq.s32.totalorder %s16, 1
    %p149 = por %p147, %p148
    %p150 = scmp.ne.s32.totalorder %s139, %s140
    %p151 = scmp.eq.s32.totalorder %s16, 0
    %p152 = por %p150, %p151
    %p153 = scmp.ne.s32.totalorder %s139, %s140
    %p154 = scmp.eq.s32.totalorder %s17, 1
    %p155 = por %p153, %p154
    %p157 = scmp.ne.s32.totalorder %s140, %s156
    %p158 = scmp.eq.s32.totalorder %s17, 0
    %p159 = por %p157, %p158
    %p160 = scmp.le.s32.totalorder 1, %s11
    %p161 = scmp.lt.s32.totalorder %s11, 3
    %p162 = pnand %p160, %p161
    %p163 = pneg %p162
    // Predicated region
    $region9: #{audio_distance.3} parent=5 // pred_check
      _
    $region10: #{audio_distance.3} parent=5 // pred_check_branch
      %165 = sbr.rel (%p162) target = $region12
    $region11: #{audio_distance.3} parent=5 // pred_region
      %s166 = ssub.s32 %s11, 1
      // Predicated region
      $region13: #{audio_distance.3} parent=11 // pred_check
        %p167 = pneg %p84
      $region14: #{audio_distance.3} parent=11 // pred_check_branch
        %169 = sbr.rel (%p167) target = $region16
      $region15: #{audio_distance.3} parent=11 // pred_region
        _
      $region16: #{audio_distance.3} parent=11 // pred_fallthru
        _
      // Predicated region
      $region17: #{audio_distance.3} parent=11 // pred_check
        %p170 = pneg %p105
      $region18: #{audio_distance.3} parent=11 // pred_check_branch
        %172 = sbr.rel (%p170) target = $region20
      $region19: #{audio_distance.3} parent=11 // pred_region
        _
      $region20: #{audio_distance.3} parent=11 // pred_fallthru
        _
      // Predicated region
      $region21: #{audio_distance.3} parent=11 // pred_check
        %p173 = pneg %p126
      $region22: #{audio_distance.3} parent=11 // pred_check_branch
        %175 = sbr.rel (%p173) target = $region24
      $region23: #{audio_distance.3} parent=11 // pred_region
        _
      $region24: #{audio_distance.3} parent=11 // pred_fallthru
        _
    $region12: #{audio_distance.3} parent=5 // pred_fallthru
      _
    %p176 = scmp.lt.s32.totalorder %s11, 2
    // Predicated region
    $region25: #{audio_distance.3} parent=5 // pred_check
      %p177 = pneg %p176
    $region26: #{audio_distance.3} parent=5 // pred_check_branch
      %179 = sbr.rel (%p177) target = $region28
    $region27: #{audio_distance.3} parent=5 // pred_region
      // Predicated region
      $region29: #{audio_distance.3} parent=27 // pred_check
        %p180 = pneg %p31
      $region30: #{audio_distance.3} parent=27 // pred_check_branch
        %182 = sbr.rel (%p180) target = $region32
      $region31: #{audio_distance.3} parent=27 // pred_region
        %s183 = smul.u32 8, %s11
        %p184 = scmp.lt.s32.totalorder %s183, 15
        %s185 = scalar_select %p184, %s183, 15
        %s186 = smul.addr %s185, 4
        %s187 = smul.addr %s186, 4
        %s188 = scalar_lea.vmem %s0, %s187
        %s189 = smul.u32 8, %s11
      $region32: #{audio_distance.3} parent=27 // pred_fallthru
        _
      // Predicated region
      $region33: #{audio_distance.3} parent=27 // pred_check
        %p190 = pneg %p57
      $region34: #{audio_distance.3} parent=27 // pred_check_branch
        %192 = sbr.rel (%p190) target = $region36
      $region35: #{audio_distance.3} parent=27 // pred_region
        %s193 = smul.u32 8, %s11
        %p194 = scmp.lt.s32.totalorder %s193, 15
        %s195 = scalar_select %p194, %s193, 15
        %s196 = smul.addr %s195, 4
        %s197 = smul.addr %s196, 4
        %s198 = scalar_lea.vmem %s1, %s197
        %s199 = smul.u32 8, %s11
      $region36: #{audio_distance.3} parent=27 // pred_fallthru
        _
    $region28: #{audio_distance.3} parent=5 // pred_fallthru
      _
    %p200 = scmp.le.s32.totalorder 1, %s11
    %p201 = scmp.lt.s32.totalorder %s11, 3
    %p202 = pnand %p200, %p201
    %p203 = pneg %p202
    // Predicated region
    $region37: #{audio_distance.3} parent=5 // pred_check
      _
    $region38: #{audio_distance.3} parent=5 // pred_check_branch
      %205 = sbr.rel (%p202) target = $region40
    $region39: #{audio_distance.3} parent=5 // pred_region
      %s206 = ssub.s32 %s11, 1
      %s207 = smul.u32 8, %s16
      %p208 = scmp.lt.s32.totalorder %s207, 15
      %s209 = scalar_select %p208, %s207, 15
      %s210 = smul.addr %s209, 4
      %s211 = smul.addr %s210, 4
      %s212 = scalar_lea.vmem %s0, %s211
      %p213 = pneg %p37
      %p214 = pneg %p34
      %s215 = smul.u32 8, %s16
      %p216 = scmp.lt.s32.totalorder %s215, 15
      %s217 = scalar_select %p216, %s215, 15
      %s218 = smul.addr %s217, 4
      %s219 = smul.addr %s218, 4
      %s220 = scalar_lea.vmem %s1, %s219
      %p221 = pneg %p63
      %p222 = pneg %p60
      %p223 = pneg %p84
      %p224 = pneg %p81
      %p225 = pneg %p105
      %p226 = pneg %p102
      %p227 = pneg %p126
      %p228 = pneg %p123
      %p229 = pneg %p152
      %p230 = pneg %p149
      %p231 = scmp.lt.s32.totalorder %s16, 1
      %s232 = scalar_select %p231, %s16, 1
      %s233 = smul.addr %s232, 8
      %s234 = scalar_lea.vmem %s5, %s233
      %s235 = smul.u32 8, %s16
      %p236 = scmp.lt.s32.totalorder %s235, 15
      %s237 = scalar_select %p236, %s235, 15
      %s238 = smul.addr %s237, 4
      %s239 = smul.addr %s238, 4
      %s240 = scalar_lea.vmem %s0, %s239
      %s241 = smul.u32 8, %s16
      %s242 = smul.u32 8, %s16
      %p243 = scmp.lt.s32.totalorder %s242, 15
      %s244 = scalar_select %p243, %s242, 15
      %s245 = smul.addr %s244, 4
      %s246 = smul.addr %s245, 4
      %s247 = scalar_lea.vmem %s1, %s246
      %s248 = smul.u32 8, %s16
      %p249 = scmp.lt.s32.totalorder %s16, 1
      %s250 = scalar_select %p249, %s16, 1
      %s251 = smul.addr %s250, 8
      %s252 = scalar_lea.vmem %s5, %s251
      %v253 = vld [vmem:[%s240] sm:$0xff]
      %v254 = vld [vmem:[%s240 + $0x8] sm:$0xff]
      %v255 = vld [vmem:[%s240 + $0x10] sm:$0xff]
      %v256 = vld [vmem:[%s240 + $0x18] sm:$0xff]
      %v257 = vld [vmem:[%s240 + $0x20] sm:$0xff]
      %v258 = vld [vmem:[%s240 + $0x28] sm:$0xff]
      %v259 = vld [vmem:[%s240 + $0x30] sm:$0xff]
      %v260 = vld [vmem:[%s240 + $0x38] sm:$0xff]
      %v261 = vld [vmem:[%s240 + $0x40] sm:$0xff]
      %v262 = vld [vmem:[%s240 + $0x48] sm:$0xff]
      %v263 = vld [vmem:[%s240 + $0x50] sm:$0xff]
      %v264 = vld [vmem:[%s240 + $0x58] sm:$0xff]
      %v265 = vld [vmem:[%s240 + $0x60] sm:$0xff]
      %v266 = vld [vmem:[%s240 + $0x68] sm:$0xff]
      %v267 = vld [vmem:[%s240 + $0x70] sm:$0xff]
      %v268 = vld [vmem:[%s240 + $0x78] sm:$0xff]
      %v269 = vld [vmem:[%s247] sm:$0xff]
      %v270 = vld [vmem:[%s247 + $0x8] sm:$0xff]
      %v271 = vld [vmem:[%s247 + $0x10] sm:$0xff]
      %v272 = vld [vmem:[%s247 + $0x18] sm:$0xff]
      %v273 = vld [vmem:[%s247 + $0x20] sm:$0xff]
      %v274 = vld [vmem:[%s247 + $0x28] sm:$0xff]
      %v275 = vld [vmem:[%s247 + $0x30] sm:$0xff]
      %v276 = vld [vmem:[%s247 + $0x38] sm:$0xff]
      %v277 = vld [vmem:[%s247 + $0x40] sm:$0xff]
      %v278 = vld [vmem:[%s247 + $0x48] sm:$0xff]
      %v279 = vld [vmem:[%s247 + $0x50] sm:$0xff]
      %v280 = vld [vmem:[%s247 + $0x58] sm:$0xff]
      %v281 = vld [vmem:[%s247 + $0x60] sm:$0xff]
      %v282 = vld [vmem:[%s247 + $0x68] sm:$0xff]
      %v283 = vld [vmem:[%s247 + $0x70] sm:$0xff]
      %v284 = vld [vmem:[%s247 + $0x78] sm:$0xff]
      %v301 = vunpack.c.l.b16 %v253
      %v302 = vunpack.c.h.b16 %v253
      %v303 = vunpack.c.l.b16 %v254
      %v304 = vunpack.c.h.b16 %v254
      %v305 = vunpack.c.l.b16 %v255
      %v306 = vunpack.c.h.b16 %v255
      %v307 = vunpack.c.l.b16 %v256
      %v308 = vunpack.c.h.b16 %v256
      %v309 = vunpack.c.l.b16 %v257
      %v310 = vunpack.c.h.b16 %v257
      %v311 = vunpack.c.l.b16 %v258
      %v312 = vunpack.c.h.b16 %v258
      %v313 = vunpack.c.l.b16 %v259
      %v314 = vunpack.c.h.b16 %v259
      %v315 = vunpack.c.l.b16 %v260
      %v316 = vunpack.c.h.b16 %v260
      %v317 = vunpack.c.l.b16 %v261
      %v318 = vunpack.c.h.b16 %v261
      %v319 = vunpack.c.l.b16 %v262
      %v320 = vunpack.c.h.b16 %v262
      %v321 = vunpack.c.l.b16 %v263
      %v322 = vunpack.c.h.b16 %v263
      %v323 = vunpack.c.l.b16 %v264
      %v324 = vunpack.c.h.b16 %v264
      %v325 = vunpack.c.l.b16 %v265
      %v326 = vunpack.c.h.b16 %v265
      %v327 = vunpack.c.l.b16 %v266
      %v328 = vunpack.c.h.b16 %v266
      %v329 = vunpack.c.l.b16 %v267
      %v330 = vunpack.c.h.b16 %v267
      %v331 = vunpack.c.l.b16 %v268
      %v332 = vunpack.c.h.b16 %v268
      %v333 = vpack.c.b16 %v305, %v301
      %v334 = vpack.c.b16 %v306, %v302
      %v335 = vpack.c.b16 %v307, %v303
      %v336 = vpack.c.b16 %v308, %v304
      %v337 = vpack.c.b16 %v313, %v309
      %v338 = vpack.c.b16 %v314, %v310
      %v339 = vpack.c.b16 %v315, %v311
      %v340 = vpack.c.b16 %v316, %v312
      %v341 = vpack.c.b16 %v321, %v317
      %v342 = vpack.c.b16 %v322, %v318
      %v343 = vpack.c.b16 %v323, %v319
      %v344 = vpack.c.b16 %v324, %v320
      %v345 = vpack.c.b16 %v329, %v325
      %v346 = vpack.c.b16 %v330, %v326
      %v347 = vpack.c.b16 %v331, %v327
      %v348 = vpack.c.b16 %v332, %v328
      %v381 = vunpack.c.l.b16 %v269
      %v382 = vunpack.c.h.b16 %v269
      %v383 = vunpack.c.l.b16 %v270
      %v384 = vunpack.c.h.b16 %v270
      %v385 = vunpack.c.l.b16 %v271
      %v386 = vunpack.c.h.b16 %v271
      %v387 = vunpack.c.l.b16 %v272
      %v388 = vunpack.c.h.b16 %v272
      %v389 = vunpack.c.l.b16 %v273
      %v390 = vunpack.c.h.b16 %v273
      %v391 = vunpack.c.l.b16 %v274
      %v392 = vunpack.c.h.b16 %v274
      %v393 = vunpack.c.l.b16 %v275
      %v394 = vunpack.c.h.b16 %v275
      %v395 = vunpack.c.l.b16 %v276
      %v396 = vunpack.c.h.b16 %v276
      %v397 = vunpack.c.l.b16 %v277
      %v398 = vunpack.c.h.b16 %v277
      %v399 = vunpack.c.l.b16 %v278
      %v400 = vunpack.c.h.b16 %v278
      %v401 = vunpack.c.l.b16 %v279
      %v402 = vunpack.c.h.b16 %v279
      %v403 = vunpack.c.l.b16 %v280
      %v404 = vunpack.c.h.b16 %v280
      %v405 = vunpack.c.l.b16 %v281
      %v406 = vunpack.c.h.b16 %v281
      %v407 = vunpack.c.l.b16 %v282
      %v408 = vunpack.c.h.b16 %v282
      %v409 = vunpack.c.l.b16 %v283
      %v410 = vunpack.c.h.b16 %v283
      %v411 = vunpack.c.l.b16 %v284
      %v412 = vunpack.c.h.b16 %v284
      %v413 = vpack.c.b16 %v385, %v381
      %v414 = vpack.c.b16 %v386, %v382
      %v415 = vpack.c.b16 %v387, %v383
      %v416 = vpack.c.b16 %v388, %v384
      %v417 = vpack.c.b16 %v393, %v389
      %v418 = vpack.c.b16 %v394, %v390
      %v419 = vpack.c.b16 %v395, %v391
      %v420 = vpack.c.b16 %v396, %v392
      %v421 = vpack.c.b16 %v401, %v397
      %v422 = vpack.c.b16 %v402, %v398
      %v423 = vpack.c.b16 %v403, %v399
      %v424 = vpack.c.b16 %v404, %v400
      %v425 = vpack.c.b16 %v409, %v405
      %v426 = vpack.c.b16 %v410, %v406
      %v427 = vpack.c.b16 %v411, %v407
      %v428 = vpack.c.b16 %v412, %v408
      %v445 = vld [vmem:[%s2] sm:$0xff]
      %v446 = vld [vmem:[%s2 + $0x8] sm:$0xff]
      %v447 = vld [vmem:[%s2 + $0x10] sm:$0xff]
      %v448 = vld [vmem:[%s2 + $0x18] sm:$0xff]
      %v449 = vld [vmem:[%s2 + $0x20] sm:$0xff]
      %v450 = vld [vmem:[%s2 + $0x28] sm:$0xff]
      %v451 = vld [vmem:[%s2 + $0x30] sm:$0xff]
      %v452 = vld [vmem:[%s2 + $0x38] sm:$0xff]
      %v453 = vld [vmem:[%s2 + $0x40] sm:$0xff]
      %v454 = vld [vmem:[%s2 + $0x48] sm:$0xff]
      %v455 = vld [vmem:[%s2 + $0x50] sm:$0xff]
      %v456 = vld [vmem:[%s2 + $0x58] sm:$0xff]
      %v457 = vld [vmem:[%s2 + $0x60] sm:$0xff]
      %v458 = vld [vmem:[%s2 + $0x68] sm:$0xff]
      %v459 = vld [vmem:[%s2 + $0x70] sm:$0xff]
      %v460 = vld [vmem:[%s2 + $0x78] sm:$0xff]
      %v461 = vld [vmem:[%s2 + $0x80] sm:$0xff]
      %v462 = vld [vmem:[%s2 + $0x88] sm:$0xff]
      %v463 = vld [vmem:[%s2 + $0x90] sm:$0xff]
      %v464 = vld [vmem:[%s2 + $0x98] sm:$0xff]
      %v465 = vld [vmem:[%s2 + $0xa0] sm:$0xff]
      %v466 = vld [vmem:[%s2 + $0xa8] sm:$0xff]
      %v467 = vld [vmem:[%s2 + $0xb0] sm:$0xff]
      %v468 = vld [vmem:[%s2 + $0xb8] sm:$0xff]
      %v469 = vld [vmem:[%s2 + $0xc0] sm:$0xff]
      %v470 = vld [vmem:[%s2 + $0xc8] sm:$0xff]
      %v471 = vld [vmem:[%s2 + $0xd0] sm:$0xff]
      %v472 = vld [vmem:[%s2 + $0xd8] sm:$0xff]
      %v473 = vld [vmem:[%s2 + $0xe0] sm:$0xff]
      %v474 = vld [vmem:[%s2 + $0xe8] sm:$0xff]
      %v475 = vld [vmem:[%s2 + $0xf0] sm:$0xff]
      %v476 = vld [vmem:[%s2 + $0xf8] sm:$0xff]
      %v477 = vld [vmem:[%s2 + $0x100] sm:$0xff]
      %v478 = vld [vmem:[%s2 + $0x108] sm:$0xff]
      %v479 = vld [vmem:[%s2 + $0x110] sm:$0xff]
      %v480 = vld [vmem:[%s2 + $0x118] sm:$0xff]
      %v481 = vld [vmem:[%s2 + $0x120] sm:$0xff]
      %v482 = vld [vmem:[%s2 + $0x128] sm:$0xff]
      %v483 = vld [vmem:[%s2 + $0x130] sm:$0xff]
      %v484 = vld [vmem:[%s2 + $0x138] sm:$0xff]
      %v485 = vld [vmem:[%s2 + $0x140] sm:$0xff]
      %v486 = vld [vmem:[%s2 + $0x148] sm:$0xff]
      %v487 = vld [vmem:[%s2 + $0x150] sm:$0xff]
      %v488 = vld [vmem:[%s2 + $0x158] sm:$0xff]
      %v489 = vld [vmem:[%s2 + $0x160] sm:$0xff]
      %v490 = vld [vmem:[%s2 + $0x168] sm:$0xff]
      %v491 = vld [vmem:[%s2 + $0x170] sm:$0xff]
      %v492 = vld [vmem:[%s2 + $0x178] sm:$0xff]
      %v493 = vld [vmem:[%s2 + $0x180] sm:$0xff]
      %v494 = vld [vmem:[%s2 + $0x188] sm:$0xff]
      %v495 = vld [vmem:[%s2 + $0x190] sm:$0xff]
      %v496 = vld [vmem:[%s2 + $0x198] sm:$0xff]
      %v497 = vld [vmem:[%s2 + $0x1a0] sm:$0xff]
      %v498 = vld [vmem:[%s2 + $0x1a8] sm:$0xff]
      %v499 = vld [vmem:[%s2 + $0x1b0] sm:$0xff]
      %v500 = vld [vmem:[%s2 + $0x1b8] sm:$0xff]
      %v501 = vld [vmem:[%s2 + $0x1c0] sm:$0xff]
      %v502 = vld [vmem:[%s2 + $0x1c8] sm:$0xff]
      %v503 = vld [vmem:[%s2 + $0x1d0] sm:$0xff]
      %v504 = vld [vmem:[%s2 + $0x1d8] sm:$0xff]
      %v505 = vld [vmem:[%s2 + $0x1e0] sm:$0xff]
      %v506 = vld [vmem:[%s2 + $0x1e8] sm:$0xff]
      %v507 = vld [vmem:[%s2 + $0x1f0] sm:$0xff]
      %v508 = vld [vmem:[%s2 + $0x1f8] sm:$0xff]
      %v573 = vunpack.c.l.b16 %v445
      %v574 = vunpack.c.h.b16 %v445
      %v575 = vunpack.c.l.b16 %v446
      %v576 = vunpack.c.h.b16 %v446
      %v577 = vunpack.c.l.b16 %v447
      %v578 = vunpack.c.h.b16 %v447
      %v579 = vunpack.c.l.b16 %v448
      %v580 = vunpack.c.h.b16 %v448
      %v581 = vunpack.c.l.b16 %v449
      %v582 = vunpack.c.h.b16 %v449
      %v583 = vunpack.c.l.b16 %v450
      %v584 = vunpack.c.h.b16 %v450
      %v585 = vunpack.c.l.b16 %v451
      %v586 = vunpack.c.h.b16 %v451
      %v587 = vunpack.c.l.b16 %v452
      %v588 = vunpack.c.h.b16 %v452
      %v589 = vunpack.c.l.b16 %v453
      %v590 = vunpack.c.h.b16 %v453
      %v591 = vunpack.c.l.b16 %v454
      %v592 = vunpack.c.h.b16 %v454
      %v593 = vunpack.c.l.b16 %v455
      %v594 = vunpack.c.h.b16 %v455
      %v595 = vunpack.c.l.b16 %v456
      %v596 = vunpack.c.h.b16 %v456
      %v597 = vunpack.c.l.b16 %v457
      %v598 = vunpack.c.h.b16 %v457
      %v599 = vunpack.c.l.b16 %v458
      %v600 = vunpack.c.h.b16 %v458
      %v601 = vunpack.c.l.b16 %v459
      %v602 = vunpack.c.h.b16 %v459
      %v603 = vunpack.c.l.b16 %v460
      %v604 = vunpack.c.h.b16 %v460
      %v605 = vunpack.c.l.b16 %v461
      %v606 = vunpack.c.h.b16 %v461
      %v607 = vunpack.c.l.b16 %v462
      %v608 = vunpack.c.h.b16 %v462
      %v609 = vunpack.c.l.b16 %v463
      %v610 = vunpack.c.h.b16 %v463
      %v611 = vunpack.c.l.b16 %v464
      %v612 = vunpack.c.h.b16 %v464
      %v613 = vunpack.c.l.b16 %v465
      %v614 = vunpack.c.h.b16 %v465
      %v615 = vunpack.c.l.b16 %v466
      %v616 = vunpack.c.h.b16 %v466
      %v617 = vunpack.c.l.b16 %v467
      %v618 = vunpack.c.h.b16 %v467
      %v619 = vunpack.c.l.b16 %v468
      %v620 = vunpack.c.h.b16 %v468
      %v621 = vunpack.c.l.b16 %v469
      %v622 = vunpack.c.h.b16 %v469
      %v623 = vunpack.c.l.b16 %v470
      %v624 = vunpack.c.h.b16 %v470
      %v625 = vunpack.c.l.b16 %v471
      %v626 = vunpack.c.h.b16 %v471
      %v627 = vunpack.c.l.b16 %v472
      %v628 = vunpack.c.h.b16 %v472
      %v629 = vunpack.c.l.b16 %v473
      %v630 = vunpack.c.h.b16 %v473
      %v631 = vunpack.c.l.b16 %v474
      %v632 = vunpack.c.h.b16 %v474
      %v633 = vunpack.c.l.b16 %v475
      %v634 = vunpack.c.h.b16 %v475
      %v635 = vunpack.c.l.b16 %v476
      %v636 = vunpack.c.h.b16 %v476
      %v637 = vunpack.c.l.b16 %v477
      %v638 = vunpack.c.h.b16 %v477
      %v639 = vunpack.c.l.b16 %v478
      %v640 = vunpack.c.h.b16 %v478
      %v641 = vunpack.c.l.b16 %v479
      %v642 = vunpack.c.h.b16 %v479
      %v643 = vunpack.c.l.b16 %v480
      %v644 = vunpack.c.h.b16 %v480
      %v645 = vunpack.c.l.b16 %v481
      %v646 = vunpack.c.h.b16 %v481
      %v647 = vunpack.c.l.b16 %v482
      %v648 = vunpack.c.h.b16 %v482
      %v649 = vunpack.c.l.b16 %v483
      %v650 = vunpack.c.h.b16 %v483
      %v651 = vunpack.c.l.b16 %v484
      %v652 = vunpack.c.h.b16 %v484
      %v653 = vunpack.c.l.b16 %v485
      %v654 = vunpack.c.h.b16 %v485
      %v655 = vunpack.c.l.b16 %v486
      %v656 = vunpack.c.h.b16 %v486
      %v657 = vunpack.c.l.b16 %v487
      %v658 = vunpack.c.h.b16 %v487
      %v659 = vunpack.c.l.b16 %v488
      %v660 = vunpack.c.h.b16 %v488
      %v661 = vunpack.c.l.b16 %v489
      %v662 = vunpack.c.h.b16 %v489
      %v663 = vunpack.c.l.b16 %v490
      %v664 = vunpack.c.h.b16 %v490
      %v665 = vunpack.c.l.b16 %v491
      %v666 = vunpack.c.h.b16 %v491
      %v667 = vunpack.c.l.b16 %v492
      %v668 = vunpack.c.h.b16 %v492
      %v669 = vunpack.c.l.b16 %v493
      %v670 = vunpack.c.h.b16 %v493
      %v671 = vunpack.c.l.b16 %v494
      %v672 = vunpack.c.h.b16 %v494
      %v673 = vunpack.c.l.b16 %v495
      %v674 = vunpack.c.h.b16 %v495
      %v675 = vunpack.c.l.b16 %v496
      %v676 = vunpack.c.h.b16 %v496
      %v677 = vunpack.c.l.b16 %v497
      %v678 = vunpack.c.h.b16 %v497
      %v679 = vunpack.c.l.b16 %v498
      %v680 = vunpack.c.h.b16 %v498
      %v681 = vunpack.c.l.b16 %v499
      %v682 = vunpack.c.h.b16 %v499
      %v683 = vunpack.c.l.b16 %v500
      %v684 = vunpack.c.h.b16 %v500
      %v685 = vunpack.c.l.b16 %v501
      %v686 = vunpack.c.h.b16 %v501
      %v687 = vunpack.c.l.b16 %v502
      %v688 = vunpack.c.h.b16 %v502
      %v689 = vunpack.c.l.b16 %v503
      %v690 = vunpack.c.h.b16 %v503
      %v691 = vunpack.c.l.b16 %v504
      %v692 = vunpack.c.h.b16 %v504
      %v693 = vunpack.c.l.b16 %v505
      %v694 = vunpack.c.h.b16 %v505
      %v695 = vunpack.c.l.b16 %v506
      %v696 = vunpack.c.h.b16 %v506
      %v697 = vunpack.c.l.b16 %v507
      %v698 = vunpack.c.h.b16 %v507
      %v699 = vunpack.c.l.b16 %v508
      %v700 = vunpack.c.h.b16 %v508
      %v701 = vpack.c.b16 %v575, %v573
      %v702 = vpack.c.b16 %v576, %v574
      %v703 = vpack.c.b16 %v579, %v577
      %v704 = vpack.c.b16 %v580, %v578
      %v705 = vpack.c.b16 %v583, %v581
      %v706 = vpack.c.b16 %v584, %v582
      %v707 = vpack.c.b16 %v587, %v585
      %v708 = vpack.c.b16 %v588, %v586
      %v709 = vpack.c.b16 %v591, %v589
      %v710 = vpack.c.b16 %v592, %v590
      %v711 = vpack.c.b16 %v595, %v593
      %v712 = vpack.c.b16 %v596, %v594
      %v713 = vpack.c.b16 %v599, %v597
      %v714 = vpack.c.b16 %v600, %v598
      %v715 = vpack.c.b16 %v603, %v601
      %v716 = vpack.c.b16 %v604, %v602
      %v717 = vpack.c.b16 %v607, %v605
      %v718 = vpack.c.b16 %v608, %v606
      %v719 = vpack.c.b16 %v611, %v609
      %v720 = vpack.c.b16 %v612, %v610
      %v721 = vpack.c.b16 %v615, %v613
      %v722 = vpack.c.b16 %v616, %v614
      %v723 = vpack.c.b16 %v619, %v617
      %v724 = vpack.c.b16 %v620, %v618
      %v725 = vpack.c.b16 %v623, %v621
      %v726 = vpack.c.b16 %v624, %v622
      %v727 = vpack.c.b16 %v627, %v625
      %v728 = vpack.c.b16 %v628, %v626
      %v729 = vpack.c.b16 %v631, %v629
      %v730 = vpack.c.b16 %v632, %v630
      %v731 = vpack.c.b16 %v635, %v633
      %v732 = vpack.c.b16 %v636, %v634
      %v733 = vpack.c.b16 %v639, %v637
      %v734 = vpack.c.b16 %v640, %v638
      %v735 = vpack.c.b16 %v643, %v641
      %v736 = vpack.c.b16 %v644, %v642
      %v737 = vpack.c.b16 %v647, %v645
      %v738 = vpack.c.b16 %v648, %v646
      %v739 = vpack.c.b16 %v651, %v649
      %v740 = vpack.c.b16 %v652, %v650
      %v741 = vpack.c.b16 %v655, %v653
      %v742 = vpack.c.b16 %v656, %v654
      %v743 = vpack.c.b16 %v659, %v657
      %v744 = vpack.c.b16 %v660, %v658
      %v745 = vpack.c.b16 %v663, %v661
      %v746 = vpack.c.b16 %v664, %v662
      %v747 = vpack.c.b16 %v667, %v665
      %v748 = vpack.c.b16 %v668, %v666
      %v749 = vpack.c.b16 %v671, %v669
      %v750 = vpack.c.b16 %v672, %v670
      %v751 = vpack.c.b16 %v675, %v673
      %v752 = vpack.c.b16 %v676, %v674
      %v753 = vpack.c.b16 %v679, %v677
      %v754 = vpack.c.b16 %v680, %v678
      %v755 = vpack.c.b16 %v683, %v681
      %v756 = vpack.c.b16 %v684, %v682
      %v757 = vpack.c.b16 %v687, %v685
      %v758 = vpack.c.b16 %v688, %v686
      %v759 = vpack.c.b16 %v691, %v689
      %v760 = vpack.c.b16 %v692, %v690
      %v761 = vpack.c.b16 %v695, %v693
      %v762 = vpack.c.b16 %v696, %v694
      %v763 = vpack.c.b16 %v699, %v697
      %v764 = vpack.c.b16 %v700, %v698
      %829 = vmatpush.bf16.msra.mxu0 %v715
      %830 = vmatpush.bf16.msra.mxu0 %v713
      %831 = vmatpush.bf16.msra.mxu0 %v711
      %832 = vmatpush.bf16.msra.mxu0 %v709
      %833 = vmatpush.bf16.msra.mxu0 %v707
      %834 = vmatpush.bf16.msra.mxu0 %v705
      %835 = vmatpush.bf16.msra.mxu0 %v703
      %836 = vmatpush.bf16.msra.mxu0 %v701
      %837 = vmatmul.bf16.gmra.mxu0 %v333
      %v838 = vpop.f32.mrf.mxu0
      %v839 = vadd.f32 0.0, %v838
      %v840 = vpop.f32.mrf.mxu0
      %v841 = vadd.f32 0.0, %v840
      %842 = vmatmul.bf16.gmra.mxu0 %v337
      %v843 = vpop.f32.mrf.mxu0
      %v844 = vadd.f32 0.0, %v843
      %v845 = vpop.f32.mrf.mxu0
      %v846 = vadd.f32 0.0, %v845
      %847 = vmatmul.bf16.gmra.mxu0 %v341
      %v848 = vpop.f32.mrf.mxu0
      %v849 = vadd.f32 0.0, %v848
      %v850 = vpop.f32.mrf.mxu0
      %v851 = vadd.f32 0.0, %v850
      %852 = vmatmul.bf16.gmra.mxu0 %v345
      %v853 = vpop.f32.mrf.mxu0
      %v854 = vadd.f32 0.0, %v853
      %v855 = vpop.f32.mrf.mxu0
      %v856 = vadd.f32 0.0, %v855
      %857 = vmatmul.bf16.gmra.mxu0 %v413
      %v858 = vpop.f32.mrf.mxu0
      %v859 = vadd.f32 0.0, %v858
      %v860 = vpop.f32.mrf.mxu0
      %v861 = vadd.f32 0.0, %v860
      %862 = vmatmul.bf16.gmra.mxu0 %v417
      %v863 = vpop.f32.mrf.mxu0
      %v864 = vadd.f32 0.0, %v863
      %v865 = vpop.f32.mrf.mxu0
      %v866 = vadd.f32 0.0, %v865
      %867 = vmatmul.bf16.gmra.mxu0 %v421
      %v868 = vpop.f32.mrf.mxu0
      %v869 = vadd.f32 0.0, %v868
      %v870 = vpop.f32.mrf.mxu0
      %v871 = vadd.f32 0.0, %v870
      %872 = vmatmul.bf16.gmra.mxu0 %v425
      %v873 = vpop.f32.mrf.mxu0
      %v874 = vadd.f32 0.0, %v873
      %v875 = vpop.f32.mrf.mxu0
      %v876 = vadd.f32 0.0, %v875
      %877 = vdwg.mxu0
      %878 = vmatpush.bf16.msra.mxu0 %v731
      %879 = vmatpush.bf16.msra.mxu0 %v729
      %880 = vmatpush.bf16.msra.mxu0 %v727
      %881 = vmatpush.bf16.msra.mxu0 %v725
      %882 = vmatpush.bf16.msra.mxu0 %v723
      %883 = vmatpush.bf16.msra.mxu0 %v721
      %884 = vmatpush.bf16.msra.mxu0 %v719
      %885 = vmatpush.bf16.msra.mxu0 %v717
      %886 = vmatmul.bf16.gmra.mxu0 %v334
      %v887 = vpop.f32.mrf.mxu0
      %v888 = vadd.f32 %v839, %v887
      %v889 = vpop.f32.mrf.mxu0
      %v890 = vadd.f32 %v841, %v889
      %891 = vmatmul.bf16.gmra.mxu0 %v338
      %v892 = vpop.f32.mrf.mxu0
      %v893 = vadd.f32 %v844, %v892
      %v894 = vpop.f32.mrf.mxu0
      %v895 = vadd.f32 %v846, %v894
      %896 = vmatmul.bf16.gmra.mxu0 %v342
      %v897 = vpop.f32.mrf.mxu0
      %v898 = vadd.f32 %v849, %v897
      %v899 = vpop.f32.mrf.mxu0
      %v900 = vadd.f32 %v851, %v899
      %901 = vmatmul.bf16.gmra.mxu0 %v346
      %v902 = vpop.f32.mrf.mxu0
      %v903 = vadd.f32 %v854, %v902
      %v904 = vpop.f32.mrf.mxu0
      %v905 = vadd.f32 %v856, %v904
      %906 = vmatmul.bf16.gmra.mxu0 %v414
      %v907 = vpop.f32.mrf.mxu0
      %v908 = vadd.f32 %v859, %v907
      %v909 = vpop.f32.mrf.mxu0
      %v910 = vadd.f32 %v861, %v909
      %911 = vmatmul.bf16.gmra.mxu0 %v418
      %v912 = vpop.f32.mrf.mxu0
      %v913 = vadd.f32 %v864, %v912
      %v914 = vpop.f32.mrf.mxu0
      %v915 = vadd.f32 %v866, %v914
      %916 = vmatmul.bf16.gmra.mxu0 %v422
      %v917 = vpop.f32.mrf.mxu0
      %v918 = vadd.f32 %v869, %v917
      %v919 = vpop.f32.mrf.mxu0
      %v920 = vadd.f32 %v871, %v919
      %921 = vmatmul.bf16.gmra.mxu0 %v426
      %v922 = vpop.f32.mrf.mxu0
      %v923 = vadd.f32 %v874, %v922
      %v924 = vpop.f32.mrf.mxu0
      %v925 = vadd.f32 %v876, %v924
      %926 = vdwg.mxu0
      %927 = vmatpush.bf16.msra.mxu0 %v747
      %928 = vmatpush.bf16.msra.mxu0 %v745
      %929 = vmatpush.bf16.msra.mxu0 %v743
      %930 = vmatpush.bf16.msra.mxu0 %v741
      %931 = vmatpush.bf16.msra.mxu0 %v739
      %932 = vmatpush.bf16.msra.mxu0 %v737
      %933 = vmatpush.bf16.msra.mxu0 %v735
      %934 = vmatpush.bf16.msra.mxu0 %v733
      %935 = vmatmul.bf16.gmra.mxu0 %v335
      %v936 = vpop.f32.mrf.mxu0
      %v937 = vadd.f32 %v888, %v936
      %v938 = vpop.f32.mrf.mxu0
      %v939 = vadd.f32 %v890, %v938
      %940 = vmatmul.bf16.gmra.mxu0 %v339
      %v941 = vpop.f32.mrf.mxu0
      %v942 = vadd.f32 %v893, %v941
      %v943 = vpop.f32.mrf.mxu0
      %v944 = vadd.f32 %v895, %v943
      %945 = vmatmul.bf16.gmra.mxu0 %v343
      %v946 = vpop.f32.mrf.mxu0
      %v947 = vadd.f32 %v898, %v946
      %v948 = vpop.f32.mrf.mxu0
      %v949 = vadd.f32 %v900, %v948
      %950 = vmatmul.bf16.gmra.mxu0 %v347
      %v951 = vpop.f32.mrf.mxu0
      %v952 = vadd.f32 %v903, %v951
      %v953 = vpop.f32.mrf.mxu0
      %v954 = vadd.f32 %v905, %v953
      %955 = vmatmul.bf16.gmra.mxu0 %v415
      %v956 = vpop.f32.mrf.mxu0
      %v957 = vadd.f32 %v908, %v956
      %v958 = vpop.f32.mrf.mxu0
      %v959 = vadd.f32 %v910, %v958
      %960 = vmatmul.bf16.gmra.mxu0 %v419
      %v961 = vpop.f32.mrf.mxu0
      %v962 = vadd.f32 %v913, %v961
      %v963 = vpop.f32.mrf.mxu0
      %v964 = vadd.f32 %v915, %v963
      %965 = vmatmul.bf16.gmra.mxu0 %v423
      %v966 = vpop.f32.mrf.mxu0
      %v967 = vadd.f32 %v918, %v966
      %v968 = vpop.f32.mrf.mxu0
      %v969 = vadd.f32 %v920, %v968
      %970 = vmatmul.bf16.gmra.mxu0 %v427
      %v971 = vpop.f32.mrf.mxu0
      %v972 = vadd.f32 %v923, %v971
      %v973 = vpop.f32.mrf.mxu0
      %v974 = vadd.f32 %v925, %v973
      %975 = vdwg.mxu0
      %976 = vmatpush.bf16.msra.mxu0 %v763
      %977 = vmatpush.bf16.msra.mxu0 %v761
      %978 = vmatpush.bf16.msra.mxu0 %v759
      %979 = vmatpush.bf16.msra.mxu0 %v757
      %980 = vmatpush.bf16.msra.mxu0 %v755
      %981 = vmatpush.bf16.msra.mxu0 %v753
      %982 = vmatpush.bf16.msra.mxu0 %v751
      %983 = vmatpush.bf16.msra.mxu0 %v749
      %984 = vmatmul.bf16.gmra.mxu0 %v336
      %v985 = vpop.f32.mrf.mxu0
      %v986 = vadd.f32 %v937, %v985
      %v987 = vpop.f32.mrf.mxu0
      %v988 = vadd.f32 %v939, %v987
      %989 = vmatmul.bf16.gmra.mxu0 %v340
      %v990 = vpop.f32.mrf.mxu0
      %v991 = vadd.f32 %v942, %v990
      %v992 = vpop.f32.mrf.mxu0
      %v993 = vadd.f32 %v944, %v992
      %994 = vmatmul.bf16.gmra.mxu0 %v344
      %v995 = vpop.f32.mrf.mxu0
      %v996 = vadd.f32 %v947, %v995
      %v997 = vpop.f32.mrf.mxu0
      %v998 = vadd.f32 %v949, %v997
      %999 = vmatmul.bf16.gmra.mxu0 %v348
      %v1000 = vpop.f32.mrf.mxu0
      %v1001 = vadd.f32 %v952, %v1000
      %v1002 = vpop.f32.mrf.mxu0
      %v1003 = vadd.f32 %v954, %v1002
      %1004 = vmatmul.bf16.gmra.mxu0 %v416
      %v1005 = vpop.f32.mrf.mxu0
      %v1006 = vadd.f32 %v957, %v1005
      %v1007 = vpop.f32.mrf.mxu0
      %v1008 = vadd.f32 %v959, %v1007
      %1009 = vmatmul.bf16.gmra.mxu0 %v420
      %v1010 = vpop.f32.mrf.mxu0
      %v1011 = vadd.f32 %v962, %v1010
      %v1012 = vpop.f32.mrf.mxu0
      %v1013 = vadd.f32 %v964, %v1012
      %1014 = vmatmul.bf16.gmra.mxu0 %v424
      %v1015 = vpop.f32.mrf.mxu0
      %v1016 = vadd.f32 %v967, %v1015
      %v1017 = vpop.f32.mrf.mxu0
      %v1018 = vadd.f32 %v969, %v1017
      %1019 = vmatmul.bf16.gmra.mxu0 %v428
      %v1020 = vpop.f32.mrf.mxu0
      %v1021 = vadd.f32 %v972, %v1020
      %v1022 = vpop.f32.mrf.mxu0
      %v1023 = vadd.f32 %v974, %v1022
      %1024 = vdwg.mxu0
      %1025 = vmatpush.bf16.msra.mxu0 %v716
      %1026 = vmatpush.bf16.msra.mxu0 %v714
      %1027 = vmatpush.bf16.msra.mxu0 %v712
      %1028 = vmatpush.bf16.msra.mxu0 %v710
      %1029 = vmatpush.bf16.msra.mxu0 %v708
      %1030 = vmatpush.bf16.msra.mxu0 %v706
      %1031 = vmatpush.bf16.msra.mxu0 %v704
      %1032 = vmatpush.bf16.msra.mxu0 %v702
      %1033 = vmatmul.bf16.gmra.mxu0 %v333
      %v1034 = vpop.f32.mrf.mxu0
      %v1035 = vadd.f32 0.0, %v1034
      %v1036 = vpop.f32.mrf.mxu0
      %v1037 = vadd.f32 0.0, %v1036
      %1038 = vmatmul.bf16.gmra.mxu0 %v337
      %v1039 = vpop.f32.mrf.mxu0
      %v1040 = vadd.f32 0.0, %v1039
      %v1041 = vpop.f32.mrf.mxu0
      %v1042 = vadd.f32 0.0, %v1041
      %1043 = vmatmul.bf16.gmra.mxu0 %v341
      %v1044 = vpop.f32.mrf.mxu0
      %v1045 = vadd.f32 0.0, %v1044
      %v1046 = vpop.f32.mrf.mxu0
      %v1047 = vadd.f32 0.0, %v1046
      %1048 = vmatmul.bf16.gmra.mxu0 %v345
      %v1049 = vpop.f32.mrf.mxu0
      %v1050 = vadd.f32 0.0, %v1049
      %v1051 = vpop.f32.mrf.mxu0
      %v1052 = vadd.f32 0.0, %v1051
      %1053 = vmatmul.bf16.gmra.mxu0 %v413
      %v1054 = vpop.f32.mrf.mxu0
      %v1055 = vadd.f32 0.0, %v1054
      %v1056 = vpop.f32.mrf.mxu0
      %v1057 = vadd.f32 0.0, %v1056
      %1058 = vmatmul.bf16.gmra.mxu0 %v417
      %v1059 = vpop.f32.mrf.mxu0
      %v1060 = vadd.f32 0.0, %v1059
      %v1061 = vpop.f32.mrf.mxu0
      %v1062 = vadd.f32 0.0, %v1061
      %1063 = vmatmul.bf16.gmra.mxu0 %v421
      %v1064 = vpop.f32.mrf.mxu0
      %v1065 = vadd.f32 0.0, %v1064
      %v1066 = vpop.f32.mrf.mxu0
      %v1067 = vadd.f32 0.0, %v1066
      %1068 = vmatmul.bf16.gmra.mxu0 %v425
      %v1069 = vpop.f32.mrf.mxu0
      %v1070 = vadd.f32 0.0, %v1069
      %v1071 = vpop.f32.mrf.mxu0
      %v1072 = vadd.f32 0.0, %v1071
      %1073 = vdwg.mxu0
      %1074 = vmatpush.bf16.msra.mxu0 %v732
      %1075 = vmatpush.bf16.msra.mxu0 %v730
      %1076 = vmatpush.bf16.msra.mxu0 %v728
      %1077 = vmatpush.bf16.msra.mxu0 %v726
      %1078 = vmatpush.bf16.msra.mxu0 %v724
      %1079 = vmatpush.bf16.msra.mxu0 %v722
      %1080 = vmatpush.bf16.msra.mxu0 %v720
      %1081 = vmatpush.bf16.msra.mxu0 %v718
      %1082 = vmatmul.bf16.gmra.mxu0 %v334
      %v1083 = vpop.f32.mrf.mxu0
      %v1084 = vadd.f32 %v1035, %v1083
      %v1085 = vpop.f32.mrf.mxu0
      %v1086 = vadd.f32 %v1037, %v1085
      %1087 = vmatmul.bf16.gmra.mxu0 %v338
      %v1088 = vpop.f32.mrf.mxu0
      %v1089 = vadd.f32 %v1040, %v1088
      %v1090 = vpop.f32.mrf.mxu0
      %v1091 = vadd.f32 %v1042, %v1090
      %1092 = vmatmul.bf16.gmra.mxu0 %v342
      %v1093 = vpop.f32.mrf.mxu0
      %v1094 = vadd.f32 %v1045, %v1093
      %v1095 = vpop.f32.mrf.mxu0
      %v1096 = vadd.f32 %v1047, %v1095
      %1097 = vmatmul.bf16.gmra.mxu0 %v346
      %v1098 = vpop.f32.mrf.mxu0
      %v1099 = vadd.f32 %v1050, %v1098
      %v1100 = vpop.f32.mrf.mxu0
      %v1101 = vadd.f32 %v1052, %v1100
      %1102 = vmatmul.bf16.gmra.mxu0 %v414
      %v1103 = vpop.f32.mrf.mxu0
      %v1104 = vadd.f32 %v1055, %v1103
      %v1105 = vpop.f32.mrf.mxu0
      %v1106 = vadd.f32 %v1057, %v1105
      %1107 = vmatmul.bf16.gmra.mxu0 %v418
      %v1108 = vpop.f32.mrf.mxu0
      %v1109 = vadd.f32 %v1060, %v1108
      %v1110 = vpop.f32.mrf.mxu0
      %v1111 = vadd.f32 %v1062, %v1110
      %1112 = vmatmul.bf16.gmra.mxu0 %v422
      %v1113 = vpop.f32.mrf.mxu0
      %v1114 = vadd.f32 %v1065, %v1113
      %v1115 = vpop.f32.mrf.mxu0
      %v1116 = vadd.f32 %v1067, %v1115
      %1117 = vmatmul.bf16.gmra.mxu0 %v426
      %v1118 = vpop.f32.mrf.mxu0
      %v1119 = vadd.f32 %v1070, %v1118
      %v1120 = vpop.f32.mrf.mxu0
      %v1121 = vadd.f32 %v1072, %v1120
      %1122 = vdwg.mxu0
      %1123 = vmatpush.bf16.msra.mxu0 %v748
      %1124 = vmatpush.bf16.msra.mxu0 %v746
      %1125 = vmatpush.bf16.msra.mxu0 %v744
      %1126 = vmatpush.bf16.msra.mxu0 %v742
      %1127 = vmatpush.bf16.msra.mxu0 %v740
      %1128 = vmatpush.bf16.msra.mxu0 %v738
      %1129 = vmatpush.bf16.msra.mxu0 %v736
      %1130 = vmatpush.bf16.msra.mxu0 %v734
      %1131 = vmatmul.bf16.gmra.mxu0 %v335
      %v1132 = vpop.f32.mrf.mxu0
      %v1133 = vadd.f32 %v1084, %v1132
      %v1134 = vpop.f32.mrf.mxu0
      %v1135 = vadd.f32 %v1086, %v1134
      %1136 = vmatmul.bf16.gmra.mxu0 %v339
      %v1137 = vpop.f32.mrf.mxu0
      %v1138 = vadd.f32 %v1089, %v1137
      %v1139 = vpop.f32.mrf.mxu0
      %v1140 = vadd.f32 %v1091, %v1139
      %1141 = vmatmul.bf16.gmra.mxu0 %v343
      %v1142 = vpop.f32.mrf.mxu0
      %v1143 = vadd.f32 %v1094, %v1142
      %v1144 = vpop.f32.mrf.mxu0
      %v1145 = vadd.f32 %v1096, %v1144
      %1146 = vmatmul.bf16.gmra.mxu0 %v347
      %v1147 = vpop.f32.mrf.mxu0
      %v1148 = vadd.f32 %v1099, %v1147
      %v1149 = vpop.f32.mrf.mxu0
      %v1150 = vadd.f32 %v1101, %v1149
      %1151 = vmatmul.bf16.gmra.mxu0 %v415
      %v1152 = vpop.f32.mrf.mxu0
      %v1153 = vadd.f32 %v1104, %v1152
      %v1154 = vpop.f32.mrf.mxu0
      %v1155 = vadd.f32 %v1106, %v1154
      %1156 = vmatmul.bf16.gmra.mxu0 %v419
      %v1157 = vpop.f32.mrf.mxu0
      %v1158 = vadd.f32 %v1109, %v1157
      %v1159 = vpop.f32.mrf.mxu0
      %v1160 = vadd.f32 %v1111, %v1159
      %1161 = vmatmul.bf16.gmra.mxu0 %v423
      %v1162 = vpop.f32.mrf.mxu0
      %v1163 = vadd.f32 %v1114, %v1162
      %v1164 = vpop.f32.mrf.mxu0
      %v1165 = vadd.f32 %v1116, %v1164
      %1166 = vmatmul.bf16.gmra.mxu0 %v427
      %v1167 = vpop.f32.mrf.mxu0
      %v1168 = vadd.f32 %v1119, %v1167
      %v1169 = vpop.f32.mrf.mxu0
      %v1170 = vadd.f32 %v1121, %v1169
      %1171 = vdwg.mxu0
      %1172 = vmatpush.bf16.msra.mxu0 %v764
      %1173 = vmatpush.bf16.msra.mxu0 %v762
      %1174 = vmatpush.bf16.msra.mxu0 %v760
      %1175 = vmatpush.bf16.msra.mxu0 %v758
      %1176 = vmatpush.bf16.msra.mxu0 %v756
      %1177 = vmatpush.bf16.msra.mxu0 %v754
      %1178 = vmatpush.bf16.msra.mxu0 %v752
      %1179 = vmatpush.bf16.msra.mxu0 %v750
      %1180 = vmatmul.bf16.gmra.mxu0 %v336
      %v1181 = vpop.f32.mrf.mxu0
      %v1182 = vadd.f32 %v1133, %v1181
      %v1183 = vpop.f32.mrf.mxu0
      %v1184 = vadd.f32 %v1135, %v1183
      %1185 = vmatmul.bf16.gmra.mxu0 %v340
      %v1186 = vpop.f32.mrf.mxu0
      %v1187 = vadd.f32 %v1138, %v1186
      %v1188 = vpop.f32.mrf.mxu0
      %v1189 = vadd.f32 %v1140, %v1188
      %1190 = vmatmul.bf16.gmra.mxu0 %v344
      %v1191 = vpop.f32.mrf.mxu0
      %v1192 = vadd.f32 %v1143, %v1191
      %v1193 = vpop.f32.mrf.mxu0
      %v1194 = vadd.f32 %v1145, %v1193
      %1195 = vmatmul.bf16.gmra.mxu0 %v348
      %v1196 = vpop.f32.mrf.mxu0
      %v1197 = vadd.f32 %v1148, %v1196
      %v1198 = vpop.f32.mrf.mxu0
      %v1199 = vadd.f32 %v1150, %v1198
      %1200 = vmatmul.bf16.gmra.mxu0 %v416
      %v1201 = vpop.f32.mrf.mxu0
      %v1202 = vadd.f32 %v1153, %v1201
      %v1203 = vpop.f32.mrf.mxu0
      %v1204 = vadd.f32 %v1155, %v1203
      %1205 = vmatmul.bf16.gmra.mxu0 %v420
      %v1206 = vpop.f32.mrf.mxu0
      %v1207 = vadd.f32 %v1158, %v1206
      %v1208 = vpop.f32.mrf.mxu0
      %v1209 = vadd.f32 %v1160, %v1208
      %1210 = vmatmul.bf16.gmra.mxu0 %v424
      %v1211 = vpop.f32.mrf.mxu0
      %v1212 = vadd.f32 %v1163, %v1211
      %v1213 = vpop.f32.mrf.mxu0
      %v1214 = vadd.f32 %v1165, %v1213
      %1215 = vmatmul.bf16.gmra.mxu0 %v428
      %v1216 = vpop.f32.mrf.mxu0
      %v1217 = vadd.f32 %v1168, %v1216
      %v1218 = vpop.f32.mrf.mxu0
      %v1219 = vadd.f32 %v1170, %v1218
      %1220 = vdwg.mxu0
      %v1221 = vld [vmem:[%s3] sm:$0xff]
      %v1222 = vld [vmem:[%s3 + $0x8] sm:$0xff]
      %v1223 = vld [vmem:[%s3 + $0x10] sm:$0xff]
      %v1224 = vld [vmem:[%s3 + $0x18] sm:$0xff]
      %v1225 = vld [vmem:[%s3 + $0x20] sm:$0xff]
      %v1226 = vld [vmem:[%s3 + $0x28] sm:$0xff]
      %v1227 = vld [vmem:[%s3 + $0x30] sm:$0xff]
      %v1228 = vld [vmem:[%s3 + $0x38] sm:$0xff]
      %v1229 = vld [vmem:[%s3 + $0x40] sm:$0xff]
      %v1230 = vld [vmem:[%s3 + $0x48] sm:$0xff]
      %v1231 = vld [vmem:[%s3 + $0x50] sm:$0xff]
      %v1232 = vld [vmem:[%s3 + $0x58] sm:$0xff]
      %v1233 = vld [vmem:[%s3 + $0x60] sm:$0xff]
      %v1234 = vld [vmem:[%s3 + $0x68] sm:$0xff]
      %v1235 = vld [vmem:[%s3 + $0x70] sm:$0xff]
      %v1236 = vld [vmem:[%s3 + $0x78] sm:$0xff]
      %v1237 = vld [vmem:[%s3 + $0x80] sm:$0xff]
      %v1238 = vld [vmem:[%s3 + $0x88] sm:$0xff]
      %v1239 = vld [vmem:[%s3 + $0x90] sm:$0xff]
      %v1240 = vld [vmem:[%s3 + $0x98] sm:$0xff]
      %v1241 = vld [vmem:[%s3 + $0xa0] sm:$0xff]
      %v1242 = vld [vmem:[%s3 + $0xa8] sm:$0xff]
      %v1243 = vld [vmem:[%s3 + $0xb0] sm:$0xff]
      %v1244 = vld [vmem:[%s3 + $0xb8] sm:$0xff]
      %v1245 = vld [vmem:[%s3 + $0xc0] sm:$0xff]
      %v1246 = vld [vmem:[%s3 + $0xc8] sm:$0xff]
      %v1247 = vld [vmem:[%s3 + $0xd0] sm:$0xff]
      %v1248 = vld [vmem:[%s3 + $0xd8] sm:$0xff]
      %v1249 = vld [vmem:[%s3 + $0xe0] sm:$0xff]
      %v1250 = vld [vmem:[%s3 + $0xe8] sm:$0xff]
      %v1251 = vld [vmem:[%s3 + $0xf0] sm:$0xff]
      %v1252 = vld [vmem:[%s3 + $0xf8] sm:$0xff]
      %v1253 = vld [vmem:[%s3 + $0x100] sm:$0xff]
      %v1254 = vld [vmem:[%s3 + $0x108] sm:$0xff]
      %v1255 = vld [vmem:[%s3 + $0x110] sm:$0xff]
      %v1256 = vld [vmem:[%s3 + $0x118] sm:$0xff]
      %v1257 = vld [vmem:[%s3 + $0x120] sm:$0xff]
      %v1258 = vld [vmem:[%s3 + $0x128] sm:$0xff]
      %v1259 = vld [vmem:[%s3 + $0x130] sm:$0xff]
      %v1260 = vld [vmem:[%s3 + $0x138] sm:$0xff]
      %v1261 = vld [vmem:[%s3 + $0x140] sm:$0xff]
      %v1262 = vld [vmem:[%s3 + $0x148] sm:$0xff]
      %v1263 = vld [vmem:[%s3 + $0x150] sm:$0xff]
      %v1264 = vld [vmem:[%s3 + $0x158] sm:$0xff]
      %v1265 = vld [vmem:[%s3 + $0x160] sm:$0xff]
      %v1266 = vld [vmem:[%s3 + $0x168] sm:$0xff]
      %v1267 = vld [vmem:[%s3 + $0x170] sm:$0xff]
      %v1268 = vld [vmem:[%s3 + $0x178] sm:$0xff]
      %v1269 = vld [vmem:[%s3 + $0x180] sm:$0xff]
      %v1270 = vld [vmem:[%s3 + $0x188] sm:$0xff]
      %v1271 = vld [vmem:[%s3 + $0x190] sm:$0xff]
      %v1272 = vld [vmem:[%s3 + $0x198] sm:$0xff]
      %v1273 = vld [vmem:[%s3 + $0x1a0] sm:$0xff]
      %v1274 = vld [vmem:[%s3 + $0x1a8] sm:$0xff]
      %v1275 = vld [vmem:[%s3 + $0x1b0] sm:$0xff]
      %v1276 = vld [vmem:[%s3 + $0x1b8] sm:$0xff]
      %v1277 = vld [vmem:[%s3 + $0x1c0] sm:$0xff]
      %v1278 = vld [vmem:[%s3 + $0x1c8] sm:$0xff]
      %v1279 = vld [vmem:[%s3 + $0x1d0] sm:$0xff]
      %v1280 = vld [vmem:[%s3 + $0x1d8] sm:$0xff]
      %v1281 = vld [vmem:[%s3 + $0x1e0] sm:$0xff]
      %v1282 = vld [vmem:[%s3 + $0x1e8] sm:$0xff]
      %v1283 = vld [vmem:[%s3 + $0x1f0] sm:$0xff]
      %v1284 = vld [vmem:[%s3 + $0x1f8] sm:$0xff]
      %v1349 = vunpack.c.l.b16 %v1221
      %v1350 = vunpack.c.h.b16 %v1221
      %v1351 = vunpack.c.l.b16 %v1222
      %v1352 = vunpack.c.h.b16 %v1222
      %v1353 = vunpack.c.l.b16 %v1223
      %v1354 = vunpack.c.h.b16 %v1223
      %v1355 = vunpack.c.l.b16 %v1224
      %v1356 = vunpack.c.h.b16 %v1224
      %v1357 = vunpack.c.l.b16 %v1225
      %v1358 = vunpack.c.h.b16 %v1225
      %v1359 = vunpack.c.l.b16 %v1226
      %v1360 = vunpack.c.h.b16 %v1226
      %v1361 = vunpack.c.l.b16 %v1227
      %v1362 = vunpack.c.h.b16 %v1227
      %v1363 = vunpack.c.l.b16 %v1228
      %v1364 = vunpack.c.h.b16 %v1228
      %v1365 = vunpack.c.l.b16 %v1229
      %v1366 = vunpack.c.h.b16 %v1229
      %v1367 = vunpack.c.l.b16 %v1230
      %v1368 = vunpack.c.h.b16 %v1230
      %v1369 = vunpack.c.l.b16 %v1231
      %v1370 = vunpack.c.h.b16 %v1231
      %v1371 = vunpack.c.l.b16 %v1232
      %v1372 = vunpack.c.h.b16 %v1232
      %v1373 = vunpack.c.l.b16 %v1233
      %v1374 = vunpack.c.h.b16 %v1233
      %v1375 = vunpack.c.l.b16 %v1234
      %v1376 = vunpack.c.h.b16 %v1234
      %v1377 = vunpack.c.l.b16 %v1235
      %v1378 = vunpack.c.h.b16 %v1235
      %v1379 = vunpack.c.l.b16 %v1236
      %v1380 = vunpack.c.h.b16 %v1236
      %v1381 = vunpack.c.l.b16 %v1237
      %v1382 = vunpack.c.h.b16 %v1237
      %v1383 = vunpack.c.l.b16 %v1238
      %v1384 = vunpack.c.h.b16 %v1238
      %v1385 = vunpack.c.l.b16 %v1239
      %v1386 = vunpack.c.h.b16 %v1239
      %v1387 = vunpack.c.l.b16 %v1240
      %v1388 = vunpack.c.h.b16 %v1240
      %v1389 = vunpack.c.l.b16 %v1241
      %v1390 = vunpack.c.h.b16 %v1241
      %v1391 = vunpack.c.l.b16 %v1242
      %v1392 = vunpack.c.h.b16 %v1242
      %v1393 = vunpack.c.l.b16 %v1243
      %v1394 = vunpack.c.h.b16 %v1243
      %v1395 = vunpack.c.l.b16 %v1244
      %v1396 = vunpack.c.h.b16 %v1244
      %v1397 = vunpack.c.l.b16 %v1245
      %v1398 = vunpack.c.h.b16 %v1245
      %v1399 = vunpack.c.l.b16 %v1246
      %v1400 = vunpack.c.h.b16 %v1246
      %v1401 = vunpack.c.l.b16 %v1247
      %v1402 = vunpack.c.h.b16 %v1247
      %v1403 = vunpack.c.l.b16 %v1248
      %v1404 = vunpack.c.h.b16 %v1248
      %v1405 = vunpack.c.l.b16 %v1249
      %v1406 = vunpack.c.h.b16 %v1249
      %v1407 = vunpack.c.l.b16 %v1250
      %v1408 = vunpack.c.h.b16 %v1250
      %v1409 = vunpack.c.l.b16 %v1251
      %v1410 = vunpack.c.h.b16 %v1251
      %v1411 = vunpack.c.l.b16 %v1252
      %v1412 = vunpack.c.h.b16 %v1252
      %v1413 = vunpack.c.l.b16 %v1253
      %v1414 = vunpack.c.h.b16 %v1253
      %v1415 = vunpack.c.l.b16 %v1254
      %v1416 = vunpack.c.h.b16 %v1254
      %v1417 = vunpack.c.l.b16 %v1255
      %v1418 = vunpack.c.h.b16 %v1255
      %v1419 = vunpack.c.l.b16 %v1256
      %v1420 = vunpack.c.h.b16 %v1256
      %v1421 = vunpack.c.l.b16 %v1257
      %v1422 = vunpack.c.h.b16 %v1257
      %v1423 = vunpack.c.l.b16 %v1258
      %v1424 = vunpack.c.h.b16 %v1258
      %v1425 = vunpack.c.l.b16 %v1259
      %v1426 = vunpack.c.h.b16 %v1259
      %v1427 = vunpack.c.l.b16 %v1260
      %v1428 = vunpack.c.h.b16 %v1260
      %v1429 = vunpack.c.l.b16 %v1261
      %v1430 = vunpack.c.h.b16 %v1261
      %v1431 = vunpack.c.l.b16 %v1262
      %v1432 = vunpack.c.h.b16 %v1262
      %v1433 = vunpack.c.l.b16 %v1263
      %v1434 = vunpack.c.h.b16 %v1263
      %v1435 = vunpack.c.l.b16 %v1264
      %v1436 = vunpack.c.h.b16 %v1264
      %v1437 = vunpack.c.l.b16 %v1265
      %v1438 = vunpack.c.h.b16 %v1265
      %v1439 = vunpack.c.l.b16 %v1266
      %v1440 = vunpack.c.h.b16 %v1266
      %v1441 = vunpack.c.l.b16 %v1267
      %v1442 = vunpack.c.h.b16 %v1267
      %v1443 = vunpack.c.l.b16 %v1268
      %v1444 = vunpack.c.h.b16 %v1268
      %v1445 = vunpack.c.l.b16 %v1269
      %v1446 = vunpack.c.h.b16 %v1269
      %v1447 = vunpack.c.l.b16 %v1270
      %v1448 = vunpack.c.h.b16 %v1270
      %v1449 = vunpack.c.l.b16 %v1271
      %v1450 = vunpack.c.h.b16 %v1271
      %v1451 = vunpack.c.l.b16 %v1272
      %v1452 = vunpack.c.h.b16 %v1272
      %v1453 = vunpack.c.l.b16 %v1273
      %v1454 = vunpack.c.h.b16 %v1273
      %v1455 = vunpack.c.l.b16 %v1274
      %v1456 = vunpack.c.h.b16 %v1274
      %v1457 = vunpack.c.l.b16 %v1275
      %v1458 = vunpack.c.h.b16 %v1275
      %v1459 = vunpack.c.l.b16 %v1276
      %v1460 = vunpack.c.h.b16 %v1276
      %v1461 = vunpack.c.l.b16 %v1277
      %v1462 = vunpack.c.h.b16 %v1277
      %v1463 = vunpack.c.l.b16 %v1278
      %v1464 = vunpack.c.h.b16 %v1278
      %v1465 = vunpack.c.l.b16 %v1279
      %v1466 = vunpack.c.h.b16 %v1279
      %v1467 = vunpack.c.l.b16 %v1280
      %v1468 = vunpack.c.h.b16 %v1280
      %v1469 = vunpack.c.l.b16 %v1281
      %v1470 = vunpack.c.h.b16 %v1281
      %v1471 = vunpack.c.l.b16 %v1282
      %v1472 = vunpack.c.h.b16 %v1282
      %v1473 = vunpack.c.l.b16 %v1283
      %v1474 = vunpack.c.h.b16 %v1283
      %v1475 = vunpack.c.l.b16 %v1284
      %v1476 = vunpack.c.h.b16 %v1284
      %v1477 = vpack.c.b16 %v1351, %v1349
      %v1478 = vpack.c.b16 %v1352, %v1350
      %v1479 = vpack.c.b16 %v1355, %v1353
      %v1480 = vpack.c.b16 %v1356, %v1354
      %v1481 = vpack.c.b16 %v1359, %v1357
      %v1482 = vpack.c.b16 %v1360, %v1358
      %v1483 = vpack.c.b16 %v1363, %v1361
      %v1484 = vpack.c.b16 %v1364, %v1362
      %v1485 = vpack.c.b16 %v1367, %v1365
      %v1486 = vpack.c.b16 %v1368, %v1366
      %v1487 = vpack.c.b16 %v1371, %v1369
      %v1488 = vpack.c.b16 %v1372, %v1370
      %v1489 = vpack.c.b16 %v1375, %v1373
      %v1490 = vpack.c.b16 %v1376, %v1374
      %v1491 = vpack.c.b16 %v1379, %v1377
      %v1492 = vpack.c.b16 %v1380, %v1378
      %v1493 = vpack.c.b16 %v1383, %v1381
      %v1494 = vpack.c.b16 %v1384, %v1382
      %v1495 = vpack.c.b16 %v1387, %v1385
      %v1496 = vpack.c.b16 %v1388, %v1386
      %v1497 = vpack.c.b16 %v1391, %v1389
      %v1498 = vpack.c.b16 %v1392, %v1390
      %v1499 = vpack.c.b16 %v1395, %v1393
      %v1500 = vpack.c.b16 %v1396, %v1394
      %v1501 = vpack.c.b16 %v1399, %v1397
      %v1502 = vpack.c.b16 %v1400, %v1398
      %v1503 = vpack.c.b16 %v1403, %v1401
      %v1504 = vpack.c.b16 %v1404, %v1402
      %v1505 = vpack.c.b16 %v1407, %v1405
      %v1506 = vpack.c.b16 %v1408, %v1406
      %v1507 = vpack.c.b16 %v1411, %v1409
      %v1508 = vpack.c.b16 %v1412, %v1410
      %v1509 = vpack.c.b16 %v1415, %v1413
      %v1510 = vpack.c.b16 %v1416, %v1414
      %v1511 = vpack.c.b16 %v1419, %v1417
      %v1512 = vpack.c.b16 %v1420, %v1418
      %v1513 = vpack.c.b16 %v1423, %v1421
      %v1514 = vpack.c.b16 %v1424, %v1422
      %v1515 = vpack.c.b16 %v1427, %v1425
      %v1516 = vpack.c.b16 %v1428, %v1426
      %v1517 = vpack.c.b16 %v1431, %v1429
      %v1518 = vpack.c.b16 %v1432, %v1430
      %v1519 = vpack.c.b16 %v1435, %v1433
      %v1520 = vpack.c.b16 %v1436, %v1434
      %v1521 = vpack.c.b16 %v1439, %v1437
      %v1522 = vpack.c.b16 %v1440, %v1438
      %v1523 = vpack.c.b16 %v1443, %v1441
      %v1524 = vpack.c.b16 %v1444, %v1442
      %v1525 = vpack.c.b16 %v1447, %v1445
      %v1526 = vpack.c.b16 %v1448, %v1446
      %v1527 = vpack.c.b16 %v1451, %v1449
      %v1528 = vpack.c.b16 %v1452, %v1450
      %v1529 = vpack.c.b16 %v1455, %v1453
      %v1530 = vpack.c.b16 %v1456, %v1454
      %v1531 = vpack.c.b16 %v1459, %v1457
      %v1532 = vpack.c.b16 %v1460, %v1458
      %v1533 = vpack.c.b16 %v1463, %v1461
      %v1534 = vpack.c.b16 %v1464, %v1462
      %v1535 = vpack.c.b16 %v1467, %v1465
      %v1536 = vpack.c.b16 %v1468, %v1466
      %v1537 = vpack.c.b16 %v1471, %v1469
      %v1538 = vpack.c.b16 %v1472, %v1470
      %v1539 = vpack.c.b16 %v1475, %v1473
      %v1540 = vpack.c.b16 %v1476, %v1474
      %1605 = vmatpush.bf16.msra.mxu0 %v1491
      %1606 = vmatpush.bf16.msra.mxu0 %v1489
      %1607 = vmatpush.bf16.msra.mxu0 %v1487
      %1608 = vmatpush.bf16.msra.mxu0 %v1485
      %1609 = vmatpush.bf16.msra.mxu0 %v1483
      %1610 = vmatpush.bf16.msra.mxu0 %v1481
      %1611 = vmatpush.bf16.msra.mxu0 %v1479
      %1612 = vmatpush.bf16.msra.mxu0 %v1477
      %1613 = vmatmul.bf16.gmra.mxu0 %v333
      %v1614 = vpop.f32.mrf.mxu0
      %v1615 = vadd.f32 0.0, %v1614
      %v1616 = vpop.f32.mrf.mxu0
      %v1617 = vadd.f32 0.0, %v1616
      %1618 = vmatmul.bf16.gmra.mxu0 %v337
      %v1619 = vpop.f32.mrf.mxu0
      %v1620 = vadd.f32 0.0, %v1619
      %v1621 = vpop.f32.mrf.mxu0
      %v1622 = vadd.f32 0.0, %v1621
      %1623 = vmatmul.bf16.gmra.mxu0 %v341
      %v1624 = vpop.f32.mrf.mxu0
      %v1625 = vadd.f32 0.0, %v1624
      %v1626 = vpop.f32.mrf.mxu0
      %v1627 = vadd.f32 0.0, %v1626
      %1628 = vmatmul.bf16.gmra.mxu0 %v345
      %v1629 = vpop.f32.mrf.mxu0
      %v1630 = vadd.f32 0.0, %v1629
      %v1631 = vpop.f32.mrf.mxu0
      %v1632 = vadd.f32 0.0, %v1631
      %1633 = vmatmul.bf16.gmra.mxu0 %v413
      %v1634 = vpop.f32.mrf.mxu0
      %v1635 = vadd.f32 0.0, %v1634
      %v1636 = vpop.f32.mrf.mxu0
      %v1637 = vadd.f32 0.0, %v1636
      %1638 = vmatmul.bf16.gmra.mxu0 %v417
      %v1639 = vpop.f32.mrf.mxu0
      %v1640 = vadd.f32 0.0, %v1639
      %v1641 = vpop.f32.mrf.mxu0
      %v1642 = vadd.f32 0.0, %v1641
      %1643 = vmatmul.bf16.gmra.mxu0 %v421
      %v1644 = vpop.f32.mrf.mxu0
      %v1645 = vadd.f32 0.0, %v1644
      %v1646 = vpop.f32.mrf.mxu0
      %v1647 = vadd.f32 0.0, %v1646
      %1648 = vmatmul.bf16.gmra.mxu0 %v425
      %v1649 = vpop.f32.mrf.mxu0
      %v1650 = vadd.f32 0.0, %v1649
      %v1651 = vpop.f32.mrf.mxu0
      %v1652 = vadd.f32 0.0, %v1651
      %1653 = vdwg.mxu0
      %1654 = vmatpush.bf16.msra.mxu0 %v1507
      %1655 = vmatpush.bf16.msra.mxu0 %v1505
      %1656 = vmatpush.bf16.msra.mxu0 %v1503
      %1657 = vmatpush.bf16.msra.mxu0 %v1501
      %1658 = vmatpush.bf16.msra.mxu0 %v1499
      %1659 = vmatpush.bf16.msra.mxu0 %v1497
      %1660 = vmatpush.bf16.msra.mxu0 %v1495
      %1661 = vmatpush.bf16.msra.mxu0 %v1493
      %1662 = vmatmul.bf16.gmra.mxu0 %v334
      %v1663 = vpop.f32.mrf.mxu0
      %v1664 = vadd.f32 %v1615, %v1663
      %v1665 = vpop.f32.mrf.mxu0
      %v1666 = vadd.f32 %v1617, %v1665
      %1667 = vmatmul.bf16.gmra.mxu0 %v338
      %v1668 = vpop.f32.mrf.mxu0
      %v1669 = vadd.f32 %v1620, %v1668
      %v1670 = vpop.f32.mrf.mxu0
      %v1671 = vadd.f32 %v1622, %v1670
      %1672 = vmatmul.bf16.gmra.mxu0 %v342
      %v1673 = vpop.f32.mrf.mxu0
      %v1674 = vadd.f32 %v1625, %v1673
      %v1675 = vpop.f32.mrf.mxu0
      %v1676 = vadd.f32 %v1627, %v1675
      %1677 = vmatmul.bf16.gmra.mxu0 %v346
      %v1678 = vpop.f32.mrf.mxu0
      %v1679 = vadd.f32 %v1630, %v1678
      %v1680 = vpop.f32.mrf.mxu0
      %v1681 = vadd.f32 %v1632, %v1680
      %1682 = vmatmul.bf16.gmra.mxu0 %v414
      %v1683 = vpop.f32.mrf.mxu0
      %v1684 = vadd.f32 %v1635, %v1683
      %v1685 = vpop.f32.mrf.mxu0
      %v1686 = vadd.f32 %v1637, %v1685
      %1687 = vmatmul.bf16.gmra.mxu0 %v418
      %v1688 = vpop.f32.mrf.mxu0
      %v1689 = vadd.f32 %v1640, %v1688
      %v1690 = vpop.f32.mrf.mxu0
      %v1691 = vadd.f32 %v1642, %v1690
      %1692 = vmatmul.bf16.gmra.mxu0 %v422
      %v1693 = vpop.f32.mrf.mxu0
      %v1694 = vadd.f32 %v1645, %v1693
      %v1695 = vpop.f32.mrf.mxu0
      %v1696 = vadd.f32 %v1647, %v1695
      %1697 = vmatmul.bf16.gmra.mxu0 %v426
      %v1698 = vpop.f32.mrf.mxu0
      %v1699 = vadd.f32 %v1650, %v1698
      %v1700 = vpop.f32.mrf.mxu0
      %v1701 = vadd.f32 %v1652, %v1700
      %1702 = vdwg.mxu0
      %1703 = vmatpush.bf16.msra.mxu0 %v1523
      %1704 = vmatpush.bf16.msra.mxu0 %v1521
      %1705 = vmatpush.bf16.msra.mxu0 %v1519
      %1706 = vmatpush.bf16.msra.mxu0 %v1517
      %1707 = vmatpush.bf16.msra.mxu0 %v1515
      %1708 = vmatpush.bf16.msra.mxu0 %v1513
      %1709 = vmatpush.bf16.msra.mxu0 %v1511
      %1710 = vmatpush.bf16.msra.mxu0 %v1509
      %1711 = vmatmul.bf16.gmra.mxu0 %v335
      %v1712 = vpop.f32.mrf.mxu0
      %v1713 = vadd.f32 %v1664, %v1712
      %v1714 = vpop.f32.mrf.mxu0
      %v1715 = vadd.f32 %v1666, %v1714
      %1716 = vmatmul.bf16.gmra.mxu0 %v339
      %v1717 = vpop.f32.mrf.mxu0
      %v1718 = vadd.f32 %v1669, %v1717
      %v1719 = vpop.f32.mrf.mxu0
      %v1720 = vadd.f32 %v1671, %v1719
      %1721 = vmatmul.bf16.gmra.mxu0 %v343
      %v1722 = vpop.f32.mrf.mxu0
      %v1723 = vadd.f32 %v1674, %v1722
      %v1724 = vpop.f32.mrf.mxu0
      %v1725 = vadd.f32 %v1676, %v1724
      %1726 = vmatmul.bf16.gmra.mxu0 %v347
      %v1727 = vpop.f32.mrf.mxu0
      %v1728 = vadd.f32 %v1679, %v1727
      %v1729 = vpop.f32.mrf.mxu0
      %v1730 = vadd.f32 %v1681, %v1729
      %1731 = vmatmul.bf16.gmra.mxu0 %v415
      %v1732 = vpop.f32.mrf.mxu0
      %v1733 = vadd.f32 %v1684, %v1732
      %v1734 = vpop.f32.mrf.mxu0
      %v1735 = vadd.f32 %v1686, %v1734
      %1736 = vmatmul.bf16.gmra.mxu0 %v419
      %v1737 = vpop.f32.mrf.mxu0
      %v1738 = vadd.f32 %v1689, %v1737
      %v1739 = vpop.f32.mrf.mxu0
      %v1740 = vadd.f32 %v1691, %v1739
      %1741 = vmatmul.bf16.gmra.mxu0 %v423
      %v1742 = vpop.f32.mrf.mxu0
      %v1743 = vadd.f32 %v1694, %v1742
      %v1744 = vpop.f32.mrf.mxu0
      %v1745 = vadd.f32 %v1696, %v1744
      %1746 = vmatmul.bf16.gmra.mxu0 %v427
      %v1747 = vpop.f32.mrf.mxu0
      %v1748 = vadd.f32 %v1699, %v1747
      %v1749 = vpop.f32.mrf.mxu0
      %v1750 = vadd.f32 %v1701, %v1749
      %1751 = vdwg.mxu0
      %1752 = vmatpush.bf16.msra.mxu0 %v1539
      %1753 = vmatpush.bf16.msra.mxu0 %v1537
      %1754 = vmatpush.bf16.msra.mxu0 %v1535
      %1755 = vmatpush.bf16.msra.mxu0 %v1533
      %1756 = vmatpush.bf16.msra.mxu0 %v1531
      %1757 = vmatpush.bf16.msra.mxu0 %v1529
      %1758 = vmatpush.bf16.msra.mxu0 %v1527
      %1759 = vmatpush.bf16.msra.mxu0 %v1525
      %1760 = vmatmul.bf16.gmra.mxu0 %v336
      %v1761 = vpop.f32.mrf.mxu0
      %v1762 = vadd.f32 %v1713, %v1761
      %v1763 = vpop.f32.mrf.mxu0
      %v1764 = vadd.f32 %v1715, %v1763
      %1765 = vmatmul.bf16.gmra.mxu0 %v340
      %v1766 = vpop.f32.mrf.mxu0
      %v1767 = vadd.f32 %v1718, %v1766
      %v1768 = vpop.f32.mrf.mxu0
      %v1769 = vadd.f32 %v1720, %v1768
      %1770 = vmatmul.bf16.gmra.mxu0 %v344
      %v1771 = vpop.f32.mrf.mxu0
      %v1772 = vadd.f32 %v1723, %v1771
      %v1773 = vpop.f32.mrf.mxu0
      %v1774 = vadd.f32 %v1725, %v1773
      %1775 = vmatmul.bf16.gmra.mxu0 %v348
      %v1776 = vpop.f32.mrf.mxu0
      %v1777 = vadd.f32 %v1728, %v1776
      %v1778 = vpop.f32.mrf.mxu0
      %v1779 = vadd.f32 %v1730, %v1778
      %1780 = vmatmul.bf16.gmra.mxu0 %v416
      %v1781 = vpop.f32.mrf.mxu0
      %v1782 = vadd.f32 %v1733, %v1781
      %v1783 = vpop.f32.mrf.mxu0
      %v1784 = vadd.f32 %v1735, %v1783
      %1785 = vmatmul.bf16.gmra.mxu0 %v420
      %v1786 = vpop.f32.mrf.mxu0
      %v1787 = vadd.f32 %v1738, %v1786
      %v1788 = vpop.f32.mrf.mxu0
      %v1789 = vadd.f32 %v1740, %v1788
      %1790 = vmatmul.bf16.gmra.mxu0 %v424
      %v1791 = vpop.f32.mrf.mxu0
      %v1792 = vadd.f32 %v1743, %v1791
      %v1793 = vpop.f32.mrf.mxu0
      %v1794 = vadd.f32 %v1745, %v1793
      %1795 = vmatmul.bf16.gmra.mxu0 %v428
      %v1796 = vpop.f32.mrf.mxu0
      %v1797 = vadd.f32 %v1748, %v1796
      %v1798 = vpop.f32.mrf.mxu0
      %v1799 = vadd.f32 %v1750, %v1798
      %1800 = vdwg.mxu0
      %1801 = vmatpush.bf16.msra.mxu0 %v1492
      %1802 = vmatpush.bf16.msra.mxu0 %v1490
      %1803 = vmatpush.bf16.msra.mxu0 %v1488
      %1804 = vmatpush.bf16.msra.mxu0 %v1486
      %1805 = vmatpush.bf16.msra.mxu0 %v1484
      %1806 = vmatpush.bf16.msra.mxu0 %v1482
      %1807 = vmatpush.bf16.msra.mxu0 %v1480
      %1808 = vmatpush.bf16.msra.mxu0 %v1478
      %1809 = vmatmul.bf16.gmra.mxu0 %v333
      %v1810 = vpop.f32.mrf.mxu0
      %v1811 = vadd.f32 0.0, %v1810
      %v1812 = vpop.f32.mrf.mxu0
      %v1813 = vadd.f32 0.0, %v1812
      %1814 = vmatmul.bf16.gmra.mxu0 %v337
      %v1815 = vpop.f32.mrf.mxu0
      %v1816 = vadd.f32 0.0, %v1815
      %v1817 = vpop.f32.mrf.mxu0
      %v1818 = vadd.f32 0.0, %v1817
      %1819 = vmatmul.bf16.gmra.mxu0 %v341
      %v1820 = vpop.f32.mrf.mxu0
      %v1821 = vadd.f32 0.0, %v1820
      %v1822 = vpop.f32.mrf.mxu0
      %v1823 = vadd.f32 0.0, %v1822
      %1824 = vmatmul.bf16.gmra.mxu0 %v345
      %v1825 = vpop.f32.mrf.mxu0
      %v1826 = vadd.f32 0.0, %v1825
      %v1827 = vpop.f32.mrf.mxu0
      %v1828 = vadd.f32 0.0, %v1827
      %1829 = vmatmul.bf16.gmra.mxu0 %v413
      %v1830 = vpop.f32.mrf.mxu0
      %v1831 = vadd.f32 0.0, %v1830
      %v1832 = vpop.f32.mrf.mxu0
      %v1833 = vadd.f32 0.0, %v1832
      %1834 = vmatmul.bf16.gmra.mxu0 %v417
      %v1835 = vpop.f32.mrf.mxu0
      %v1836 = vadd.f32 0.0, %v1835
      %v1837 = vpop.f32.mrf.mxu0
      %v1838 = vadd.f32 0.0, %v1837
      %1839 = vmatmul.bf16.gmra.mxu0 %v421
      %v1840 = vpop.f32.mrf.mxu0
      %v1841 = vadd.f32 0.0, %v1840
      %v1842 = vpop.f32.mrf.mxu0
      %v1843 = vadd.f32 0.0, %v1842
      %1844 = vmatmul.bf16.gmra.mxu0 %v425
      %v1845 = vpop.f32.mrf.mxu0
      %v1846 = vadd.f32 0.0, %v1845
      %v1847 = vpop.f32.mrf.mxu0
      %v1848 = vadd.f32 0.0, %v1847
      %1849 = vdwg.mxu0
      %1850 = vmatpush.bf16.msra.mxu0 %v1508
      %1851 = vmatpush.bf16.msra.mxu0 %v1506
      %1852 = vmatpush.bf16.msra.mxu0 %v1504
      %1853 = vmatpush.bf16.msra.mxu0 %v1502
      %1854 = vmatpush.bf16.msra.mxu0 %v1500
      %1855 = vmatpush.bf16.msra.mxu0 %v1498
      %1856 = vmatpush.bf16.msra.mxu0 %v1496
      %1857 = vmatpush.bf16.msra.mxu0 %v1494
      %1858 = vmatmul.bf16.gmra.mxu0 %v334
      %v1859 = vpop.f32.mrf.mxu0
      %v1860 = vadd.f32 %v1811, %v1859
      %v1861 = vpop.f32.mrf.mxu0
      %v1862 = vadd.f32 %v1813, %v1861
      %1863 = vmatmul.bf16.gmra.mxu0 %v338
      %v1864 = vpop.f32.mrf.mxu0
      %v1865 = vadd.f32 %v1816, %v1864
      %v1866 = vpop.f32.mrf.mxu0
      %v1867 = vadd.f32 %v1818, %v1866
      %1868 = vmatmul.bf16.gmra.mxu0 %v342
      %v1869 = vpop.f32.mrf.mxu0
      %v1870 = vadd.f32 %v1821, %v1869
      %v1871 = vpop.f32.mrf.mxu0
      %v1872 = vadd.f32 %v1823, %v1871
      %1873 = vmatmul.bf16.gmra.mxu0 %v346
      %v1874 = vpop.f32.mrf.mxu0
      %v1875 = vadd.f32 %v1826, %v1874
      %v1876 = vpop.f32.mrf.mxu0
      %v1877 = vadd.f32 %v1828, %v1876
      %1878 = vmatmul.bf16.gmra.mxu0 %v414
      %v1879 = vpop.f32.mrf.mxu0
      %v1880 = vadd.f32 %v1831, %v1879
      %v1881 = vpop.f32.mrf.mxu0
      %v1882 = vadd.f32 %v1833, %v1881
      %1883 = vmatmul.bf16.gmra.mxu0 %v418
      %v1884 = vpop.f32.mrf.mxu0
      %v1885 = vadd.f32 %v1836, %v1884
      %v1886 = vpop.f32.mrf.mxu0
      %v1887 = vadd.f32 %v1838, %v1886
      %1888 = vmatmul.bf16.gmra.mxu0 %v422
      %v1889 = vpop.f32.mrf.mxu0
      %v1890 = vadd.f32 %v1841, %v1889
      %v1891 = vpop.f32.mrf.mxu0
      %v1892 = vadd.f32 %v1843, %v1891
      %1893 = vmatmul.bf16.gmra.mxu0 %v426
      %v1894 = vpop.f32.mrf.mxu0
      %v1895 = vadd.f32 %v1846, %v1894
      %v1896 = vpop.f32.mrf.mxu0
      %v1897 = vadd.f32 %v1848, %v1896
      %1898 = vdwg.mxu0
      %1899 = vmatpush.bf16.msra.mxu0 %v1524
      %1900 = vmatpush.bf16.msra.mxu0 %v1522
      %1901 = vmatpush.bf16.msra.mxu0 %v1520
      %1902 = vmatpush.bf16.msra.mxu0 %v1518
      %1903 = vmatpush.bf16.msra.mxu0 %v1516
      %1904 = vmatpush.bf16.msra.mxu0 %v1514
      %1905 = vmatpush.bf16.msra.mxu0 %v1512
      %1906 = vmatpush.bf16.msra.mxu0 %v1510
      %1907 = vmatmul.bf16.gmra.mxu0 %v335
      %v1908 = vpop.f32.mrf.mxu0
      %v1909 = vadd.f32 %v1860, %v1908
      %v1910 = vpop.f32.mrf.mxu0
      %v1911 = vadd.f32 %v1862, %v1910
      %1912 = vmatmul.bf16.gmra.mxu0 %v339
      %v1913 = vpop.f32.mrf.mxu0
      %v1914 = vadd.f32 %v1865, %v1913
      %v1915 = vpop.f32.mrf.mxu0
      %v1916 = vadd.f32 %v1867, %v1915
      %1917 = vmatmul.bf16.gmra.mxu0 %v343
      %v1918 = vpop.f32.mrf.mxu0
      %v1919 = vadd.f32 %v1870, %v1918
      %v1920 = vpop.f32.mrf.mxu0
      %v1921 = vadd.f32 %v1872, %v1920
      %1922 = vmatmul.bf16.gmra.mxu0 %v347
      %v1923 = vpop.f32.mrf.mxu0
      %v1924 = vadd.f32 %v1875, %v1923
      %v1925 = vpop.f32.mrf.mxu0
      %v1926 = vadd.f32 %v1877, %v1925
      %1927 = vmatmul.bf16.gmra.mxu0 %v415
      %v1928 = vpop.f32.mrf.mxu0
      %v1929 = vadd.f32 %v1880, %v1928
      %v1930 = vpop.f32.mrf.mxu0
      %v1931 = vadd.f32 %v1882, %v1930
      %1932 = vmatmul.bf16.gmra.mxu0 %v419
      %v1933 = vpop.f32.mrf.mxu0
      %v1934 = vadd.f32 %v1885, %v1933
      %v1935 = vpop.f32.mrf.mxu0
      %v1936 = vadd.f32 %v1887, %v1935
      %1937 = vmatmul.bf16.gmra.mxu0 %v423
      %v1938 = vpop.f32.mrf.mxu0
      %v1939 = vadd.f32 %v1890, %v1938
      %v1940 = vpop.f32.mrf.mxu0
      %v1941 = vadd.f32 %v1892, %v1940
      %1942 = vmatmul.bf16.gmra.mxu0 %v427
      %v1943 = vpop.f32.mrf.mxu0
      %v1944 = vadd.f32 %v1895, %v1943
      %v1945 = vpop.f32.mrf.mxu0
      %v1946 = vadd.f32 %v1897, %v1945
      %1947 = vdwg.mxu0
      %1948 = vmatpush.bf16.msra.mxu0 %v1540
      %1949 = vmatpush.bf16.msra.mxu0 %v1538
      %1950 = vmatpush.bf16.msra.mxu0 %v1536
      %1951 = vmatpush.bf16.msra.mxu0 %v1534
      %1952 = vmatpush.bf16.msra.mxu0 %v1532
      %1953 = vmatpush.bf16.msra.mxu0 %v1530
      %1954 = vmatpush.bf16.msra.mxu0 %v1528
      %1955 = vmatpush.bf16.msra.mxu0 %v1526
      %1956 = vmatmul.bf16.gmra.mxu0 %v336
      %v1957 = vpop.f32.mrf.mxu0
      %v1958 = vadd.f32 %v1909, %v1957
      %v1959 = vpop.f32.mrf.mxu0
      %v1960 = vadd.f32 %v1911, %v1959
      %1961 = vmatmul.bf16.gmra.mxu0 %v340
      %v1962 = vpop.f32.mrf.mxu0
      %v1963 = vadd.f32 %v1914, %v1962
      %v1964 = vpop.f32.mrf.mxu0
      %v1965 = vadd.f32 %v1916, %v1964
      %1966 = vmatmul.bf16.gmra.mxu0 %v344
      %v1967 = vpop.f32.mrf.mxu0
      %v1968 = vadd.f32 %v1919, %v1967
      %v1969 = vpop.f32.mrf.mxu0
      %v1970 = vadd.f32 %v1921, %v1969
      %1971 = vmatmul.bf16.gmra.mxu0 %v348
      %v1972 = vpop.f32.mrf.mxu0
      %v1973 = vadd.f32 %v1924, %v1972
      %v1974 = vpop.f32.mrf.mxu0
      %v1975 = vadd.f32 %v1926, %v1974
      %1976 = vmatmul.bf16.gmra.mxu0 %v416
      %v1977 = vpop.f32.mrf.mxu0
      %v1978 = vadd.f32 %v1929, %v1977
      %v1979 = vpop.f32.mrf.mxu0
      %v1980 = vadd.f32 %v1931, %v1979
      %1981 = vmatmul.bf16.gmra.mxu0 %v420
      %v1982 = vpop.f32.mrf.mxu0
      %v1983 = vadd.f32 %v1934, %v1982
      %v1984 = vpop.f32.mrf.mxu0
      %v1985 = vadd.f32 %v1936, %v1984
      %1986 = vmatmul.bf16.gmra.mxu0 %v424
      %v1987 = vpop.f32.mrf.mxu0
      %v1988 = vadd.f32 %v1939, %v1987
      %v1989 = vpop.f32.mrf.mxu0
      %v1990 = vadd.f32 %v1941, %v1989
      %1991 = vmatmul.bf16.gmra.mxu0 %v428
      %v1992 = vpop.f32.mrf.mxu0
      %v1993 = vadd.f32 %v1944, %v1992
      %v1994 = vpop.f32.mrf.mxu0
      %v1995 = vadd.f32 %v1946, %v1994
      %1996 = vdwg.mxu0
      %v1997 = vmul.f32 %v986, %v986
      %v1998 = vmul.f32 %v1182, %v1182
      %v1999 = vmul.f32 %v988, %v988
      %v2000 = vmul.f32 %v1184, %v1184
      %v2001 = vmul.f32 %v991, %v991
      %v2002 = vmul.f32 %v1187, %v1187
      %v2003 = vmul.f32 %v993, %v993
      %v2004 = vmul.f32 %v1189, %v1189
      %v2005 = vmul.f32 %v996, %v996
      %v2006 = vmul.f32 %v1192, %v1192
      %v2007 = vmul.f32 %v998, %v998
      %v2008 = vmul.f32 %v1194, %v1194
      %v2009 = vmul.f32 %v1001, %v1001
      %v2010 = vmul.f32 %v1197, %v1197
      %v2011 = vmul.f32 %v1003, %v1003
      %v2012 = vmul.f32 %v1199, %v1199
      %v2013 = vmul.f32 %v1006, %v1006
      %v2014 = vmul.f32 %v1202, %v1202
      %v2015 = vmul.f32 %v1008, %v1008
      %v2016 = vmul.f32 %v1204, %v1204
      %v2017 = vmul.f32 %v1011, %v1011
      %v2018 = vmul.f32 %v1207, %v1207
      %v2019 = vmul.f32 %v1013, %v1013
      %v2020 = vmul.f32 %v1209, %v1209
      %v2021 = vmul.f32 %v1016, %v1016
      %v2022 = vmul.f32 %v1212, %v1212
      %v2023 = vmul.f32 %v1018, %v1018
      %v2024 = vmul.f32 %v1214, %v1214
      %v2025 = vmul.f32 %v1021, %v1021
      %v2026 = vmul.f32 %v1217, %v1217
      %v2027 = vmul.f32 %v1023, %v1023
      %v2028 = vmul.f32 %v1219, %v1219
      %v2029 = vmul.f32 %v1762, %v1762
      %v2030 = vmul.f32 %v1958, %v1958
      %v2031 = vmul.f32 %v1764, %v1764
      %v2032 = vmul.f32 %v1960, %v1960
      %v2033 = vmul.f32 %v1767, %v1767
      %v2034 = vmul.f32 %v1963, %v1963
      %v2035 = vmul.f32 %v1769, %v1769
      %v2036 = vmul.f32 %v1965, %v1965
      %v2037 = vmul.f32 %v1772, %v1772
      %v2038 = vmul.f32 %v1968, %v1968
      %v2039 = vmul.f32 %v1774, %v1774
      %v2040 = vmul.f32 %v1970, %v1970
      %v2041 = vmul.f32 %v1777, %v1777
      %v2042 = vmul.f32 %v1973, %v1973
      %v2043 = vmul.f32 %v1779, %v1779
      %v2044 = vmul.f32 %v1975, %v1975
      %v2045 = vmul.f32 %v1782, %v1782
      %v2046 = vmul.f32 %v1978, %v1978
      %v2047 = vmul.f32 %v1784, %v1784
      %v2048 = vmul.f32 %v1980, %v1980
      %v2049 = vmul.f32 %v1787, %v1787
      %v2050 = vmul.f32 %v1983, %v1983
      %v2051 = vmul.f32 %v1789, %v1789
      %v2052 = vmul.f32 %v1985, %v1985
      %v2053 = vmul.f32 %v1792, %v1792
      %v2054 = vmul.f32 %v1988, %v1988
      %v2055 = vmul.f32 %v1794, %v1794
      %v2056 = vmul.f32 %v1990, %v1990
      %v2057 = vmul.f32 %v1797, %v1797
      %v2058 = vmul.f32 %v1993, %v1993
      %v2059 = vmul.f32 %v1799, %v1799
      %v2060 = vmul.f32 %v1995, %v1995
      %v2061 = vadd.f32 %v1997, %v2029
      %v2062 = vadd.f32 %v1998, %v2030
      %v2063 = vadd.f32 %v1999, %v2031
      %v2064 = vadd.f32 %v2000, %v2032
      %v2065 = vadd.f32 %v2001, %v2033
      %v2066 = vadd.f32 %v2002, %v2034
      %v2067 = vadd.f32 %v2003, %v2035
      %v2068 = vadd.f32 %v2004, %v2036
      %v2069 = vadd.f32 %v2005, %v2037
      %v2070 = vadd.f32 %v2006, %v2038
      %v2071 = vadd.f32 %v2007, %v2039
      %v2072 = vadd.f32 %v2008, %v2040
      %v2073 = vadd.f32 %v2009, %v2041
      %v2074 = vadd.f32 %v2010, %v2042
      %v2075 = vadd.f32 %v2011, %v2043
      %v2076 = vadd.f32 %v2012, %v2044
      %v2077 = vadd.f32 %v2013, %v2045
      %v2078 = vadd.f32 %v2014, %v2046
      %v2079 = vadd.f32 %v2015, %v2047
      %v2080 = vadd.f32 %v2016, %v2048
      %v2081 = vadd.f32 %v2017, %v2049
      %v2082 = vadd.f32 %v2018, %v2050
      %v2083 = vadd.f32 %v2019, %v2051
      %v2084 = vadd.f32 %v2020, %v2052
      %v2085 = vadd.f32 %v2021, %v2053
      %v2086 = vadd.f32 %v2022, %v2054
      %v2087 = vadd.f32 %v2023, %v2055
      %v2088 = vadd.f32 %v2024, %v2056
      %v2089 = vadd.f32 %v2025, %v2057
      %v2090 = vadd.f32 %v2026, %v2058
      %v2091 = vadd.f32 %v2027, %v2059
      %v2092 = vadd.f32 %v2028, %v2060
      %v2093 = vrsqrt.pop %v2061
      %v2094 = vmul.f32 %v2093, %v2061
      %v2095 = vmul.f32 %v2094, %v2093
      %v2096 = vmul.f32 0.5, %v2095
      %v2097 = vsub.f32 1.5, %v2096
      %v2098 = vmul.f32 %v2093, %v2097
      %v2099 = vmul.f32 %v2061, %v2098
      %vm2100 = vcmp.eq.f32.partialorder %v2061, inf
      %v2101 = vsel %vm2100, %v2061, %v2099
      %vm2102 = vcmp.eq.f32.partialorder %v2061, 0.0
      %v2103 = vand.u32 %v2061, 2147483648
      %v2104 = vsel %vm2102, %v2103, %v2101
      %v2105 = vrsqrt.pop %v2062
      %v2106 = vmul.f32 %v2105, %v2062
      %v2107 = vmul.f32 %v2106, %v2105
      %v2108 = vmul.f32 0.5, %v2107
      %v2109 = vsub.f32 1.5, %v2108
      %v2110 = vmul.f32 %v2105, %v2109
      %v2111 = vmul.f32 %v2062, %v2110
      %vm2112 = vcmp.eq.f32.partialorder %v2062, inf
      %v2113 = vsel %vm2112, %v2062, %v2111
      %vm2114 = vcmp.eq.f32.partialorder %v2062, 0.0
      %v2115 = vand.u32 %v2062, 2147483648
      %v2116 = vsel %vm2114, %v2115, %v2113
      %v2117 = vrsqrt.pop %v2063
      %v2118 = vmul.f32 %v2117, %v2063
      %v2119 = vmul.f32 %v2118, %v2117
      %v2120 = vmul.f32 0.5, %v2119
      %v2121 = vsub.f32 1.5, %v2120
      %v2122 = vmul.f32 %v2117, %v2121
      %v2123 = vmul.f32 %v2063, %v2122
      %vm2124 = vcmp.eq.f32.partialorder %v2063, inf
      %v2125 = vsel %vm2124, %v2063, %v2123
      %vm2126 = vcmp.eq.f32.partialorder %v2063, 0.0
      %v2127 = vand.u32 %v2063, 2147483648
      %v2128 = vsel %vm2126, %v2127, %v2125
      %v2129 = vrsqrt.pop %v2064
      %v2130 = vmul.f32 %v2129, %v2064
      %v2131 = vmul.f32 %v2130, %v2129
      %v2132 = vmul.f32 0.5, %v2131
      %v2133 = vsub.f32 1.5, %v2132
      %v2134 = vmul.f32 %v2129, %v2133
      %v2135 = vmul.f32 %v2064, %v2134
      %vm2136 = vcmp.eq.f32.partialorder %v2064, inf
      %v2137 = vsel %vm2136, %v2064, %v2135
      %vm2138 = vcmp.eq.f32.partialorder %v2064, 0.0
      %v2139 = vand.u32 %v2064, 2147483648
      %v2140 = vsel %vm2138, %v2139, %v2137
      %v2141 = vrsqrt.pop %v2065
      %v2142 = vmul.f32 %v2141, %v2065
      %v2143 = vmul.f32 %v2142, %v2141
      %v2144 = vmul.f32 0.5, %v2143
      %v2145 = vsub.f32 1.5, %v2144
      %v2146 = vmul.f32 %v2141, %v2145
      %v2147 = vmul.f32 %v2065, %v2146
      %vm2148 = vcmp.eq.f32.partialorder %v2065, inf
      %v2149 = vsel %vm2148, %v2065, %v2147
      %vm2150 = vcmp.eq.f32.partialorder %v2065, 0.0
      %v2151 = vand.u32 %v2065, 2147483648
      %v2152 = vsel %vm2150, %v2151, %v2149
      %v2153 = vrsqrt.pop %v2066
      %v2154 = vmul.f32 %v2153, %v2066
      %v2155 = vmul.f32 %v2154, %v2153
      %v2156 = vmul.f32 0.5, %v2155
      %v2157 = vsub.f32 1.5, %v2156
      %v2158 = vmul.f32 %v2153, %v2157
      %v2159 = vmul.f32 %v2066, %v2158
      %vm2160 = vcmp.eq.f32.partialorder %v2066, inf
      %v2161 = vsel %vm2160, %v2066, %v2159
      %vm2162 = vcmp.eq.f32.partialorder %v2066, 0.0
      %v2163 = vand.u32 %v2066, 2147483648
      %v2164 = vsel %vm2162, %v2163, %v2161
      %v2165 = vrsqrt.pop %v2067
      %v2166 = vmul.f32 %v2165, %v2067
      %v2167 = vmul.f32 %v2166, %v2165
      %v2168 = vmul.f32 0.5, %v2167
      %v2169 = vsub.f32 1.5, %v2168
      %v2170 = vmul.f32 %v2165, %v2169
      %v2171 = vmul.f32 %v2067, %v2170
      %vm2172 = vcmp.eq.f32.partialorder %v2067, inf
      %v2173 = vsel %vm2172, %v2067, %v2171
      %vm2174 = vcmp.eq.f32.partialorder %v2067, 0.0
      %v2175 = vand.u32 %v2067, 2147483648
      %v2176 = vsel %vm2174, %v2175, %v2173
      %v2177 = vrsqrt.pop %v2068
      %v2178 = vmul.f32 %v2177, %v2068
      %v2179 = vmul.f32 %v2178, %v2177
      %v2180 = vmul.f32 0.5, %v2179
      %v2181 = vsub.f32 1.5, %v2180
      %v2182 = vmul.f32 %v2177, %v2181
      %v2183 = vmul.f32 %v2068, %v2182
      %vm2184 = vcmp.eq.f32.partialorder %v2068, inf
      %v2185 = vsel %vm2184, %v2068, %v2183
      %vm2186 = vcmp.eq.f32.partialorder %v2068, 0.0
      %v2187 = vand.u32 %v2068, 2147483648
      %v2188 = vsel %vm2186, %v2187, %v2185
      %v2189 = vrsqrt.pop %v2069
      %v2190 = vmul.f32 %v2189, %v2069
      %v2191 = vmul.f32 %v2190, %v2189
      %v2192 = vmul.f32 0.5, %v2191
      %v2193 = vsub.f32 1.5, %v2192
      %v2194 = vmul.f32 %v2189, %v2193
      %v2195 = vmul.f32 %v2069, %v2194
      %vm2196 = vcmp.eq.f32.partialorder %v2069, inf
      %v2197 = vsel %vm2196, %v2069, %v2195
      %vm2198 = vcmp.eq.f32.partialorder %v2069, 0.0
      %v2199 = vand.u32 %v2069, 2147483648
      %v2200 = vsel %vm2198, %v2199, %v2197
      %v2201 = vrsqrt.pop %v2070
      %v2202 = vmul.f32 %v2201, %v2070
      %v2203 = vmul.f32 %v2202, %v2201
      %v2204 = vmul.f32 0.5, %v2203
      %v2205 = vsub.f32 1.5, %v2204
      %v2206 = vmul.f32 %v2201, %v2205
      %v2207 = vmul.f32 %v2070, %v2206
      %vm2208 = vcmp.eq.f32.partialorder %v2070, inf
      %v2209 = vsel %vm2208, %v2070, %v2207
      %vm2210 = vcmp.eq.f32.partialorder %v2070, 0.0
      %v2211 = vand.u32 %v2070, 2147483648
      %v2212 = vsel %vm2210, %v2211, %v2209
      %v2213 = vrsqrt.pop %v2071
      %v2214 = vmul.f32 %v2213, %v2071
      %v2215 = vmul.f32 %v2214, %v2213
      %v2216 = vmul.f32 0.5, %v2215
      %v2217 = vsub.f32 1.5, %v2216
      %v2218 = vmul.f32 %v2213, %v2217
      %v2219 = vmul.f32 %v2071, %v2218
      %vm2220 = vcmp.eq.f32.partialorder %v2071, inf
      %v2221 = vsel %vm2220, %v2071, %v2219
      %vm2222 = vcmp.eq.f32.partialorder %v2071, 0.0
      %v2223 = vand.u32 %v2071, 2147483648
      %v2224 = vsel %vm2222, %v2223, %v2221
      %v2225 = vrsqrt.pop %v2072
      %v2226 = vmul.f32 %v2225, %v2072
      %v2227 = vmul.f32 %v2226, %v2225
      %v2228 = vmul.f32 0.5, %v2227
      %v2229 = vsub.f32 1.5, %v2228
      %v2230 = vmul.f32 %v2225, %v2229
      %v2231 = vmul.f32 %v2072, %v2230
      %vm2232 = vcmp.eq.f32.partialorder %v2072, inf
      %v2233 = vsel %vm2232, %v2072, %v2231
      %vm2234 = vcmp.eq.f32.partialorder %v2072, 0.0
      %v2235 = vand.u32 %v2072, 2147483648
      %v2236 = vsel %vm2234, %v2235, %v2233
      %v2237 = vrsqrt.pop %v2073
      %v2238 = vmul.f32 %v2237, %v2073
      %v2239 = vmul.f32 %v2238, %v2237
      %v2240 = vmul.f32 0.5, %v2239
      %v2241 = vsub.f32 1.5, %v2240
      %v2242 = vmul.f32 %v2237, %v2241
      %v2243 = vmul.f32 %v2073, %v2242
      %vm2244 = vcmp.eq.f32.partialorder %v2073, inf
      %v2245 = vsel %vm2244, %v2073, %v2243
      %vm2246 = vcmp.eq.f32.partialorder %v2073, 0.0
      %v2247 = vand.u32 %v2073, 2147483648
      %v2248 = vsel %vm2246, %v2247, %v2245
      %v2249 = vrsqrt.pop %v2074
      %v2250 = vmul.f32 %v2249, %v2074
      %v2251 = vmul.f32 %v2250, %v2249
      %v2252 = vmul.f32 0.5, %v2251
      %v2253 = vsub.f32 1.5, %v2252
      %v2254 = vmul.f32 %v2249, %v2253
      %v2255 = vmul.f32 %v2074, %v2254
      %vm2256 = vcmp.eq.f32.partialorder %v2074, inf
      %v2257 = vsel %vm2256, %v2074, %v2255
      %vm2258 = vcmp.eq.f32.partialorder %v2074, 0.0
      %v2259 = vand.u32 %v2074, 2147483648
      %v2260 = vsel %vm2258, %v2259, %v2257
      %v2261 = vrsqrt.pop %v2075
      %v2262 = vmul.f32 %v2261, %v2075
      %v2263 = vmul.f32 %v2262, %v2261
      %v2264 = vmul.f32 0.5, %v2263
      %v2265 = vsub.f32 1.5, %v2264
      %v2266 = vmul.f32 %v2261, %v2265
      %v2267 = vmul.f32 %v2075, %v2266
      %vm2268 = vcmp.eq.f32.partialorder %v2075, inf
      %v2269 = vsel %vm2268, %v2075, %v2267
      %vm2270 = vcmp.eq.f32.partialorder %v2075, 0.0
      %v2271 = vand.u32 %v2075, 2147483648
      %v2272 = vsel %vm2270, %v2271, %v2269
      %v2273 = vrsqrt.pop %v2076
      %v2274 = vmul.f32 %v2273, %v2076
      %v2275 = vmul.f32 %v2274, %v2273
      %v2276 = vmul.f32 0.5, %v2275
      %v2277 = vsub.f32 1.5, %v2276
      %v2278 = vmul.f32 %v2273, %v2277
      %v2279 = vmul.f32 %v2076, %v2278
      %vm2280 = vcmp.eq.f32.partialorder %v2076, inf
      %v2281 = vsel %vm2280, %v2076, %v2279
      %vm2282 = vcmp.eq.f32.partialorder %v2076, 0.0
      %v2283 = vand.u32 %v2076, 2147483648
      %v2284 = vsel %vm2282, %v2283, %v2281
      %v2285 = vrsqrt.pop %v2077
      %v2286 = vmul.f32 %v2285, %v2077
      %v2287 = vmul.f32 %v2286, %v2285
      %v2288 = vmul.f32 0.5, %v2287
      %v2289 = vsub.f32 1.5, %v2288
      %v2290 = vmul.f32 %v2285, %v2289
      %v2291 = vmul.f32 %v2077, %v2290
      %vm2292 = vcmp.eq.f32.partialorder %v2077, inf
      %v2293 = vsel %vm2292, %v2077, %v2291
      %vm2294 = vcmp.eq.f32.partialorder %v2077, 0.0
      %v2295 = vand.u32 %v2077, 2147483648
      %v2296 = vsel %vm2294, %v2295, %v2293
      %v2297 = vrsqrt.pop %v2078
      %v2298 = vmul.f32 %v2297, %v2078
      %v2299 = vmul.f32 %v2298, %v2297
      %v2300 = vmul.f32 0.5, %v2299
      %v2301 = vsub.f32 1.5, %v2300
      %v2302 = vmul.f32 %v2297, %v2301
      %v2303 = vmul.f32 %v2078, %v2302
      %vm2304 = vcmp.eq.f32.partialorder %v2078, inf
      %v2305 = vsel %vm2304, %v2078, %v2303
      %vm2306 = vcmp.eq.f32.partialorder %v2078, 0.0
      %v2307 = vand.u32 %v2078, 2147483648
      %v2308 = vsel %vm2306, %v2307, %v2305
      %v2309 = vrsqrt.pop %v2079
      %v2310 = vmul.f32 %v2309, %v2079
      %v2311 = vmul.f32 %v2310, %v2309
      %v2312 = vmul.f32 0.5, %v2311
      %v2313 = vsub.f32 1.5, %v2312
      %v2314 = vmul.f32 %v2309, %v2313
      %v2315 = vmul.f32 %v2079, %v2314
      %vm2316 = vcmp.eq.f32.partialorder %v2079, inf
      %v2317 = vsel %vm2316, %v2079, %v2315
      %vm2318 = vcmp.eq.f32.partialorder %v2079, 0.0
      %v2319 = vand.u32 %v2079, 2147483648
      %v2320 = vsel %vm2318, %v2319, %v2317
      %v2321 = vrsqrt.pop %v2080
      %v2322 = vmul.f32 %v2321, %v2080
      %v2323 = vmul.f32 %v2322, %v2321
      %v2324 = vmul.f32 0.5, %v2323
      %v2325 = vsub.f32 1.5, %v2324
      %v2326 = vmul.f32 %v2321, %v2325
      %v2327 = vmul.f32 %v2080, %v2326
      %vm2328 = vcmp.eq.f32.partialorder %v2080, inf
      %v2329 = vsel %vm2328, %v2080, %v2327
      %vm2330 = vcmp.eq.f32.partialorder %v2080, 0.0
      %v2331 = vand.u32 %v2080, 2147483648
      %v2332 = vsel %vm2330, %v2331, %v2329
      %v2333 = vrsqrt.pop %v2081
      %v2334 = vmul.f32 %v2333, %v2081
      %v2335 = vmul.f32 %v2334, %v2333
      %v2336 = vmul.f32 0.5, %v2335
      %v2337 = vsub.f32 1.5, %v2336
      %v2338 = vmul.f32 %v2333, %v2337
      %v2339 = vmul.f32 %v2081, %v2338
      %vm2340 = vcmp.eq.f32.partialorder %v2081, inf
      %v2341 = vsel %vm2340, %v2081, %v2339
      %vm2342 = vcmp.eq.f32.partialorder %v2081, 0.0
      %v2343 = vand.u32 %v2081, 2147483648
      %v2344 = vsel %vm2342, %v2343, %v2341
      %v2345 = vrsqrt.pop %v2082
      %v2346 = vmul.f32 %v2345, %v2082
      %v2347 = vmul.f32 %v2346, %v2345
      %v2348 = vmul.f32 0.5, %v2347
      %v2349 = vsub.f32 1.5, %v2348
      %v2350 = vmul.f32 %v2345, %v2349
      %v2351 = vmul.f32 %v2082, %v2350
      %vm2352 = vcmp.eq.f32.partialorder %v2082, inf
      %v2353 = vsel %vm2352, %v2082, %v2351
      %vm2354 = vcmp.eq.f32.partialorder %v2082, 0.0
      %v2355 = vand.u32 %v2082, 2147483648
      %v2356 = vsel %vm2354, %v2355, %v2353
      %v2357 = vrsqrt.pop %v2083
      %v2358 = vmul.f32 %v2357, %v2083
      %v2359 = vmul.f32 %v2358, %v2357
      %v2360 = vmul.f32 0.5, %v2359
      %v2361 = vsub.f32 1.5, %v2360
      %v2362 = vmul.f32 %v2357, %v2361
      %v2363 = vmul.f32 %v2083, %v2362
      %vm2364 = vcmp.eq.f32.partialorder %v2083, inf
      %v2365 = vsel %vm2364, %v2083, %v2363
      %vm2366 = vcmp.eq.f32.partialorder %v2083, 0.0
      %v2367 = vand.u32 %v2083, 2147483648
      %v2368 = vsel %vm2366, %v2367, %v2365
      %v2369 = vrsqrt.pop %v2084
      %v2370 = vmul.f32 %v2369, %v2084
      %v2371 = vmul.f32 %v2370, %v2369
      %v2372 = vmul.f32 0.5, %v2371
      %v2373 = vsub.f32 1.5, %v2372
      %v2374 = vmul.f32 %v2369, %v2373
      %v2375 = vmul.f32 %v2084, %v2374
      %vm2376 = vcmp.eq.f32.partialorder %v2084, inf
      %v2377 = vsel %vm2376, %v2084, %v2375
      %vm2378 = vcmp.eq.f32.partialorder %v2084, 0.0
      %v2379 = vand.u32 %v2084, 2147483648
      %v2380 = vsel %vm2378, %v2379, %v2377
      %v2381 = vrsqrt.pop %v2085
      %v2382 = vmul.f32 %v2381, %v2085
      %v2383 = vmul.f32 %v2382, %v2381
      %v2384 = vmul.f32 0.5, %v2383
      %v2385 = vsub.f32 1.5, %v2384
      %v2386 = vmul.f32 %v2381, %v2385
      %v2387 = vmul.f32 %v2085, %v2386
      %vm2388 = vcmp.eq.f32.partialorder %v2085, inf
      %v2389 = vsel %vm2388, %v2085, %v2387
      %vm2390 = vcmp.eq.f32.partialorder %v2085, 0.0
      %v2391 = vand.u32 %v2085, 2147483648
      %v2392 = vsel %vm2390, %v2391, %v2389
      %v2393 = vrsqrt.pop %v2086
      %v2394 = vmul.f32 %v2393, %v2086
      %v2395 = vmul.f32 %v2394, %v2393
      %v2396 = vmul.f32 0.5, %v2395
      %v2397 = vsub.f32 1.5, %v2396
      %v2398 = vmul.f32 %v2393, %v2397
      %v2399 = vmul.f32 %v2086, %v2398
      %vm2400 = vcmp.eq.f32.partialorder %v2086, inf
      %v2401 = vsel %vm2400, %v2086, %v2399
      %vm2402 = vcmp.eq.f32.partialorder %v2086, 0.0
      %v2403 = vand.u32 %v2086, 2147483648
      %v2404 = vsel %vm2402, %v2403, %v2401
      %v2405 = vrsqrt.pop %v2087
      %v2406 = vmul.f32 %v2405, %v2087
      %v2407 = vmul.f32 %v2406, %v2405
      %v2408 = vmul.f32 0.5, %v2407
      %v2409 = vsub.f32 1.5, %v2408
      %v2410 = vmul.f32 %v2405, %v2409
      %v2411 = vmul.f32 %v2087, %v2410
      %vm2412 = vcmp.eq.f32.partialorder %v2087, inf
      %v2413 = vsel %vm2412, %v2087, %v2411
      %vm2414 = vcmp.eq.f32.partialorder %v2087, 0.0
      %v2415 = vand.u32 %v2087, 2147483648
      %v2416 = vsel %vm2414, %v2415, %v2413
      %v2417 = vrsqrt.pop %v2088
      %v2418 = vmul.f32 %v2417, %v2088
      %v2419 = vmul.f32 %v2418, %v2417
      %v2420 = vmul.f32 0.5, %v2419
      %v2421 = vsub.f32 1.5, %v2420
      %v2422 = vmul.f32 %v2417, %v2421
      %v2423 = vmul.f32 %v2088, %v2422
      %vm2424 = vcmp.eq.f32.partialorder %v2088, inf
      %v2425 = vsel %vm2424, %v2088, %v2423
      %vm2426 = vcmp.eq.f32.partialorder %v2088, 0.0
      %v2427 = vand.u32 %v2088, 2147483648
      %v2428 = vsel %vm2426, %v2427, %v2425
      %v2429 = vrsqrt.pop %v2089
      %v2430 = vmul.f32 %v2429, %v2089
      %v2431 = vmul.f32 %v2430, %v2429
      %v2432 = vmul.f32 0.5, %v2431
      %v2433 = vsub.f32 1.5, %v2432
      %v2434 = vmul.f32 %v2429, %v2433
      %v2435 = vmul.f32 %v2089, %v2434
      %vm2436 = vcmp.eq.f32.partialorder %v2089, inf
      %v2437 = vsel %vm2436, %v2089, %v2435
      %vm2438 = vcmp.eq.f32.partialorder %v2089, 0.0
      %v2439 = vand.u32 %v2089, 2147483648
      %v2440 = vsel %vm2438, %v2439, %v2437
      %v2441 = vrsqrt.pop %v2090
      %v2442 = vmul.f32 %v2441, %v2090
      %v2443 = vmul.f32 %v2442, %v2441
      %v2444 = vmul.f32 0.5, %v2443
      %v2445 = vsub.f32 1.5, %v2444
      %v2446 = vmul.f32 %v2441, %v2445
      %v2447 = vmul.f32 %v2090, %v2446
      %vm2448 = vcmp.eq.f32.partialorder %v2090, inf
      %v2449 = vsel %vm2448, %v2090, %v2447
      %vm2450 = vcmp.eq.f32.partialorder %v2090, 0.0
      %v2451 = vand.u32 %v2090, 2147483648
      %v2452 = vsel %vm2450, %v2451, %v2449
      %v2453 = vrsqrt.pop %v2091
      %v2454 = vmul.f32 %v2453, %v2091
      %v2455 = vmul.f32 %v2454, %v2453
      %v2456 = vmul.f32 0.5, %v2455
      %v2457 = vsub.f32 1.5, %v2456
      %v2458 = vmul.f32 %v2453, %v2457
      %v2459 = vmul.f32 %v2091, %v2458
      %vm2460 = vcmp.eq.f32.partialorder %v2091, inf
      %v2461 = vsel %vm2460, %v2091, %v2459
      %vm2462 = vcmp.eq.f32.partialorder %v2091, 0.0
      %v2463 = vand.u32 %v2091, 2147483648
      %v2464 = vsel %vm2462, %v2463, %v2461
      %v2465 = vrsqrt.pop %v2092
      %v2466 = vmul.f32 %v2465, %v2092
      %v2467 = vmul.f32 %v2466, %v2465
      %v2468 = vmul.f32 0.5, %v2467
      %v2469 = vsub.f32 1.5, %v2468
      %v2470 = vmul.f32 %v2465, %v2469
      %v2471 = vmul.f32 %v2092, %v2470
      %vm2472 = vcmp.eq.f32.partialorder %v2092, inf
      %v2473 = vsel %vm2472, %v2092, %v2471
      %vm2474 = vcmp.eq.f32.partialorder %v2092, 0.0
      %v2475 = vand.u32 %v2092, 2147483648
      %v2476 = vsel %vm2474, %v2475, %v2473
      %v2477 = vpack.c.bf16 %v2128, %v2104
      %v2478 = vpack.c.bf16 %v2140, %v2116
      %v2479 = vpack.c.bf16 %v2176, %v2152
      %v2480 = vpack.c.bf16 %v2188, %v2164
      %v2481 = vpack.c.bf16 %v2224, %v2200
      %v2482 = vpack.c.bf16 %v2236, %v2212
      %v2483 = vpack.c.bf16 %v2272, %v2248
      %v2484 = vpack.c.bf16 %v2284, %v2260
      %v2485 = vpack.c.bf16 %v2320, %v2296
      %v2486 = vpack.c.bf16 %v2332, %v2308
      %v2487 = vpack.c.bf16 %v2368, %v2344
      %v2488 = vpack.c.bf16 %v2380, %v2356
      %v2489 = vpack.c.bf16 %v2416, %v2392
      %v2490 = vpack.c.bf16 %v2428, %v2404
      %v2491 = vpack.c.bf16 %v2464, %v2440
      %v2492 = vpack.c.bf16 %v2476, %v2452
      %v2493 = vld [vmem:[%s4] sm:$0xf]
      %v2494 = vld [vmem:[%s4 + $0x4] sm:$0xf]
      %v2495 = vld [vmem:[%s4 + $0x8] sm:$0xf]
      %v2496 = vld [vmem:[%s4 + $0xc] sm:$0xf]
      %v2497 = vld [vmem:[%s4 + $0x10] sm:$0xf]
      %v2498 = vld [vmem:[%s4 + $0x14] sm:$0xf]
      %v2499 = vld [vmem:[%s4 + $0x18] sm:$0xf]
      %v2500 = vld [vmem:[%s4 + $0x1c] sm:$0xf]
      %v2501 = vld [vmem:[%s4 + $0x20] sm:$0xf]
      %v2502 = vld [vmem:[%s4 + $0x24] sm:$0xf]
      %v2503 = vld [vmem:[%s4 + $0x28] sm:$0xf]
      %v2504 = vld [vmem:[%s4 + $0x2c] sm:$0xf]
      %v2505 = vld [vmem:[%s4 + $0x30] sm:$0xf]
      %v2506 = vld [vmem:[%s4 + $0x34] sm:$0xf]
      %v2507 = vld [vmem:[%s4 + $0x38] sm:$0xf]
      %v2508 = vld [vmem:[%s4 + $0x3c] sm:$0xf]
      %v2509 = vld [vmem:[%s4 + $0x40] sm:$0xf]
      %v2510 = vld [vmem:[%s4 + $0x44] sm:$0xf]
      %v2511 = vld [vmem:[%s4 + $0x48] sm:$0xf]
      %v2512 = vld [vmem:[%s4 + $0x4c] sm:$0xf]
      %v2513 = vld [vmem:[%s4 + $0x50] sm:$0xf]
      %v2514 = vld [vmem:[%s4 + $0x54] sm:$0xf]
      %v2515 = vld [vmem:[%s4 + $0x58] sm:$0xf]
      %v2516 = vld [vmem:[%s4 + $0x5c] sm:$0xf]
      %v2517 = vld [vmem:[%s4 + $0x60] sm:$0xf]
      %v2518 = vld [vmem:[%s4 + $0x64] sm:$0xf]
      %v2519 = vld [vmem:[%s4 + $0x68] sm:$0xf]
      %v2520 = vld [vmem:[%s4 + $0x6c] sm:$0xf]
      %v2521 = vld [vmem:[%s4 + $0x70] sm:$0xf]
      %v2522 = vld [vmem:[%s4 + $0x74] sm:$0xf]
      %v2523 = vld [vmem:[%s4 + $0x78] sm:$0xf]
      %v2524 = vld [vmem:[%s4 + $0x7c] sm:$0xf]
      %v2557 = vunpack.c.l.b16 %v2493
      %v2558 = vunpack.c.l.b16 %v2494
      %v2559 = vunpack.c.l.b16 %v2495
      %v2560 = vunpack.c.l.b16 %v2496
      %v2561 = vunpack.c.l.b16 %v2497
      %v2562 = vunpack.c.l.b16 %v2498
      %v2563 = vunpack.c.l.b16 %v2499
      %v2564 = vunpack.c.l.b16 %v2500
      %v2565 = vunpack.c.l.b16 %v2501
      %v2566 = vunpack.c.l.b16 %v2502
      %v2567 = vunpack.c.l.b16 %v2503
      %v2568 = vunpack.c.l.b16 %v2504
      %v2569 = vunpack.c.l.b16 %v2505
      %v2570 = vunpack.c.l.b16 %v2506
      %v2571 = vunpack.c.l.b16 %v2507
      %v2572 = vunpack.c.l.b16 %v2508
      %v2573 = vunpack.c.l.b16 %v2509
      %v2574 = vunpack.c.l.b16 %v2510
      %v2575 = vunpack.c.l.b16 %v2511
      %v2576 = vunpack.c.l.b16 %v2512
      %v2577 = vunpack.c.l.b16 %v2513
      %v2578 = vunpack.c.l.b16 %v2514
      %v2579 = vunpack.c.l.b16 %v2515
      %v2580 = vunpack.c.l.b16 %v2516
      %v2581 = vunpack.c.l.b16 %v2517
      %v2582 = vunpack.c.l.b16 %v2518
      %v2583 = vunpack.c.l.b16 %v2519
      %v2584 = vunpack.c.l.b16 %v2520
      %v2585 = vunpack.c.l.b16 %v2521
      %v2586 = vunpack.c.l.b16 %v2522
      %v2587 = vunpack.c.l.b16 %v2523
      %v2588 = vunpack.c.l.b16 %v2524
      %v2589 = vpack.c.b16 %v2558, %v2557
      %v2590 = vpack.c.b16 %v2560, %v2559
      %v2591 = vpack.c.b16 %v2562, %v2561
      %v2592 = vpack.c.b16 %v2564, %v2563
      %v2593 = vpack.c.b16 %v2566, %v2565
      %v2594 = vpack.c.b16 %v2568, %v2567
      %v2595 = vpack.c.b16 %v2570, %v2569
      %v2596 = vpack.c.b16 %v2572, %v2571
      %v2597 = vpack.c.b16 %v2574, %v2573
      %v2598 = vpack.c.b16 %v2576, %v2575
      %v2599 = vpack.c.b16 %v2578, %v2577
      %v2600 = vpack.c.b16 %v2580, %v2579
      %v2601 = vpack.c.b16 %v2582, %v2581
      %v2602 = vpack.c.b16 %v2584, %v2583
      %v2603 = vpack.c.b16 %v2586, %v2585
      %v2604 = vpack.c.b16 %v2588, %v2587
      %2621 = vmatpush.bf16.msra.mxu0 %v2596
      %2622 = vmatpush.bf16.msra.mxu0 %v2595
      %2623 = vmatpush.bf16.msra.mxu0 %v2594
      %2624 = vmatpush.bf16.msra.mxu0 %v2593
      %2625 = vmatpush.bf16.msra.mxu0 %v2592
      %2626 = vmatpush.bf16.msra.mxu0 %v2591
      %2627 = vmatpush.bf16.msra.mxu0 %v2590
      %2628 = vmatpush.bf16.msra.mxu0 %v2589
      %2629 = vmatmul.bf16.gmra.mxu0 %v2477
      %v2630 = vpop.f32.mrf.mxu0
      %v2631 = vadd.f32 0.0, %v2630
      %v2632 = vpop.f32.mrf.mxu0
      %v2633 = vadd.f32 0.0, %v2632
      %2634 = vmatmul.bf16.gmra.mxu0 %v2479
      %v2635 = vpop.f32.mrf.mxu0
      %v2636 = vadd.f32 0.0, %v2635
      %v2637 = vpop.f32.mrf.mxu0
      %v2638 = vadd.f32 0.0, %v2637
      %2639 = vmatmul.bf16.gmra.mxu0 %v2481
      %v2640 = vpop.f32.mrf.mxu0
      %v2641 = vadd.f32 0.0, %v2640
      %v2642 = vpop.f32.mrf.mxu0
      %v2643 = vadd.f32 0.0, %v2642
      %2644 = vmatmul.bf16.gmra.mxu0 %v2483
      %v2645 = vpop.f32.mrf.mxu0
      %v2646 = vadd.f32 0.0, %v2645
      %v2647 = vpop.f32.mrf.mxu0
      %v2648 = vadd.f32 0.0, %v2647
      %2649 = vmatmul.bf16.gmra.mxu0 %v2485
      %v2650 = vpop.f32.mrf.mxu0
      %v2651 = vadd.f32 0.0, %v2650
      %v2652 = vpop.f32.mrf.mxu0
      %v2653 = vadd.f32 0.0, %v2652
      %2654 = vmatmul.bf16.gmra.mxu0 %v2487
      %v2655 = vpop.f32.mrf.mxu0
      %v2656 = vadd.f32 0.0, %v2655
      %v2657 = vpop.f32.mrf.mxu0
      %v2658 = vadd.f32 0.0, %v2657
      %2659 = vmatmul.bf16.gmra.mxu0 %v2489
      %v2660 = vpop.f32.mrf.mxu0
      %v2661 = vadd.f32 0.0, %v2660
      %v2662 = vpop.f32.mrf.mxu0
      %v2663 = vadd.f32 0.0, %v2662
      %2664 = vmatmul.bf16.gmra.mxu0 %v2491
      %v2665 = vpop.f32.mrf.mxu0
      %v2666 = vadd.f32 0.0, %v2665
      %v2667 = vpop.f32.mrf.mxu0
      %v2668 = vadd.f32 0.0, %v2667
      %2669 = vdwg.mxu0
      %2670 = vmatpush.bf16.msra.mxu0 %v2604
      %2671 = vmatpush.bf16.msra.mxu0 %v2603
      %2672 = vmatpush.bf16.msra.mxu0 %v2602
      %2673 = vmatpush.bf16.msra.mxu0 %v2601
      %2674 = vmatpush.bf16.msra.mxu0 %v2600
      %2675 = vmatpush.bf16.msra.mxu0 %v2599
      %2676 = vmatpush.bf16.msra.mxu0 %v2598
      %2677 = vmatpush.bf16.msra.mxu0 %v2597
      %2678 = vmatmul.bf16.gmra.mxu0 %v2478
      %v2679 = vpop.f32.mrf.mxu0
      %v2680 = vadd.f32 %v2631, %v2679
      %v2681 = vpop.f32.mrf.mxu0
      %v2682 = vadd.f32 %v2633, %v2681
      %2683 = vmatmul.bf16.gmra.mxu0 %v2480
      %v2684 = vpop.f32.mrf.mxu0
      %v2685 = vadd.f32 %v2636, %v2684
      %v2686 = vpop.f32.mrf.mxu0
      %v2687 = vadd.f32 %v2638, %v2686
      %2688 = vmatmul.bf16.gmra.mxu0 %v2482
      %v2689 = vpop.f32.mrf.mxu0
      %v2690 = vadd.f32 %v2641, %v2689
      %v2691 = vpop.f32.mrf.mxu0
      %v2692 = vadd.f32 %v2643, %v2691
      %2693 = vmatmul.bf16.gmra.mxu0 %v2484
      %v2694 = vpop.f32.mrf.mxu0
      %v2695 = vadd.f32 %v2646, %v2694
      %v2696 = vpop.f32.mrf.mxu0
      %v2697 = vadd.f32 %v2648, %v2696
      %2698 = vmatmul.bf16.gmra.mxu0 %v2486
      %v2699 = vpop.f32.mrf.mxu0
      %v2700 = vadd.f32 %v2651, %v2699
      %v2701 = vpop.f32.mrf.mxu0
      %v2702 = vadd.f32 %v2653, %v2701
      %2703 = vmatmul.bf16.gmra.mxu0 %v2488
      %v2704 = vpop.f32.mrf.mxu0
      %v2705 = vadd.f32 %v2656, %v2704
      %v2706 = vpop.f32.mrf.mxu0
      %v2707 = vadd.f32 %v2658, %v2706
      %2708 = vmatmul.bf16.gmra.mxu0 %v2490
      %v2709 = vpop.f32.mrf.mxu0
      %v2710 = vadd.f32 %v2661, %v2709
      %v2711 = vpop.f32.mrf.mxu0
      %v2712 = vadd.f32 %v2663, %v2711
      %2713 = vmatmul.bf16.gmra.mxu0 %v2492
      %v2714 = vpop.f32.mrf.mxu0
      %v2715 = vadd.f32 %v2666, %v2714
      %v2716 = vpop.f32.mrf.mxu0
      %v2717 = vadd.f32 %v2668, %v2716
      %2718 = vdwg.mxu0
      %v2719 = vsub.f32 %v2680, %v2700
      %v2720 = vsub.f32 %v2682, %v2702
      %v2721 = vsub.f32 %v2685, %v2705
      %v2722 = vsub.f32 %v2687, %v2707
      %v2723 = vsub.f32 %v2690, %v2710
      %v2724 = vsub.f32 %v2692, %v2712
      %v2725 = vsub.f32 %v2695, %v2715
      %v2726 = vsub.f32 %v2697, %v2717
      %v2727 = vmul.f32 %v2719, %v2719
      %v2728 = vmul.f32 %v2720, %v2720
      %v2729 = vmul.f32 %v2721, %v2721
      %v2730 = vmul.f32 %v2722, %v2722
      %v2731 = vmul.f32 %v2723, %v2723
      %v2732 = vmul.f32 %v2724, %v2724
      %v2733 = vmul.f32 %v2725, %v2725
      %v2734 = vmul.f32 %v2726, %v2726
      %v2735 = vadd.f32 %v2680, 1e-07
      %v2736 = vadd.f32 %v2682, 1e-07
      %v2737 = vadd.f32 %v2685, 1e-07
      %v2738 = vadd.f32 %v2687, 1e-07
      %v2739 = vadd.f32 %v2690, 1e-07
      %v2740 = vadd.f32 %v2692, 1e-07
      %v2741 = vadd.f32 %v2695, 1e-07
      %v2742 = vadd.f32 %v2697, 1e-07
      %v2743 = vlog2.pop %v2735
      %v2744 = vmul.f32 %v2743, 0.6931472
      %v2745 = vlog2.pop %v2736
      %v2746 = vmul.f32 %v2745, 0.6931472
      %v2747 = vlog2.pop %v2737
      %v2748 = vmul.f32 %v2747, 0.6931472
      %v2749 = vlog2.pop %v2738
      %v2750 = vmul.f32 %v2749, 0.6931472
      %v2751 = vlog2.pop %v2739
      %v2752 = vmul.f32 %v2751, 0.6931472
      %v2753 = vlog2.pop %v2740
      %v2754 = vmul.f32 %v2753, 0.6931472
      %v2755 = vlog2.pop %v2741
      %v2756 = vmul.f32 %v2755, 0.6931472
      %v2757 = vlog2.pop %v2742
      %v2758 = vmul.f32 %v2757, 0.6931472
      %v2759 = vadd.f32 %v2700, 1e-07
      %v2760 = vadd.f32 %v2702, 1e-07
      %v2761 = vadd.f32 %v2705, 1e-07
      %v2762 = vadd.f32 %v2707, 1e-07
      %v2763 = vadd.f32 %v2710, 1e-07
      %v2764 = vadd.f32 %v2712, 1e-07
      %v2765 = vadd.f32 %v2715, 1e-07
      %v2766 = vadd.f32 %v2717, 1e-07
      %v2767 = vlog2.pop %v2759
      %v2768 = vmul.f32 %v2767, 0.6931472
      %v2769 = vlog2.pop %v2760
      %v2770 = vmul.f32 %v2769, 0.6931472
      %v2771 = vlog2.pop %v2761
      %v2772 = vmul.f32 %v2771, 0.6931472
      %v2773 = vlog2.pop %v2762
      %v2774 = vmul.f32 %v2773, 0.6931472
      %v2775 = vlog2.pop %v2763
      %v2776 = vmul.f32 %v2775, 0.6931472
      %v2777 = vlog2.pop %v2764
      %v2778 = vmul.f32 %v2777, 0.6931472
      %v2779 = vlog2.pop %v2765
      %v2780 = vmul.f32 %v2779, 0.6931472
      %v2781 = vlog2.pop %v2766
      %v2782 = vmul.f32 %v2781, 0.6931472
      %v2783 = vsub.f32 %v2744, %v2768
      %v2784 = vsub.f32 %v2746, %v2770
      %v2785 = vsub.f32 %v2748, %v2772
      %v2786 = vsub.f32 %v2750, %v2774
      %v2787 = vsub.f32 %v2752, %v2776
      %v2788 = vsub.f32 %v2754, %v2778
      %v2789 = vsub.f32 %v2756, %v2780
      %v2790 = vsub.f32 %v2758, %v2782
      %v2791 = vand.u32 2147483647, %v2783
      %v2792 = vand.u32 2147483647, %v2784
      %v2793 = vand.u32 2147483647, %v2785
      %v2794 = vand.u32 2147483647, %v2786
      %v2795 = vand.u32 2147483647, %v2787
      %v2796 = vand.u32 2147483647, %v2788
      %v2797 = vand.u32 2147483647, %v2789
      %v2798 = vand.u32 2147483647, %v2790
      %v2799 = vadd.f32 %v2727, %v2791
      %v2800 = vadd.f32 %v2728, %v2792
      %v2801 = vadd.f32 %v2729, %v2793
      %v2802 = vadd.f32 %v2730, %v2794
      %v2803 = vadd.f32 %v2731, %v2795
      %v2804 = vadd.f32 %v2732, %v2796
      %v2805 = vadd.f32 %v2733, %v2797
      %v2806 = vadd.f32 %v2734, %v2798
      %v2807 = vadd.f32 %v2799, %v2800
      %v2808 = vadd.f32 %v2807, %v2801
      %v2809 = vadd.f32 %v2808, %v2802
      %v2810 = vadd.f32 %v2809, %v2803
      %v2811 = vadd.f32 %v2810, %v2804
      %v2812 = vadd.f32 %v2811, %v2805
      %v2813 = vadd.f32 %v2812, %v2806
      %2814 = vst [vmem:[%s252] sm:$0xff] %v2813
      %p2815 = scmp.lt.s32.totalorder %s16, 1
      %s2816 = scalar_select %p2815, %s16, 1
      %s2817 = smul.addr %s2816, 8
      %s2818 = scalar_lea.vmem %s5, %s2817
      // Predicated region
      $region41: #{audio_distance.3} parent=39 // pred_check
        %p2819 = pneg %p149
      $region42: #{audio_distance.3} parent=39 // pred_check_branch
        %2821 = sbr.rel (%p2819) target = $region44
      $region43: #{audio_distance.3} parent=39 // pred_region
        _
      $region44: #{audio_distance.3} parent=39 // pred_fallthru
        _
    $region40: #{audio_distance.3} parent=5 // pred_fallthru
      _
    %p2822 = scmp.le.s32.totalorder 2, %s11
    // Predicated region
    $region45: #{audio_distance.3} parent=5 // pred_check
      %p2823 = pneg %p2822
    $region46: #{audio_distance.3} parent=5 // pred_check_branch
      %2825 = sbr.rel (%p2823) target = $region48
    $region47: #{audio_distance.3} parent=5 // pred_region
      %s2826 = ssub.s32 %s11, 2
      // Predicated region
      $region49: #{audio_distance.3} parent=47 // pred_check
        %p2827 = pneg %p155
      $region50: #{audio_distance.3} parent=47 // pred_check_branch
        %2829 = sbr.rel (%p2827) target = $region52
      $region51: #{audio_distance.3} parent=47 // pred_region
        %p2830 = scmp.lt.s32.totalorder %s17, 1
        %s2831 = scalar_select %p2830, %s17, 1
        %s2832 = smul.addr %s2831, 8
        %s2833 = scalar_lea.vmem %s5, %s2832
      $region52: #{audio_distance.3} parent=47 // pred_fallthru
        _
    $region48: #{audio_distance.3} parent=5 // pred_fallthru
      _
  $region6: #{audio_distance.3} parent=0 // loop_footer
    %s15 = sadd.s32 1, %s11
  $region7: #{audio_distance.3} parent=0 // loop_footer_branch
    %10 = sbr.rel target = $region3
  $region8: #{audio_distance.3} parent=0 // loop_exit
    _

// kernel: audio_distance.5
$region0: #{audio_distance.5}
  #allocation0 [shape = 'u32[]', space=smem, size = 0x4, offset = 0x4, fixed_abs, tag = 'smem constant byte address 0x4 - core index']
  #allocation1 [shape = 'u32[72,128]{1,0:T(1,128)}', space=vmem, size = 0x9000, scoped, tag = 'internal scratch']
  %s0 = inlined_call_operand.vmem [shape: bf16[384,128], index: 0, kind: input, shape index: {}]
  %s1 = inlined_call_operand.vmem [shape: bf16[384,128], index: 1, kind: input, shape index: {}]
  %s2 = inlined_call_operand.vmem [shape: bf16[128,128], index: 2, kind: input, shape index: {}]
  %s3 = inlined_call_operand.vmem [shape: bf16[128,128], index: 3, kind: input, shape index: {}]
  %s4 = inlined_call_operand.vmem [shape: bf16[128,128], index: 4, kind: input, shape index: {}]
  %s5 = inlined_call_operand.vmem [shape: f32[24,128], index: 5, kind: output, shape index: {}]
  %s6 = sld [smem:[#allocation0]]
  $region53: #{audio_distance.5} parent=0
    _
  %s8 = ssub.s32 1, %s6
  %s9 = scalar_select 0, %s8, %s6
  loop: start=0, step=1, limit=5
  $region2: #{audio_distance.5} parent=0 // loop_pre_header
    _
  $region3: #{audio_distance.5} parent=0 // loop_header
    %s11 = sphi 0, %s15
    %p12 = scmp.ge.s32.totalorder %s11, 5
    %s21 = sphi 0, %s23
    %s24 = sphi 0, %s21
    %s25 = sphi 0, %s24
    %s41 = sphi 0, %s25
    %s47 = sphi 0, %s49
    %s50 = sphi 0, %s47
    %s51 = sphi 0, %s50
    %s67 = sphi 0, %s51
    %s71 = sphi 0, %s71
    %s73 = sphi 0, %s71
    %s74 = sphi 0, %s73
    %s88 = sphi 0, %s74
    %s92 = sphi 0, %s92
    %s94 = sphi 0, %s92
    %s95 = sphi 0, %s94
    %s109 = sphi 0, %s95
    %s113 = sphi 0, %s113
    %s115 = sphi 0, %s113
    %s116 = sphi 0, %s115
    %s130 = sphi 0, %s116
    %s136 = sphi 0, %s138
    %s139 = sphi 0, %s136
    %s140 = sphi 0, %s139
    %s156 = sphi 0, %s140
  $region4: #{audio_distance.5} parent=0 // loop_header_branch
    %14 = sbr.rel (%p12) target = $region8
  $region5: #{audio_distance.5} parent=0 // loop_body
    %s16 = ssub.s32 %s11, 1
    %s17 = ssub.s32 %s11, 2
    %s18 = sadd.s32 %s11, 1
    %s19 = ssub.s32 %s11, %s18
    %p20 = scmp.eq.s32.totalorder %s19, 0
    %s22 = sadd.s32 %s21, 1
    %s23 = scalar_select %p20, %s21, %s22
    %p26 = pneg %p20
    %p27 = scmp.eq.s32.totalorder %s11, 2
    %p28 = por %p26, %p27
    %p29 = scmp.ne.s32.totalorder %s21, %s24
    %p30 = scmp.eq.s32.totalorder %s11, 0
    %p31 = por %p29, %p30
    %p32 = scmp.ne.s32.totalorder %s21, %s24
    %p33 = scmp.eq.s32.totalorder %s16, 2
    %p34 = por %p32, %p33
    %p35 = scmp.ne.s32.totalorder %s24, %s25
    %p36 = scmp.eq.s32.totalorder %s16, 0
    %p37 = por %p35, %p36
    %p38 = scmp.ne.s32.totalorder %s24, %s25
    %p39 = scmp.eq.s32.totalorder %s17, 2
    %p40 = por %p38, %p39
    %p42 = scmp.ne.s32.totalorder %s25, %s41
    %p43 = scmp.eq.s32.totalorder %s17, 0
    %p44 = por %p42, %p43
    %s45 = ssub.s32 %s11, %s18
    %p46 = scmp.eq.s32.totalorder %s45, 0
    %s48 = sadd.s32 %s47, 1
    %s49 = scalar_select %p46, %s47, %s48
    %p52 = pneg %p46
    %p53 = scmp.eq.s32.totalorder %s11, 2
    %p54 = por %p52, %p53
    %p55 = scmp.ne.s32.totalorder %s47, %s50
    %p56 = scmp.eq.s32.totalorder %s11, 0
    %p57 = por %p55, %p56
    %p58 = scmp.ne.s32.totalorder %s47, %s50
    %p59 = scmp.eq.s32.totalorder %s16, 2
    %p60 = por %p58, %p59
    %p61 = scmp.ne.s32.totalorder %s50, %s51
    %p62 = scmp.eq.s32.totalorder %s16, 0
    %p63 = por %p61, %p62
    %p64 = scmp.ne.s32.totalorder %s50, %s51
    %p65 = scmp.eq.s32.totalorder %s17, 2
    %p66 = por %p64, %p65
    %p68 = scmp.ne.s32.totalorder %s51, %s67
    %p69 = scmp.eq.s32.totalorder %s17, 0
    %p70 = por %p68, %p69
    %s72 = sadd.s32 %s71, 1
    %p75 = scmp.eq.s32.totalorder %s11, 2
    %p76 = scmp.ne.s32.totalorder %s71, %s73
    %p77 = scmp.eq.s32.totalorder %s11, 0
    %p78 = por %p76, %p77
    %p79 = scmp.ne.s32.totalorder %s71, %s73
    %p80 = scmp.eq.s32.totalorder %s16, 2
    %p81 = por %p79, %p80
    %p82 = scmp.ne.s32.totalorder %s73, %s74
    %p83 = scmp.eq.s32.totalorder %s16, 0
    %p84 = por %p82, %p83
    %p85 = scmp.ne.s32.totalorder %s73, %s74
    %p86 = scmp.eq.s32.totalorder %s17, 2
    %p87 = por %p85, %p86
    %p89 = scmp.ne.s32.totalorder %s74, %s88
    %p90 = scmp.eq.s32.totalorder %s17, 0
    %p91 = por %p89, %p90
    %s93 = sadd.s32 %s92, 1
    %p96 = scmp.eq.s32.totalorder %s11, 2
    %p97 = scmp.ne.s32.totalorder %s92, %s94
    %p98 = scmp.eq.s32.totalorder %s11, 0
    %p99 = por %p97, %p98
    %p100 = scmp.ne.s32.totalorder %s92, %s94
    %p101 = scmp.eq.s32.totalorder %s16, 2
    %p102 = por %p100, %p101
    %p103 = scmp.ne.s32.totalorder %s94, %s95
    %p104 = scmp.eq.s32.totalorder %s16, 0
    %p105 = por %p103, %p104
    %p106 = scmp.ne.s32.totalorder %s94, %s95
    %p107 = scmp.eq.s32.totalorder %s17, 2
    %p108 = por %p106, %p107
    %p110 = scmp.ne.s32.totalorder %s95, %s109
    %p111 = scmp.eq.s32.totalorder %s17, 0
    %p112 = por %p110, %p111
    %s114 = sadd.s32 %s113, 1
    %p117 = scmp.eq.s32.totalorder %s11, 2
    %p118 = scmp.ne.s32.totalorder %s113, %s115
    %p119 = scmp.eq.s32.totalorder %s11, 0
    %p120 = por %p118, %p119
    %p121 = scmp.ne.s32.totalorder %s113, %s115
    %p122 = scmp.eq.s32.totalorder %s16, 2
    %p123 = por %p121, %p122
    %p124 = scmp.ne.s32.totalorder %s115, %s116
    %p125 = scmp.eq.s32.totalorder %s16, 0
    %p126 = por %p124, %p125
    %p127 = scmp.ne.s32.totalorder %s115, %s116
    %p128 = scmp.eq.s32.totalorder %s17, 2
    %p129 = por %p127, %p128
    %p131 = scmp.ne.s32.totalorder %s116, %s130
    %p132 = scmp.eq.s32.totalorder %s17, 0
    %p133 = por %p131, %p132
    %s134 = ssub.s32 %s11, %s18
    %p135 = scmp.eq.s32.totalorder %s134, 0
    %s137 = sadd.s32 %s136, 1
    %s138 = scalar_select %p135, %s136, %s137
    %p141 = pneg %p135
    %p142 = scmp.eq.s32.totalorder %s11, 2
    %p143 = por %p141, %p142
    %p144 = scmp.ne.s32.totalorder %s136, %s139
    %p145 = scmp.eq.s32.totalorder %s11, 0
    %p146 = por %p144, %p145
    %p147 = scmp.ne.s32.totalorder %s136, %s139
    %p148 = scmp.eq.s32.totalorder %s16, 2
    %p149 = por %p147, %p148
    %p150 = scmp.ne.s32.totalorder %s139, %s140
    %p151 = scmp.eq.s32.totalorder %s16, 0
    %p152 = por %p150, %p151
    %p153 = scmp.ne.s32.totalorder %s139, %s140
    %p154 = scmp.eq.s32.totalorder %s17, 2
    %p155 = por %p153, %p154
    %p157 = scmp.ne.s32.totalorder %s140, %s156
    %p158 = scmp.eq.s32.totalorder %s17, 0
    %p159 = por %p157, %p158
    %p160 = scmp.le.s32.totalorder 1, %s11
    %p161 = scmp.lt.s32.totalorder %s11, 4
    %p162 = pnand %p160, %p161
    %p163 = pneg %p162
    // Predicated region
    $region9: #{audio_distance.5} parent=5 // pred_check
      _
    $region10: #{audio_distance.5} parent=5 // pred_check_branch
      %165 = sbr.rel (%p162) target = $region12
    $region11: #{audio_distance.5} parent=5 // pred_region
      %s166 = ssub.s32 %s11, 1
      // Predicated region
      $region13: #{audio_distance.5} parent=11 // pred_check
        %p167 = pneg %p84
      $region14: #{audio_distance.5} parent=11 // pred_check_branch
        %169 = sbr.rel (%p167) target = $region16
      $region15: #{audio_distance.5} parent=11 // pred_region
        _
      $region16: #{audio_distance.5} parent=11 // pred_fallthru
        _
      // Predicated region
      $region17: #{audio_distance.5} parent=11 // pred_check
        %p170 = pneg %p105
      $region18: #{audio_distance.5} parent=11 // pred_check_branch
        %172 = sbr.rel (%p170) target = $region20
      $region19: #{audio_distance.5} parent=11 // pred_region
        _
      $region20: #{audio_distance.5} parent=11 // pred_fallthru
        _
      // Predicated region
      $region21: #{audio_distance.5} parent=11 // pred_check
        %p173 = pneg %p126
      $region22: #{audio_distance.5} parent=11 // pred_check_branch
        %175 = sbr.rel (%p173) target = $region24
      $region23: #{audio_distance.5} parent=11 // pred_region
        _
      $region24: #{audio_distance.5} parent=11 // pred_fallthru
        _
    $region12: #{audio_distance.5} parent=5 // pred_fallthru
      _
    %p176 = scmp.lt.s32.totalorder %s11, 3
    // Predicated region
    $region25: #{audio_distance.5} parent=5 // pred_check
      %p177 = pneg %p176
    $region26: #{audio_distance.5} parent=5 // pred_check_branch
      %179 = sbr.rel (%p177) target = $region28
    $region27: #{audio_distance.5} parent=5 // pred_region
      // Predicated region
      $region29: #{audio_distance.5} parent=27 // pred_check
        %p180 = pneg %p31
      $region30: #{audio_distance.5} parent=27 // pred_check_branch
        %182 = sbr.rel (%p180) target = $region32
      $region31: #{audio_distance.5} parent=27 // pred_region
        %s183 = smul.u32 16, %s11
        %p184 = scmp.lt.s32.totalorder %s183, 47
        %s185 = scalar_select %p184, %s183, 47
        %s186 = smul.addr %s185, 4
        %s187 = scalar_lea.vmem %s0, %s186
        %s188 = smul.u32 16, %s11
      $region32: #{audio_distance.5} parent=27 // pred_fallthru
        _
      // Predicated region
      $region33: #{audio_distance.5} parent=27 // pred_check
        %p189 = pneg %p57
      $region34: #{audio_distance.5} parent=27 // pred_check_branch
        %191 = sbr.rel (%p189) target = $region36
      $region35: #{audio_distance.5} parent=27 // pred_region
        %s192 = smul.u32 16, %s11
        %p193 = scmp.lt.s32.totalorder %s192, 47
        %s194 = scalar_select %p193, %s192, 47
        %s195 = smul.addr %s194, 4
        %s196 = scalar_lea.vmem %s1, %s195
        %s197 = smul.u32 16, %s11
      $region36: #{audio_distance.5} parent=27 // pred_fallthru
        _
    $region28: #{audio_distance.5} parent=5 // pred_fallthru
      _
    %p198 = scmp.le.s32.totalorder 1, %s11
    %p199 = scmp.lt.s32.totalorder %s11, 4
    %p200 = pnand %p198, %p199
    %p201 = pneg %p200
    // Predicated region
    $region37: #{audio_distance.5} parent=5 // pred_check
      _
    $region38: #{audio_distance.5} parent=5 // pred_check_branch
      %203 = sbr.rel (%p200) target = $region40
    $region39: #{audio_distance.5} parent=5 // pred_region
      %s204 = ssub.s32 %s11, 1
      %s205 = smul.u32 16, %s16
      %p206 = scmp.lt.s32.totalorder %s205, 47
      %s207 = scalar_select %p206, %s205, 47
      %s208 = smul.addr %s207, 4
      %s209 = scalar_lea.vmem %s0, %s208
      %p210 = pneg %p37
      %p211 = pneg %p34
      %s212 = smul.u32 16, %s16
      %p213 = scmp.lt.s32.totalorder %s212, 47
      %s214 = scalar_select %p213, %s212, 47
      %s215 = smul.addr %s214, 4
      %s216 = scalar_lea.vmem %s1, %s215
      %p217 = pneg %p63
      %p218 = pneg %p60
      %p219 = pneg %p84
      %p220 = pneg %p81
      %p221 = pneg %p105
      %p222 = pneg %p102
      %p223 = pneg %p126
      %p224 = pneg %p123
      %p225 = pneg %p152
      %p226 = pneg %p149
      %p227 = scmp.lt.s32.totalorder %s16, 2
      %s228 = scalar_select %p227, %s16, 2
      %s229 = smul.addr %s228, 8
      %s230 = scalar_lea.vmem %s5, %s229
      %s231 = smul.u32 16, %s16
      %p232 = scmp.lt.s32.totalorder %s231, 47
      %s233 = scalar_select %p232, %s231, 47
      %s234 = smul.addr %s233, 4
      %s235 = scalar_lea.vmem %s0, %s234
      %s236 = smul.u32 16, %s16
      %s237 = smul.u32 16, %s16
      %p238 = scmp.lt.s32.totalorder %s237, 47
      %s239 = scalar_select %p238, %s237, 47
      %s240 = smul.addr %s239, 4
      %s241 = scalar_lea.vmem %s1, %s240
      %s242 = smul.u32 16, %s16
      %p243 = scmp.lt.s32.totalorder %s16, 2
      %s244 = scalar_select %p243, %s16, 2
      %s245 = smul.addr %s244, 8
      %s246 = scalar_lea.vmem %s5, %s245
      %v247 = vld [vmem:[%s235] sm:$0xf]
      %v248 = vld [vmem:[%s235 + $0x4] sm:$0xf]
      %v249 = vld [vmem:[%s235 + $0x8] sm:$0xf]
      %v250 = vld [vmem:[%s235 + $0xc] sm:$0xf]
      %v251 = vld [vmem:[%s235 + $0x10] sm:$0xf]
      %v252 = vld [vmem:[%s235 + $0x14] sm:$0xf]
      %v253 = vld [vmem:[%s235 + $0x18] sm:$0xf]
      %v254 = vld [vmem:[%s235 + $0x1c] sm:$0xf]
      %v255 = vld [vmem:[%s235 + $0x20] sm:$0xf]
      %v256 = vld [vmem:[%s235 + $0x24] sm:$0xf]
      %v257 = vld [vmem:[%s235 + $0x28] sm:$0xf]
      %v258 = vld [vmem:[%s235 + $0x2c] sm:$0xf]
      %v259 = vld [vmem:[%s235 + $0x30] sm:$0xf]
      %v260 = vld [vmem:[%s235 + $0x34] sm:$0xf]
      %v261 = vld [vmem:[%s235 + $0x38] sm:$0xf]
      %v262 = vld [vmem:[%s235 + $0x3c] sm:$0xf]
      %v263 = vld [vmem:[%s241] sm:$0xf]
      %v264 = vld [vmem:[%s241 + $0x4] sm:$0xf]
      %v265 = vld [vmem:[%s241 + $0x8] sm:$0xf]
      %v266 = vld [vmem:[%s241 + $0xc] sm:$0xf]
      %v267 = vld [vmem:[%s241 + $0x10] sm:$0xf]
      %v268 = vld [vmem:[%s241 + $0x14] sm:$0xf]
      %v269 = vld [vmem:[%s241 + $0x18] sm:$0xf]
      %v270 = vld [vmem:[%s241 + $0x1c] sm:$0xf]
      %v271 = vld [vmem:[%s241 + $0x20] sm:$0xf]
      %v272 = vld [vmem:[%s241 + $0x24] sm:$0xf]
      %v273 = vld [vmem:[%s241 + $0x28] sm:$0xf]
      %v274 = vld [vmem:[%s241 + $0x2c] sm:$0xf]
      %v275 = vld [vmem:[%s241 + $0x30] sm:$0xf]
      %v276 = vld [vmem:[%s241 + $0x34] sm:$0xf]
      %v277 = vld [vmem:[%s241 + $0x38] sm:$0xf]
      %v278 = vld [vmem:[%s241 + $0x3c] sm:$0xf]
      %v295 = vunpack.c.l.b16 %v247
      %v296 = vunpack.c.l.b16 %v248
      %v297 = vunpack.c.l.b16 %v249
      %v298 = vunpack.c.l.b16 %v250
      %v299 = vunpack.c.l.b16 %v251
      %v300 = vunpack.c.l.b16 %v252
      %v301 = vunpack.c.l.b16 %v253
      %v302 = vunpack.c.l.b16 %v254
      %v303 = vunpack.c.l.b16 %v255
      %v304 = vunpack.c.l.b16 %v256
      %v305 = vunpack.c.l.b16 %v257
      %v306 = vunpack.c.l.b16 %v258
      %v307 = vunpack.c.l.b16 %v259
      %v308 = vunpack.c.l.b16 %v260
      %v309 = vunpack.c.l.b16 %v261
      %v310 = vunpack.c.l.b16 %v262
      %v311 = vpack.c.b16 %v296, %v295
      %v312 = vpack.c.b16 %v298, %v297
      %v313 = vpack.c.b16 %v300, %v299
      %v314 = vpack.c.b16 %v302, %v301
      %v315 = vpack.c.b16 %v304, %v303
      %v316 = vpack.c.b16 %v306, %v305
      %v317 = vpack.c.b16 %v308, %v307
      %v318 = vpack.c.b16 %v310, %v309
      %v343 = vunpack.c.l.b16 %v263
      %v344 = vunpack.c.l.b16 %v264
      %v345 = vunpack.c.l.b16 %v265
      %v346 = vunpack.c.l.b16 %v266
      %v347 = vunpack.c.l.b16 %v267
      %v348 = vunpack.c.l.b16 %v268
      %v349 = vunpack.c.l.b16 %v269
      %v350 = vunpack.c.l.b16 %v270
      %v351 = vunpack.c.l.b16 %v271
      %v352 = vunpack.c.l.b16 %v272
      %v353 = vunpack.c.l.b16 %v273
      %v354 = vunpack.c.l.b16 %v274
      %v355 = vunpack.c.l.b16 %v275
      %v356 = vunpack.c.l.b16 %v276
      %v357 = vunpack.c.l.b16 %v277
      %v358 = vunpack.c.l.b16 %v278
      %v359 = vpack.c.b16 %v344, %v343
      %v360 = vpack.c.b16 %v346, %v345
      %v361 = vpack.c.b16 %v348, %v347
      %v362 = vpack.c.b16 %v350, %v349
      %v363 = vpack.c.b16 %v352, %v351
      %v364 = vpack.c.b16 %v354, %v353
      %v365 = vpack.c.b16 %v356, %v355
      %v366 = vpack.c.b16 %v358, %v357
      %v375 = vld [vmem:[%s2] sm:$0xf]
      %v376 = vld [vmem:[%s2 + $0x4] sm:$0xf]
      %v377 = vld [vmem:[%s2 + $0x8] sm:$0xf]
      %v378 = vld [vmem:[%s2 + $0xc] sm:$0xf]
      %v379 = vld [vmem:[%s2 + $0x10] sm:$0xf]
      %v380 = vld [vmem:[%s2 + $0x14] sm:$0xf]
      %v381 = vld [vmem:[%s2 + $0x18] sm:$0xf]
      %v382 = vld [vmem:[%s2 + $0x1c] sm:$0xf]
      %v383 = vld [vmem:[%s2 + $0x20] sm:$0xf]
      %v384 = vld [vmem:[%s2 + $0x24] sm:$0xf]
      %v385 = vld [vmem:[%s2 + $0x28] sm:$0xf]
      %v386 = vld [vmem:[%s2 + $0x2c] sm:$0xf]
      %v387 = vld [vmem:[%s2 + $0x30] sm:$0xf]
      %v388 = vld [vmem:[%s2 + $0x34] sm:$0xf]
      %v389 = vld [vmem:[%s2 + $0x38] sm:$0xf]
      %v390 = vld [vmem:[%s2 + $0x3c] sm:$0xf]
      %v407 = vunpack.c.l.b16 %v375
      %v408 = vunpack.c.l.b16 %v376
      %v409 = vunpack.c.l.b16 %v377
      %v410 = vunpack.c.l.b16 %v378
      %v411 = vunpack.c.l.b16 %v379
      %v412 = vunpack.c.l.b16 %v380
      %v413 = vunpack.c.l.b16 %v381
      %v414 = vunpack.c.l.b16 %v382
      %v415 = vunpack.c.l.b16 %v383
      %v416 = vunpack.c.l.b16 %v384
      %v417 = vunpack.c.l.b16 %v385
      %v418 = vunpack.c.l.b16 %v386
      %v419 = vunpack.c.l.b16 %v387
      %v420 = vunpack.c.l.b16 %v388
      %v421 = vunpack.c.l.b16 %v389
      %v422 = vunpack.c.l.b16 %v390
      %v423 = vpack.c.b16 %v408, %v407
      %v424 = vpack.c.b16 %v410, %v409
      %v425 = vpack.c.b16 %v412, %v411
      %v426 = vpack.c.b16 %v414, %v413
      %v427 = vpack.c.b16 %v416, %v415
      %v428 = vpack.c.b16 %v418, %v417
      %v429 = vpack.c.b16 %v420, %v419
      %v430 = vpack.c.b16 %v422, %v421
      %439 = vmatpush.bf16.msra.mxu0 %v430
      %440 = vmatpush.bf16.msra.mxu0 %v429
      %441 = vmatpush.bf16.msra.mxu0 %v428
      %442 = vmatpush.bf16.msra.mxu0 %v427
      %443 = vmatpush.bf16.msra.mxu0 %v426
      %444 = vmatpush.bf16.msra.mxu0 %v425
      %445 = vmatpush.bf16.msra.mxu0 %v424
      %446 = vmatpush.bf16.msra.mxu0 %v423
      %447 = vmatmul.bf16.gmra.mxu0 %v311
      %v448 = vpop.f32.mrf.mxu0
      %v449 = vadd.f32 0.0, %v448
      %v450 = vpop.f32.mrf.mxu0
      %v451 = vadd.f32 0.0, %v450
      %452 = vmatmul.bf16.gmra.mxu0 %v312
      %v453 = vpop.f32.mrf.mxu0
      %v454 = vadd.f32 0.0, %v453
      %v455 = vpop.f32.mrf.mxu0
      %v456 = vadd.f32 0.0, %v455
      %457 = vmatmul.bf16.gmra.mxu0 %v313
      %v458 = vpop.f32.mrf.mxu0
      %v459 = vadd.f32 0.0, %v458
      %v460 = vpop.f32.mrf.mxu0
      %v461 = vadd.f32 0.0, %v460
      %462 = vmatmul.bf16.gmra.mxu0 %v314
      %v463 = vpop.f32.mrf.mxu0
      %v464 = vadd.f32 0.0, %v463
      %v465 = vpop.f32.mrf.mxu0
      %v466 = vadd.f32 0.0, %v465
      %467 = vmatmul.bf16.gmra.mxu0 %v315
      %v468 = vpop.f32.mrf.mxu0
      %v469 = vadd.f32 0.0, %v468
      %v470 = vpop.f32.mrf.mxu0
      %v471 = vadd.f32 0.0, %v470
      %472 = vmatmul.bf16.gmra.mxu0 %v316
      %v473 = vpop.f32.mrf.mxu0
      %v474 = vadd.f32 0.0, %v473
      %v475 = vpop.f32.mrf.mxu0
      %v476 = vadd.f32 0.0, %v475
      %477 = vmatmul.bf16.gmra.mxu0 %v317
      %v478 = vpop.f32.mrf.mxu0
      %v479 = vadd.f32 0.0, %v478
      %v480 = vpop.f32.mrf.mxu0
      %v481 = vadd.f32 0.0, %v480
      %482 = vmatmul.bf16.gmra.mxu0 %v318
      %v483 = vpop.f32.mrf.mxu0
      %v484 = vadd.f32 0.0, %v483
      %v485 = vpop.f32.mrf.mxu0
      %v486 = vadd.f32 0.0, %v485
      %487 = vmatmul.bf16.gmra.mxu0 %v359
      %v488 = vpop.f32.mrf.mxu0
      %v489 = vadd.f32 0.0, %v488
      %v490 = vpop.f32.mrf.mxu0
      %v491 = vadd.f32 0.0, %v490
      %492 = vmatmul.bf16.gmra.mxu0 %v360
      %v493 = vpop.f32.mrf.mxu0
      %v494 = vadd.f32 0.0, %v493
      %v495 = vpop.f32.mrf.mxu0
      %v496 = vadd.f32 0.0, %v495
      %497 = vmatmul.bf16.gmra.mxu0 %v361
      %v498 = vpop.f32.mrf.mxu0
      %v499 = vadd.f32 0.0, %v498
      %v500 = vpop.f32.mrf.mxu0
      %v501 = vadd.f32 0.0, %v500
      %502 = vmatmul.bf16.gmra.mxu0 %v362
      %v503 = vpop.f32.mrf.mxu0
      %v504 = vadd.f32 0.0, %v503
      %v505 = vpop.f32.mrf.mxu0
      %v506 = vadd.f32 0.0, %v505
      %507 = vmatmul.bf16.gmra.mxu0 %v363
      %v508 = vpop.f32.mrf.mxu0
      %v509 = vadd.f32 0.0, %v508
      %v510 = vpop.f32.mrf.mxu0
      %v511 = vadd.f32 0.0, %v510
      %512 = vmatmul.bf16.gmra.mxu0 %v364
      %v513 = vpop.f32.mrf.mxu0
      %v514 = vadd.f32 0.0, %v513
      %v515 = vpop.f32.mrf.mxu0
      %v516 = vadd.f32 0.0, %v515
      %517 = vmatmul.bf16.gmra.mxu0 %v365
      %v518 = vpop.f32.mrf.mxu0
      %v519 = vadd.f32 0.0, %v518
      %v520 = vpop.f32.mrf.mxu0
      %v521 = vadd.f32 0.0, %v520
      %522 = vmatmul.bf16.gmra.mxu0 %v366
      %v523 = vpop.f32.mrf.mxu0
      %v524 = vadd.f32 0.0, %v523
      %v525 = vpop.f32.mrf.mxu0
      %v526 = vadd.f32 0.0, %v525
      %527 = vdwg.mxu0
      %v528 = vld [vmem:[%s3] sm:$0xf]
      %v529 = vld [vmem:[%s3 + $0x4] sm:$0xf]
      %v530 = vld [vmem:[%s3 + $0x8] sm:$0xf]
      %v531 = vld [vmem:[%s3 + $0xc] sm:$0xf]
      %v532 = vld [vmem:[%s3 + $0x10] sm:$0xf]
      %v533 = vld [vmem:[%s3 + $0x14] sm:$0xf]
      %v534 = vld [vmem:[%s3 + $0x18] sm:$0xf]
      %v535 = vld [vmem:[%s3 + $0x1c] sm:$0xf]
      %v536 = vld [vmem:[%s3 + $0x20] sm:$0xf]
      %v537 = vld [vmem:[%s3 + $0x24] sm:$0xf]
      %v538 = vld [vmem:[%s3 + $0x28] sm:$0xf]
      %v539 = vld [vmem:[%s3 + $0x2c] sm:$0xf]
      %v540 = vld [vmem:[%s3 + $0x30] sm:$0xf]
      %v541 = vld [vmem:[%s3 + $0x34] sm:$0xf]
      %v542 = vld [vmem:[%s3 + $0x38] sm:$0xf]
      %v543 = vld [vmem:[%s3 + $0x3c] sm:$0xf]
      %v560 = vunpack.c.l.b16 %v528
      %v561 = vunpack.c.l.b16 %v529
      %v562 = vunpack.c.l.b16 %v530
      %v563 = vunpack.c.l.b16 %v531
      %v564 = vunpack.c.l.b16 %v532
      %v565 = vunpack.c.l.b16 %v533
      %v566 = vunpack.c.l.b16 %v534
      %v567 = vunpack.c.l.b16 %v535
      %v568 = vunpack.c.l.b16 %v536
      %v569 = vunpack.c.l.b16 %v537
      %v570 = vunpack.c.l.b16 %v538
      %v571 = vunpack.c.l.b16 %v539
      %v572 = vunpack.c.l.b16 %v540
      %v573 = vunpack.c.l.b16 %v541
      %v574 = vunpack.c.l.b16 %v542
      %v575 = vunpack.c.l.b16 %v543
      %v576 = vpack.c.b16 %v561, %v560
      %v577 = vpack.c.b16 %v563, %v562
      %v578 = vpack.c.b16 %v565, %v564
      %v579 = vpack.c.b16 %v567, %v566
      %v580 = vpack.c.b16 %v569, %v568
      %v581 = vpack.c.b16 %v571, %v570
      %v582 = vpack.c.b16 %v573, %v572
      %v583 = vpack.c.b16 %v575, %v574
      %592 = vmatpush.bf16.msra.mxu0 %v583
      %593 = vmatpush.bf16.msra.mxu0 %v582
      %594 = vmatpush.bf16.msra.mxu0 %v581
      %595 = vmatpush.bf16.msra.mxu0 %v580
      %596 = vmatpush.bf16.msra.mxu0 %v579
      %597 = vmatpush.bf16.msra.mxu0 %v578
      %598 = vmatpush.bf16.msra.mxu0 %v577
      %599 = vmatpush.bf16.msra.mxu0 %v576
      %600 = vmatmul.bf16.gmra.mxu0 %v311
      %v601 = vpop.f32.mrf.mxu0
      %v602 = vadd.f32 0.0, %v601
      %v603 = vpop.f32.mrf.mxu0
      %v604 = vadd.f32 0.0, %v603
      %605 = vmatmul.bf16.gmra.mxu0 %v312
      %v606 = vpop.f32.mrf.mxu0
      %v607 = vadd.f32 0.0, %v606
      %v608 = vpop.f32.mrf.mxu0
      %v609 = vadd.f32 0.0, %v608
      %610 = vmatmul.bf16.gmra.mxu0 %v313
      %v611 = vpop.f32.mrf.mxu0
      %v612 = vadd.f32 0.0, %v611
      %v613 = vpop.f32.mrf.mxu0
      %v614 = vadd.f32 0.0, %v613
      %615 = vmatmul.bf16.gmra.mxu0 %v314
      %v616 = vpop.f32.mrf.mxu0
      %v617 = vadd.f32 0.0, %v616
      %v618 = vpop.f32.mrf.mxu0
      %v619 = vadd.f32 0.0, %v618
      %620 = vmatmul.bf16.gmra.mxu0 %v315
      %v621 = vpop.f32.mrf.mxu0
      %v622 = vadd.f32 0.0, %v621
      %v623 = vpop.f32.mrf.mxu0
      %v624 = vadd.f32 0.0, %v623
      %625 = vmatmul.bf16.gmra.mxu0 %v316
      %v626 = vpop.f32.mrf.mxu0
      %v627 = vadd.f32 0.0, %v626
      %v628 = vpop.f32.mrf.mxu0
      %v629 = vadd.f32 0.0, %v628
      %630 = vmatmul.bf16.gmra.mxu0 %v317
      %v631 = vpop.f32.mrf.mxu0
      %v632 = vadd.f32 0.0, %v631
      %v633 = vpop.f32.mrf.mxu0
      %v634 = vadd.f32 0.0, %v633
      %635 = vmatmul.bf16.gmra.mxu0 %v318
      %v636 = vpop.f32.mrf.mxu0
      %v637 = vadd.f32 0.0, %v636
      %v638 = vpop.f32.mrf.mxu0
      %v639 = vadd.f32 0.0, %v638
      %640 = vmatmul.bf16.gmra.mxu0 %v359
      %v641 = vpop.f32.mrf.mxu0
      %v642 = vadd.f32 0.0, %v641
      %v643 = vpop.f32.mrf.mxu0
      %v644 = vadd.f32 0.0, %v643
      %645 = vmatmul.bf16.gmra.mxu0 %v360
      %v646 = vpop.f32.mrf.mxu0
      %v647 = vadd.f32 0.0, %v646
      %v648 = vpop.f32.mrf.mxu0
      %v649 = vadd.f32 0.0, %v648
      %650 = vmatmul.bf16.gmra.mxu0 %v361
      %v651 = vpop.f32.mrf.mxu0
      %v652 = vadd.f32 0.0, %v651
      %v653 = vpop.f32.mrf.mxu0
      %v654 = vadd.f32 0.0, %v653
      %655 = vmatmul.bf16.gmra.mxu0 %v362
      %v656 = vpop.f32.mrf.mxu0
      %v657 = vadd.f32 0.0, %v656
      %v658 = vpop.f32.mrf.mxu0
      %v659 = vadd.f32 0.0, %v658
      %660 = vmatmul.bf16.gmra.mxu0 %v363
      %v661 = vpop.f32.mrf.mxu0
      %v662 = vadd.f32 0.0, %v661
      %v663 = vpop.f32.mrf.mxu0
      %v664 = vadd.f32 0.0, %v663
      %665 = vmatmul.bf16.gmra.mxu0 %v364
      %v666 = vpop.f32.mrf.mxu0
      %v667 = vadd.f32 0.0, %v666
      %v668 = vpop.f32.mrf.mxu0
      %v669 = vadd.f32 0.0, %v668
      %670 = vmatmul.bf16.gmra.mxu0 %v365
      %v671 = vpop.f32.mrf.mxu0
      %v672 = vadd.f32 0.0, %v671
      %v673 = vpop.f32.mrf.mxu0
      %v674 = vadd.f32 0.0, %v673
      %675 = vmatmul.bf16.gmra.mxu0 %v366
      %v676 = vpop.f32.mrf.mxu0
      %v677 = vadd.f32 0.0, %v676
      %v678 = vpop.f32.mrf.mxu0
      %v679 = vadd.f32 0.0, %v678
      %680 = vdwg.mxu0
      %v681 = vmul.f32 %v449, %v449
      %v682 = vmul.f32 %v451, %v451
      %v683 = vmul.f32 %v454, %v454
      %v684 = vmul.f32 %v456, %v456
      %v685 = vmul.f32 %v459, %v459
      %v686 = vmul.f32 %v461, %v461
      %v687 = vmul.f32 %v464, %v464
      %v688 = vmul.f32 %v466, %v466
      %v689 = vmul.f32 %v469, %v469
      %v690 = vmul.f32 %v471, %v471
      %v691 = vmul.f32 %v474, %v474
      %v692 = vmul.f32 %v476, %v476
      %v693 = vmul.f32 %v479, %v479
      %v694 = vmul.f32 %v481, %v481
      %v695 = vmul.f32 %v484, %v484
      %v696 = vmul.f32 %v486, %v486
      %v697 = vmul.f32 %v489, %v489
      %v698 = vmul.f32 %v491, %v491
      %v699 = vmul.f32 %v494, %v494
      %v700 = vmul.f32 %v496, %v496
      %v701 = vmul.f32 %v499, %v499
      %v702 = vmul.f32 %v501, %v501
      %v703 = vmul.f32 %v504, %v504
      %v704 = vmul.f32 %v506, %v506
      %v705 = vmul.f32 %v509, %v509
      %v706 = vmul.f32 %v511, %v511
      %v707 = vmul.f32 %v514, %v514
      %v708 = vmul.f32 %v516, %v516
      %v709 = vmul.f32 %v519, %v519
      %v710 = vmul.f32 %v521, %v521
      %v711 = vmul.f32 %v524, %v524
      %v712 = vmul.f32 %v526, %v526
      %v713 = vmul.f32 %v602, %v602
      %v714 = vmul.f32 %v604, %v604
      %v715 = vmul.f32 %v607, %v607
      %v716 = vmul.f32 %v609, %v609
      %v717 = vmul.f32 %v612, %v612
      %v718 = vmul.f32 %v614, %v614
      %v719 = vmul.f32 %v617, %v617
      %v720 = vmul.f32 %v619, %v619
      %v721 = vmul.f32 %v622, %v622
      %v722 = vmul.f32 %v624, %v624
      %v723 = vmul.f32 %v627, %v627
      %v724 = vmul.f32 %v629, %v629
      %v725 = vmul.f32 %v632, %v632
      %v726 = vmul.f32 %v634, %v634
      %v727 = vmul.f32 %v637, %v637
      %v728 = vmul.f32 %v639, %v639
      %v729 = vmul.f32 %v642, %v642
      %v730 = vmul.f32 %v644, %v644
      %v731 = vmul.f32 %v647, %v647
      %v732 = vmul.f32 %v649, %v649
      %v733 = vmul.f32 %v652, %v652
      %v734 = vmul.f32 %v654, %v654
      %v735 = vmul.f32 %v657, %v657
      %v736 = vmul.f32 %v659, %v659
      %v737 = vmul.f32 %v662, %v662
      %v738 = vmul.f32 %v664, %v664
      %v739 = vmul.f32 %v667, %v667
      %v740 = vmul.f32 %v669, %v669
      %v741 = vmul.f32 %v672, %v672
      %v742 = vmul.f32 %v674, %v674
      %v743 = vmul.f32 %v677, %v677
      %v744 = vmul.f32 %v679, %v679
      %v745 = vadd.f32 %v681, %v713
      %v746 = vadd.f32 %v682, %v714
      %v747 = vadd.f32 %v683, %v715
      %v748 = vadd.f32 %v684, %v716
      %v749 = vadd.f32 %v685, %v717
      %v750 = vadd.f32 %v686, %v718
      %v751 = vadd.f32 %v687, %v719
      %v752 = vadd.f32 %v688, %v720
      %v753 = vadd.f32 %v689, %v721
      %v754 = vadd.f32 %v690, %v722
      %v755 = vadd.f32 %v691, %v723
      %v756 = vadd.f32 %v692, %v724
      %v757 = vadd.f32 %v693, %v725
      %v758 = vadd.f32 %v694, %v726
      %v759 = vadd.f32 %v695, %v727
      %v760 = vadd.f32 %v696, %v728
      %v761 = vadd.f32 %v697, %v729
      %v762 = vadd.f32 %v698, %v730
      %v763 = vadd.f32 %v699, %v731
      %v764 = vadd.f32 %v700, %v732
      %v765 = vadd.f32 %v701, %v733
      %v766 = vadd.f32 %v702, %v734
      %v767 = vadd.f32 %v703, %v735
      %v768 = vadd.f32 %v704, %v736
      %v769 = vadd.f32 %v705, %v737
      %v770 = vadd.f32 %v706, %v738
      %v771 = vadd.f32 %v707, %v739
      %v772 = vadd.f32 %v708, %v740
      %v773 = vadd.f32 %v709, %v741
      %v774 = vadd.f32 %v710, %v742
      %v775 = vadd.f32 %v711, %v743
      %v776 = vadd.f32 %v712, %v744
      %v777 = vrsqrt.pop %v745
      %v778 = vmul.f32 %v777, %v745
      %v779 = vmul.f32 %v778, %v777
      %v780 = vmul.f32 0.5, %v779
      %v781 = vsub.f32 1.5, %v780
      %v782 = vmul.f32 %v777, %v781
      %v783 = vmul.f32 %v745, %v782
      %vm784 = vcmp.eq.f32.partialorder %v745, inf
      %v785 = vsel %vm784, %v745, %v783
      %vm786 = vcmp.eq.f32.partialorder %v745, 0.0
      %v787 = vand.u32 %v745, 2147483648
      %v788 = vsel %vm786, %v787, %v785
      %v789 = vrsqrt.pop %v746
      %v790 = vmul.f32 %v789, %v746
      %v791 = vmul.f32 %v790, %v789
      %v792 = vmul.f32 0.5, %v791
      %v793 = vsub.f32 1.5, %v792
      %v794 = vmul.f32 %v789, %v793
      %v795 = vmul.f32 %v746, %v794
      %vm796 = vcmp.eq.f32.partialorder %v746, inf
      %v797 = vsel %vm796, %v746, %v795
      %vm798 = vcmp.eq.f32.partialorder %v746, 0.0
      %v799 = vand.u32 %v746, 2147483648
      %v800 = vsel %vm798, %v799, %v797
      %v801 = vrsqrt.pop %v747
      %v802 = vmul.f32 %v801, %v747
      %v803 = vmul.f32 %v802, %v801
      %v804 = vmul.f32 0.5, %v803
      %v805 = vsub.f32 1.5, %v804
      %v806 = vmul.f32 %v801, %v805
      %v807 = vmul.f32 %v747, %v806
      %vm808 = vcmp.eq.f32.partialorder %v747, inf
      %v809 = vsel %vm808, %v747, %v807
      %vm810 = vcmp.eq.f32.partialorder %v747, 0.0
      %v811 = vand.u32 %v747, 2147483648
      %v812 = vsel %vm810, %v811, %v809
      %v813 = vrsqrt.pop %v748
      %v814 = vmul.f32 %v813, %v748
      %v815 = vmul.f32 %v814, %v813
      %v816 = vmul.f32 0.5, %v815
      %v817 = vsub.f32 1.5, %v816
      %v818 = vmul.f32 %v813, %v817
      %v819 = vmul.f32 %v748, %v818
      %vm820 = vcmp.eq.f32.partialorder %v748, inf
      %v821 = vsel %vm820, %v748, %v819
      %vm822 = vcmp.eq.f32.partialorder %v748, 0.0
      %v823 = vand.u32 %v748, 2147483648
      %v824 = vsel %vm822, %v823, %v821
      %v825 = vrsqrt.pop %v749
      %v826 = vmul.f32 %v825, %v749
      %v827 = vmul.f32 %v826, %v825
      %v828 = vmul.f32 0.5, %v827
      %v829 = vsub.f32 1.5, %v828
      %v830 = vmul.f32 %v825, %v829
      %v831 = vmul.f32 %v749, %v830
      %vm832 = vcmp.eq.f32.partialorder %v749, inf
      %v833 = vsel %vm832, %v749, %v831
      %vm834 = vcmp.eq.f32.partialorder %v749, 0.0
      %v835 = vand.u32 %v749, 2147483648
      %v836 = vsel %vm834, %v835, %v833
      %v837 = vrsqrt.pop %v750
      %v838 = vmul.f32 %v837, %v750
      %v839 = vmul.f32 %v838, %v837
      %v840 = vmul.f32 0.5, %v839
      %v841 = vsub.f32 1.5, %v840
      %v842 = vmul.f32 %v837, %v841
      %v843 = vmul.f32 %v750, %v842
      %vm844 = vcmp.eq.f32.partialorder %v750, inf
      %v845 = vsel %vm844, %v750, %v843
      %vm846 = vcmp.eq.f32.partialorder %v750, 0.0
      %v847 = vand.u32 %v750, 2147483648
      %v848 = vsel %vm846, %v847, %v845
      %v849 = vrsqrt.pop %v751
      %v850 = vmul.f32 %v849, %v751
      %v851 = vmul.f32 %v850, %v849
      %v852 = vmul.f32 0.5, %v851
      %v853 = vsub.f32 1.5, %v852
      %v854 = vmul.f32 %v849, %v853
      %v855 = vmul.f32 %v751, %v854
      %vm856 = vcmp.eq.f32.partialorder %v751, inf
      %v857 = vsel %vm856, %v751, %v855
      %vm858 = vcmp.eq.f32.partialorder %v751, 0.0
      %v859 = vand.u32 %v751, 2147483648
      %v860 = vsel %vm858, %v859, %v857
      %v861 = vrsqrt.pop %v752
      %v862 = vmul.f32 %v861, %v752
      %v863 = vmul.f32 %v862, %v861
      %v864 = vmul.f32 0.5, %v863
      %v865 = vsub.f32 1.5, %v864
      %v866 = vmul.f32 %v861, %v865
      %v867 = vmul.f32 %v752, %v866
      %vm868 = vcmp.eq.f32.partialorder %v752, inf
      %v869 = vsel %vm868, %v752, %v867
      %vm870 = vcmp.eq.f32.partialorder %v752, 0.0
      %v871 = vand.u32 %v752, 2147483648
      %v872 = vsel %vm870, %v871, %v869
      %v873 = vrsqrt.pop %v753
      %v874 = vmul.f32 %v873, %v753
      %v875 = vmul.f32 %v874, %v873
      %v876 = vmul.f32 0.5, %v875
      %v877 = vsub.f32 1.5, %v876
      %v878 = vmul.f32 %v873, %v877
      %v879 = vmul.f32 %v753, %v878
      %vm880 = vcmp.eq.f32.partialorder %v753, inf
      %v881 = vsel %vm880, %v753, %v879
      %vm882 = vcmp.eq.f32.partialorder %v753, 0.0
      %v883 = vand.u32 %v753, 2147483648
      %v884 = vsel %vm882, %v883, %v881
      %v885 = vrsqrt.pop %v754
      %v886 = vmul.f32 %v885, %v754
      %v887 = vmul.f32 %v886, %v885
      %v888 = vmul.f32 0.5, %v887
      %v889 = vsub.f32 1.5, %v888
      %v890 = vmul.f32 %v885, %v889
      %v891 = vmul.f32 %v754, %v890
      %vm892 = vcmp.eq.f32.partialorder %v754, inf
      %v893 = vsel %vm892, %v754, %v891
      %vm894 = vcmp.eq.f32.partialorder %v754, 0.0
      %v895 = vand.u32 %v754, 2147483648
      %v896 = vsel %vm894, %v895, %v893
      %v897 = vrsqrt.pop %v755
      %v898 = vmul.f32 %v897, %v755
      %v899 = vmul.f32 %v898, %v897
      %v900 = vmul.f32 0.5, %v899
      %v901 = vsub.f32 1.5, %v900
      %v902 = vmul.f32 %v897, %v901
      %v903 = vmul.f32 %v755, %v902
      %vm904 = vcmp.eq.f32.partialorder %v755, inf
      %v905 = vsel %vm904, %v755, %v903
      %vm906 = vcmp.eq.f32.partialorder %v755, 0.0
      %v907 = vand.u32 %v755, 2147483648
      %v908 = vsel %vm906, %v907, %v905
      %v909 = vrsqrt.pop %v756
      %v910 = vmul.f32 %v909, %v756
      %v911 = vmul.f32 %v910, %v909
      %v912 = vmul.f32 0.5, %v911
      %v913 = vsub.f32 1.5, %v912
      %v914 = vmul.f32 %v909, %v913
      %v915 = vmul.f32 %v756, %v914
      %vm916 = vcmp.eq.f32.partialorder %v756, inf
      %v917 = vsel %vm916, %v756, %v915
      %vm918 = vcmp.eq.f32.partialorder %v756, 0.0
      %v919 = vand.u32 %v756, 2147483648
      %v920 = vsel %vm918, %v919, %v917
      %v921 = vrsqrt.pop %v757
      %v922 = vmul.f32 %v921, %v757
      %v923 = vmul.f32 %v922, %v921
      %v924 = vmul.f32 0.5, %v923
      %v925 = vsub.f32 1.5, %v924
      %v926 = vmul.f32 %v921, %v925
      %v927 = vmul.f32 %v757, %v926
      %vm928 = vcmp.eq.f32.partialorder %v757, inf
      %v929 = vsel %vm928, %v757, %v927
      %vm930 = vcmp.eq.f32.partialorder %v757, 0.0
      %v931 = vand.u32 %v757, 2147483648
      %v932 = vsel %vm930, %v931, %v929
      %v933 = vrsqrt.pop %v758
      %v934 = vmul.f32 %v933, %v758
      %v935 = vmul.f32 %v934, %v933
      %v936 = vmul.f32 0.5, %v935
      %v937 = vsub.f32 1.5, %v936
      %v938 = vmul.f32 %v933, %v937
      %v939 = vmul.f32 %v758, %v938
      %vm940 = vcmp.eq.f32.partialorder %v758, inf
      %v941 = vsel %vm940, %v758, %v939
      %vm942 = vcmp.eq.f32.partialorder %v758, 0.0
      %v943 = vand.u32 %v758, 2147483648
      %v944 = vsel %vm942, %v943, %v941
      %v945 = vrsqrt.pop %v759
      %v946 = vmul.f32 %v945, %v759
      %v947 = vmul.f32 %v946, %v945
      %v948 = vmul.f32 0.5, %v947
      %v949 = vsub.f32 1.5, %v948
      %v950 = vmul.f32 %v945, %v949
      %v951 = vmul.f32 %v759, %v950
      %vm952 = vcmp.eq.f32.partialorder %v759, inf
      %v953 = vsel %vm952, %v759, %v951
      %vm954 = vcmp.eq.f32.partialorder %v759, 0.0
      %v955 = vand.u32 %v759, 2147483648
      %v956 = vsel %vm954, %v955, %v953
      %v957 = vrsqrt.pop %v760
      %v958 = vmul.f32 %v957, %v760
      %v959 = vmul.f32 %v958, %v957
      %v960 = vmul.f32 0.5, %v959
      %v961 = vsub.f32 1.5, %v960
      %v962 = vmul.f32 %v957, %v961
      %v963 = vmul.f32 %v760, %v962
      %vm964 = vcmp.eq.f32.partialorder %v760, inf
      %v965 = vsel %vm964, %v760, %v963
      %vm966 = vcmp.eq.f32.partialorder %v760, 0.0
      %v967 = vand.u32 %v760, 2147483648
      %v968 = vsel %vm966, %v967, %v965
      %v969 = vrsqrt.pop %v761
      %v970 = vmul.f32 %v969, %v761
      %v971 = vmul.f32 %v970, %v969
      %v972 = vmul.f32 0.5, %v971
      %v973 = vsub.f32 1.5, %v972
      %v974 = vmul.f32 %v969, %v973
      %v975 = vmul.f32 %v761, %v974
      %vm976 = vcmp.eq.f32.partialorder %v761, inf
      %v977 = vsel %vm976, %v761, %v975
      %vm978 = vcmp.eq.f32.partialorder %v761, 0.0
      %v979 = vand.u32 %v761, 2147483648
      %v980 = vsel %vm978, %v979, %v977
      %v981 = vrsqrt.pop %v762
      %v982 = vmul.f32 %v981, %v762
      %v983 = vmul.f32 %v982, %v981
      %v984 = vmul.f32 0.5, %v983
      %v985 = vsub.f32 1.5, %v984
      %v986 = vmul.f32 %v981, %v985
      %v987 = vmul.f32 %v762, %v986
      %vm988 = vcmp.eq.f32.partialorder %v762, inf
      %v989 = vsel %vm988, %v762, %v987
      %vm990 = vcmp.eq.f32.partialorder %v762, 0.0
      %v991 = vand.u32 %v762, 2147483648
      %v992 = vsel %vm990, %v991, %v989
      %v993 = vrsqrt.pop %v763
      %v994 = vmul.f32 %v993, %v763
      %v995 = vmul.f32 %v994, %v993
      %v996 = vmul.f32 0.5, %v995
      %v997 = vsub.f32 1.5, %v996
      %v998 = vmul.f32 %v993, %v997
      %v999 = vmul.f32 %v763, %v998
      %vm1000 = vcmp.eq.f32.partialorder %v763, inf
      %v1001 = vsel %vm1000, %v763, %v999
      %vm1002 = vcmp.eq.f32.partialorder %v763, 0.0
      %v1003 = vand.u32 %v763, 2147483648
      %v1004 = vsel %vm1002, %v1003, %v1001
      %v1005 = vrsqrt.pop %v764
      %v1006 = vmul.f32 %v1005, %v764
      %v1007 = vmul.f32 %v1006, %v1005
      %v1008 = vmul.f32 0.5, %v1007
      %v1009 = vsub.f32 1.5, %v1008
      %v1010 = vmul.f32 %v1005, %v1009
      %v1011 = vmul.f32 %v764, %v1010
      %vm1012 = vcmp.eq.f32.partialorder %v764, inf
      %v1013 = vsel %vm1012, %v764, %v1011
      %vm1014 = vcmp.eq.f32.partialorder %v764, 0.0
      %v1015 = vand.u32 %v764, 2147483648
      %v1016 = vsel %vm1014, %v1015, %v1013
      %v1017 = vrsqrt.pop %v765
      %v1018 = vmul.f32 %v1017, %v765
      %v1019 = vmul.f32 %v1018, %v1017
      %v1020 = vmul.f32 0.5, %v1019
      %v1021 = vsub.f32 1.5, %v1020
      %v1022 = vmul.f32 %v1017, %v1021
      %v1023 = vmul.f32 %v765, %v1022
      %vm1024 = vcmp.eq.f32.partialorder %v765, inf
      %v1025 = vsel %vm1024, %v765, %v1023
      %vm1026 = vcmp.eq.f32.partialorder %v765, 0.0
      %v1027 = vand.u32 %v765, 2147483648
      %v1028 = vsel %vm1026, %v1027, %v1025
      %v1029 = vrsqrt.pop %v766
      %v1030 = vmul.f32 %v1029, %v766
      %v1031 = vmul.f32 %v1030, %v1029
      %v1032 = vmul.f32 0.5, %v1031
      %v1033 = vsub.f32 1.5, %v1032
      %v1034 = vmul.f32 %v1029, %v1033
      %v1035 = vmul.f32 %v766, %v1034
      %vm1036 = vcmp.eq.f32.partialorder %v766, inf
      %v1037 = vsel %vm1036, %v766, %v1035
      %vm1038 = vcmp.eq.f32.partialorder %v766, 0.0
      %v1039 = vand.u32 %v766, 2147483648
      %v1040 = vsel %vm1038, %v1039, %v1037
      %v1041 = vrsqrt.pop %v767
      %v1042 = vmul.f32 %v1041, %v767
      %v1043 = vmul.f32 %v1042, %v1041
      %v1044 = vmul.f32 0.5, %v1043
      %v1045 = vsub.f32 1.5, %v1044
      %v1046 = vmul.f32 %v1041, %v1045
      %v1047 = vmul.f32 %v767, %v1046
      %vm1048 = vcmp.eq.f32.partialorder %v767, inf
      %v1049 = vsel %vm1048, %v767, %v1047
      %vm1050 = vcmp.eq.f32.partialorder %v767, 0.0
      %v1051 = vand.u32 %v767, 2147483648
      %v1052 = vsel %vm1050, %v1051, %v1049
      %v1053 = vrsqrt.pop %v768
      %v1054 = vmul.f32 %v1053, %v768
      %v1055 = vmul.f32 %v1054, %v1053
      %v1056 = vmul.f32 0.5, %v1055
      %v1057 = vsub.f32 1.5, %v1056
      %v1058 = vmul.f32 %v1053, %v1057
      %v1059 = vmul.f32 %v768, %v1058
      %vm1060 = vcmp.eq.f32.partialorder %v768, inf
      %v1061 = vsel %vm1060, %v768, %v1059
      %vm1062 = vcmp.eq.f32.partialorder %v768, 0.0
      %v1063 = vand.u32 %v768, 2147483648
      %v1064 = vsel %vm1062, %v1063, %v1061
      %v1065 = vrsqrt.pop %v769
      %v1066 = vmul.f32 %v1065, %v769
      %v1067 = vmul.f32 %v1066, %v1065
      %v1068 = vmul.f32 0.5, %v1067
      %v1069 = vsub.f32 1.5, %v1068
      %v1070 = vmul.f32 %v1065, %v1069
      %v1071 = vmul.f32 %v769, %v1070
      %vm1072 = vcmp.eq.f32.partialorder %v769, inf
      %v1073 = vsel %vm1072, %v769, %v1071
      %vm1074 = vcmp.eq.f32.partialorder %v769, 0.0
      %v1075 = vand.u32 %v769, 2147483648
      %v1076 = vsel %vm1074, %v1075, %v1073
      %v1077 = vrsqrt.pop %v770
      %v1078 = vmul.f32 %v1077, %v770
      %v1079 = vmul.f32 %v1078, %v1077
      %v1080 = vmul.f32 0.5, %v1079
      %v1081 = vsub.f32 1.5, %v1080
      %v1082 = vmul.f32 %v1077, %v1081
      %v1083 = vmul.f32 %v770, %v1082
      %vm1084 = vcmp.eq.f32.partialorder %v770, inf
      %v1085 = vsel %vm1084, %v770, %v1083
      %vm1086 = vcmp.eq.f32.partialorder %v770, 0.0
      %v1087 = vand.u32 %v770, 2147483648
      %v1088 = vsel %vm1086, %v1087, %v1085
      %v1089 = vrsqrt.pop %v771
      %v1090 = vmul.f32 %v1089, %v771
      %v1091 = vmul.f32 %v1090, %v1089
      %v1092 = vmul.f32 0.5, %v1091
      %v1093 = vsub.f32 1.5, %v1092
      %v1094 = vmul.f32 %v1089, %v1093
      %v1095 = vmul.f32 %v771, %v1094
      %vm1096 = vcmp.eq.f32.partialorder %v771, inf
      %v1097 = vsel %vm1096, %v771, %v1095
      %vm1098 = vcmp.eq.f32.partialorder %v771, 0.0
      %v1099 = vand.u32 %v771, 2147483648
      %v1100 = vsel %vm1098, %v1099, %v1097
      %v1101 = vrsqrt.pop %v772
      %v1102 = vmul.f32 %v1101, %v772
      %v1103 = vmul.f32 %v1102, %v1101
      %v1104 = vmul.f32 0.5, %v1103
      %v1105 = vsub.f32 1.5, %v1104
      %v1106 = vmul.f32 %v1101, %v1105
      %v1107 = vmul.f32 %v772, %v1106
      %vm1108 = vcmp.eq.f32.partialorder %v772, inf
      %v1109 = vsel %vm1108, %v772, %v1107
      %vm1110 = vcmp.eq.f32.partialorder %v772, 0.0
      %v1111 = vand.u32 %v772, 2147483648
      %v1112 = vsel %vm1110, %v1111, %v1109
      %v1113 = vrsqrt.pop %v773
      %v1114 = vmul.f32 %v1113, %v773
      %v1115 = vmul.f32 %v1114, %v1113
      %v1116 = vmul.f32 0.5, %v1115
      %v1117 = vsub.f32 1.5, %v1116
      %v1118 = vmul.f32 %v1113, %v1117
      %v1119 = vmul.f32 %v773, %v1118
      %vm1120 = vcmp.eq.f32.partialorder %v773, inf
      %v1121 = vsel %vm1120, %v773, %v1119
      %vm1122 = vcmp.eq.f32.partialorder %v773, 0.0
      %v1123 = vand.u32 %v773, 2147483648
      %v1124 = vsel %vm1122, %v1123, %v1121
      %v1125 = vrsqrt.pop %v774
      %v1126 = vmul.f32 %v1125, %v774
      %v1127 = vmul.f32 %v1126, %v1125
      %v1128 = vmul.f32 0.5, %v1127
      %v1129 = vsub.f32 1.5, %v1128
      %v1130 = vmul.f32 %v1125, %v1129
      %v1131 = vmul.f32 %v774, %v1130
      %vm1132 = vcmp.eq.f32.partialorder %v774, inf
      %v1133 = vsel %vm1132, %v774, %v1131
      %vm1134 = vcmp.eq.f32.partialorder %v774, 0.0
      %v1135 = vand.u32 %v774, 2147483648
      %v1136 = vsel %vm1134, %v1135, %v1133
      %v1137 = vrsqrt.pop %v775
      %v1138 = vmul.f32 %v1137, %v775
      %v1139 = vmul.f32 %v1138, %v1137
      %v1140 = vmul.f32 0.5, %v1139
      %v1141 = vsub.f32 1.5, %v1140
      %v1142 = vmul.f32 %v1137, %v1141
      %v1143 = vmul.f32 %v775, %v1142
      %vm1144 = vcmp.eq.f32.partialorder %v775, inf
      %v1145 = vsel %vm1144, %v775, %v1143
      %vm1146 = vcmp.eq.f32.partialorder %v775, 0.0
      %v1147 = vand.u32 %v775, 2147483648
      %v1148 = vsel %vm1146, %v1147, %v1145
      %v1149 = vrsqrt.pop %v776
      %v1150 = vmul.f32 %v1149, %v776
      %v1151 = vmul.f32 %v1150, %v1149
      %v1152 = vmul.f32 0.5, %v1151
      %v1153 = vsub.f32 1.5, %v1152
      %v1154 = vmul.f32 %v1149, %v1153
      %v1155 = vmul.f32 %v776, %v1154
      %vm1156 = vcmp.eq.f32.partialorder %v776, inf
      %v1157 = vsel %vm1156, %v776, %v1155
      %vm1158 = vcmp.eq.f32.partialorder %v776, 0.0
      %v1159 = vand.u32 %v776, 2147483648
      %v1160 = vsel %vm1158, %v1159, %v1157
      %v1161 = vpack.c.bf16 %v800, %v788
      %v1162 = vpack.c.bf16 %v824, %v812
      %v1163 = vpack.c.bf16 %v848, %v836
      %v1164 = vpack.c.bf16 %v872, %v860
      %v1165 = vpack.c.bf16 %v896, %v884
      %v1166 = vpack.c.bf16 %v920, %v908
      %v1167 = vpack.c.bf16 %v944, %v932
      %v1168 = vpack.c.bf16 %v968, %v956
      %v1169 = vpack.c.bf16 %v992, %v980
      %v1170 = vpack.c.bf16 %v1016, %v1004
      %v1171 = vpack.c.bf16 %v1040, %v1028
      %v1172 = vpack.c.bf16 %v1064, %v1052
      %v1173 = vpack.c.bf16 %v1088, %v1076
      %v1174 = vpack.c.bf16 %v1112, %v1100
      %v1175 = vpack.c.bf16 %v1136, %v1124
      %v1176 = vpack.c.bf16 %v1160, %v1148
      %v1177 = vld [vmem:[%s4] sm:$0xf]
      %v1178 = vld [vmem:[%s4 + $0x4] sm:$0xf]
      %v1179 = vld [vmem:[%s4 + $0x8] sm:$0xf]
      %v1180 = vld [vmem:[%s4 + $0xc] sm:$0xf]
      %v1181 = vld [vmem:[%s4 + $0x10] sm:$0xf]
      %v1182 = vld [vmem:[%s4 + $0x14] sm:$0xf]
      %v1183 = vld [vmem:[%s4 + $0x18] sm:$0xf]
      %v1184 = vld [vmem:[%s4 + $0x1c] sm:$0xf]
      %v1185 = vld [vmem:[%s4 + $0x20] sm:$0xf]
      %v1186 = vld [vmem:[%s4 + $0x24] sm:$0xf]
      %v1187 = vld [vmem:[%s4 + $0x28] sm:$0xf]
      %v1188 = vld [vmem:[%s4 + $0x2c] sm:$0xf]
      %v1189 = vld [vmem:[%s4 + $0x30] sm:$0xf]
      %v1190 = vld [vmem:[%s4 + $0x34] sm:$0xf]
      %v1191 = vld [vmem:[%s4 + $0x38] sm:$0xf]
      %v1192 = vld [vmem:[%s4 + $0x3c] sm:$0xf]
      %v1209 = vunpack.c.l.b16 %v1177
      %v1210 = vunpack.c.l.b16 %v1178
      %v1211 = vunpack.c.l.b16 %v1179
      %v1212 = vunpack.c.l.b16 %v1180
      %v1213 = vunpack.c.l.b16 %v1181
      %v1214 = vunpack.c.l.b16 %v1182
      %v1215 = vunpack.c.l.b16 %v1183
      %v1216 = vunpack.c.l.b16 %v1184
      %v1217 = vunpack.c.l.b16 %v1185
      %v1218 = vunpack.c.l.b16 %v1186
      %v1219 = vunpack.c.l.b16 %v1187
      %v1220 = vunpack.c.l.b16 %v1188
      %v1221 = vunpack.c.l.b16 %v1189
      %v1222 = vunpack.c.l.b16 %v1190
      %v1223 = vunpack.c.l.b16 %v1191
      %v1224 = vunpack.c.l.b16 %v1192
      %v1225 = vpack.c.b16 %v1210, %v1209
      %v1226 = vpack.c.b16 %v1212, %v1211
      %v1227 = vpack.c.b16 %v1214, %v1213
      %v1228 = vpack.c.b16 %v1216, %v1215
      %v1229 = vpack.c.b16 %v1218, %v1217
      %v1230 = vpack.c.b16 %v1220, %v1219
      %v1231 = vpack.c.b16 %v1222, %v1221
      %v1232 = vpack.c.b16 %v1224, %v1223
      %1241 = vmatpush.bf16.msra.mxu0 %v1232
      %1242 = vmatpush.bf16.msra.mxu0 %v1231
      %1243 = vmatpush.bf16.msra.mxu0 %v1230
      %1244 = vmatpush.bf16.msra.mxu0 %v1229
      %1245 = vmatpush.bf16.msra.mxu0 %v1228
      %1246 = vmatpush.bf16.msra.mxu0 %v1227
      %1247 = vmatpush.bf16.msra.mxu0 %v1226
      %1248 = vmatpush.bf16.msra.mxu0 %v1225
      %1249 = vmatmul.bf16.gmra.mxu0 %v1161
      %v1250 = vpop.f32.mrf.mxu0
      %v1251 = vadd.f32 0.0, %v1250
      %v1252 = vpop.f32.mrf.mxu0
      %v1253 = vadd.f32 0.0, %v1252
      %1254 = vmatmul.bf16.gmra.mxu0 %v1162
      %v1255 = vpop.f32.mrf.mxu0
      %v1256 = vadd.f32 0.0, %v1255
      %v1257 = vpop.f32.mrf.mxu0
      %v1258 = vadd.f32 0.0, %v1257
      %1259 = vmatmul.bf16.gmra.mxu0 %v1163
      %v1260 = vpop.f32.mrf.mxu0
      %v1261 = vadd.f32 0.0, %v1260
      %v1262 = vpop.f32.mrf.mxu0
      %v1263 = vadd.f32 0.0, %v1262
      %1264 = vmatmul.bf16.gmra.mxu0 %v1164
      %v1265 = vpop.f32.mrf.mxu0
      %v1266 = vadd.f32 0.0, %v1265
      %v1267 = vpop.f32.mrf.mxu0
      %v1268 = vadd.f32 0.0, %v1267
      %1269 = vmatmul.bf16.gmra.mxu0 %v1165
      %v1270 = vpop.f32.mrf.mxu0
      %v1271 = vadd.f32 0.0, %v1270
      %v1272 = vpop.f32.mrf.mxu0
      %v1273 = vadd.f32 0.0, %v1272
      %1274 = vmatmul.bf16.gmra.mxu0 %v1166
      %v1275 = vpop.f32.mrf.mxu0
      %v1276 = vadd.f32 0.0, %v1275
      %v1277 = vpop.f32.mrf.mxu0
      %v1278 = vadd.f32 0.0, %v1277
      %1279 = vmatmul.bf16.gmra.mxu0 %v1167
      %v1280 = vpop.f32.mrf.mxu0
      %v1281 = vadd.f32 0.0, %v1280
      %v1282 = vpop.f32.mrf.mxu0
      %v1283 = vadd.f32 0.0, %v1282
      %1284 = vmatmul.bf16.gmra.mxu0 %v1168
      %v1285 = vpop.f32.mrf.mxu0
      %v1286 = vadd.f32 0.0, %v1285
      %v1287 = vpop.f32.mrf.mxu0
      %v1288 = vadd.f32 0.0, %v1287
      %1289 = vmatmul.bf16.gmra.mxu0 %v1169
      %v1290 = vpop.f32.mrf.mxu0
      %v1291 = vadd.f32 0.0, %v1290
      %v1292 = vpop.f32.mrf.mxu0
      %v1293 = vadd.f32 0.0, %v1292
      %1294 = vmatmul.bf16.gmra.mxu0 %v1170
      %v1295 = vpop.f32.mrf.mxu0
      %v1296 = vadd.f32 0.0, %v1295
      %v1297 = vpop.f32.mrf.mxu0
      %v1298 = vadd.f32 0.0, %v1297
      %1299 = vmatmul.bf16.gmra.mxu0 %v1171
      %v1300 = vpop.f32.mrf.mxu0
      %v1301 = vadd.f32 0.0, %v1300
      %v1302 = vpop.f32.mrf.mxu0
      %v1303 = vadd.f32 0.0, %v1302
      %1304 = vmatmul.bf16.gmra.mxu0 %v1172
      %v1305 = vpop.f32.mrf.mxu0
      %v1306 = vadd.f32 0.0, %v1305
      %v1307 = vpop.f32.mrf.mxu0
      %v1308 = vadd.f32 0.0, %v1307
      %1309 = vmatmul.bf16.gmra.mxu0 %v1173
      %v1310 = vpop.f32.mrf.mxu0
      %v1311 = vadd.f32 0.0, %v1310
      %v1312 = vpop.f32.mrf.mxu0
      %v1313 = vadd.f32 0.0, %v1312
      %1314 = vmatmul.bf16.gmra.mxu0 %v1174
      %v1315 = vpop.f32.mrf.mxu0
      %v1316 = vadd.f32 0.0, %v1315
      %v1317 = vpop.f32.mrf.mxu0
      %v1318 = vadd.f32 0.0, %v1317
      %1319 = vmatmul.bf16.gmra.mxu0 %v1175
      %v1320 = vpop.f32.mrf.mxu0
      %v1321 = vadd.f32 0.0, %v1320
      %v1322 = vpop.f32.mrf.mxu0
      %v1323 = vadd.f32 0.0, %v1322
      %1324 = vmatmul.bf16.gmra.mxu0 %v1176
      %v1325 = vpop.f32.mrf.mxu0
      %v1326 = vadd.f32 0.0, %v1325
      %v1327 = vpop.f32.mrf.mxu0
      %v1328 = vadd.f32 0.0, %v1327
      %1329 = vdwg.mxu0
      %v1330 = vsub.f32 %v1251, %v1291
      %v1331 = vsub.f32 %v1253, %v1293
      %v1332 = vsub.f32 %v1256, %v1296
      %v1333 = vsub.f32 %v1258, %v1298
      %v1334 = vsub.f32 %v1261, %v1301
      %v1335 = vsub.f32 %v1263, %v1303
      %v1336 = vsub.f32 %v1266, %v1306
      %v1337 = vsub.f32 %v1268, %v1308
      %v1338 = vsub.f32 %v1271, %v1311
      %v1339 = vsub.f32 %v1273, %v1313
      %v1340 = vsub.f32 %v1276, %v1316
      %v1341 = vsub.f32 %v1278, %v1318
      %v1342 = vsub.f32 %v1281, %v1321
      %v1343 = vsub.f32 %v1283, %v1323
      %v1344 = vsub.f32 %v1286, %v1326
      %v1345 = vsub.f32 %v1288, %v1328
      %v1346 = vmul.f32 %v1330, %v1330
      %v1347 = vmul.f32 %v1331, %v1331
      %v1348 = vmul.f32 %v1332, %v1332
      %v1349 = vmul.f32 %v1333, %v1333
      %v1350 = vmul.f32 %v1334, %v1334
      %v1351 = vmul.f32 %v1335, %v1335
      %v1352 = vmul.f32 %v1336, %v1336
      %v1353 = vmul.f32 %v1337, %v1337
      %v1354 = vmul.f32 %v1338, %v1338
      %v1355 = vmul.f32 %v1339, %v1339
      %v1356 = vmul.f32 %v1340, %v1340
      %v1357 = vmul.f32 %v1341, %v1341
      %v1358 = vmul.f32 %v1342, %v1342
      %v1359 = vmul.f32 %v1343, %v1343
      %v1360 = vmul.f32 %v1344, %v1344
      %v1361 = vmul.f32 %v1345, %v1345
      %v1362 = vadd.f32 %v1251, 1e-07
      %v1363 = vadd.f32 %v1253, 1e-07
      %v1364 = vadd.f32 %v1256, 1e-07
      %v1365 = vadd.f32 %v1258, 1e-07
      %v1366 = vadd.f32 %v1261, 1e-07
      %v1367 = vadd.f32 %v1263, 1e-07
      %v1368 = vadd.f32 %v1266, 1e-07
      %v1369 = vadd.f32 %v1268, 1e-07
      %v1370 = vadd.f32 %v1271, 1e-07
      %v1371 = vadd.f32 %v1273, 1e-07
      %v1372 = vadd.f32 %v1276, 1e-07
      %v1373 = vadd.f32 %v1278, 1e-07
      %v1374 = vadd.f32 %v1281, 1e-07
      %v1375 = vadd.f32 %v1283, 1e-07
      %v1376 = vadd.f32 %v1286, 1e-07
      %v1377 = vadd.f32 %v1288, 1e-07
      %v1378 = vlog2.pop %v1362
      %v1379 = vmul.f32 %v1378, 0.6931472
      %v1380 = vlog2.pop %v1363
      %v1381 = vmul.f32 %v1380, 0.6931472
      %v1382 = vlog2.pop %v1364
      %v1383 = vmul.f32 %v1382, 0.6931472
      %v1384 = vlog2.pop %v1365
      %v1385 = vmul.f32 %v1384, 0.6931472
      %v1386 = vlog2.pop %v1366
      %v1387 = vmul.f32 %v1386, 0.6931472
      %v1388 = vlog2.pop %v1367
      %v1389 = vmul.f32 %v1388, 0.6931472
      %v1390 = vlog2.pop %v1368
      %v1391 = vmul.f32 %v1390, 0.6931472
      %v1392 = vlog2.pop %v1369
      %v1393 = vmul.f32 %v1392, 0.6931472
      %v1394 = vlog2.pop %v1370
      %v1395 = vmul.f32 %v1394, 0.6931472
      %v1396 = vlog2.pop %v1371
      %v1397 = vmul.f32 %v1396, 0.6931472
      %v1398 = vlog2.pop %v1372
      %v1399 = vmul.f32 %v1398, 0.6931472
      %v1400 = vlog2.pop %v1373
      %v1401 = vmul.f32 %v1400, 0.6931472
      %v1402 = vlog2.pop %v1374
      %v1403 = vmul.f32 %v1402, 0.6931472
      %v1404 = vlog2.pop %v1375
      %v1405 = vmul.f32 %v1404, 0.6931472
      %v1406 = vlog2.pop %v1376
      %v1407 = vmul.f32 %v1406, 0.6931472
      %v1408 = vlog2.pop %v1377
      %v1409 = vmul.f32 %v1408, 0.6931472
      %v1410 = vadd.f32 %v1291, 1e-07
      %v1411 = vadd.f32 %v1293, 1e-07
      %v1412 = vadd.f32 %v1296, 1e-07
      %v1413 = vadd.f32 %v1298, 1e-07
      %v1414 = vadd.f32 %v1301, 1e-07
      %v1415 = vadd.f32 %v1303, 1e-07
      %v1416 = vadd.f32 %v1306, 1e-07
      %v1417 = vadd.f32 %v1308, 1e-07
      %v1418 = vadd.f32 %v1311, 1e-07
      %v1419 = vadd.f32 %v1313, 1e-07
      %v1420 = vadd.f32 %v1316, 1e-07
      %v1421 = vadd.f32 %v1318, 1e-07
      %v1422 = vadd.f32 %v1321, 1e-07
      %v1423 = vadd.f32 %v1323, 1e-07
      %v1424 = vadd.f32 %v1326, 1e-07
      %v1425 = vadd.f32 %v1328, 1e-07
      %v1426 = vlog2.pop %v1410
      %v1427 = vmul.f32 %v1426, 0.6931472
      %v1428 = vlog2.pop %v1411
      %v1429 = vmul.f32 %v1428, 0.6931472
      %v1430 = vlog2.pop %v1412
      %v1431 = vmul.f32 %v1430, 0.6931472
      %v1432 = vlog2.pop %v1413
      %v1433 = vmul.f32 %v1432, 0.6931472
      %v1434 = vlog2.pop %v1414
      %v1435 = vmul.f32 %v1434, 0.6931472
      %v1436 = vlog2.pop %v1415
      %v1437 = vmul.f32 %v1436, 0.6931472
      %v1438 = vlog2.pop %v1416
      %v1439 = vmul.f32 %v1438, 0.6931472
      %v1440 = vlog2.pop %v1417
      %v1441 = vmul.f32 %v1440, 0.6931472
      %v1442 = vlog2.pop %v1418
      %v1443 = vmul.f32 %v1442, 0.6931472
      %v1444 = vlog2.pop %v1419
      %v1445 = vmul.f32 %v1444, 0.6931472
      %v1446 = vlog2.pop %v1420
      %v1447 = vmul.f32 %v1446, 0.6931472
      %v1448 = vlog2.pop %v1421
      %v1449 = vmul.f32 %v1448, 0.6931472
      %v1450 = vlog2.pop %v1422
      %v1451 = vmul.f32 %v1450, 0.6931472
      %v1452 = vlog2.pop %v1423
      %v1453 = vmul.f32 %v1452, 0.6931472
      %v1454 = vlog2.pop %v1424
      %v1455 = vmul.f32 %v1454, 0.6931472
      %v1456 = vlog2.pop %v1425
      %v1457 = vmul.f32 %v1456, 0.6931472
      %v1458 = vsub.f32 %v1379, %v1427
      %v1459 = vsub.f32 %v1381, %v1429
      %v1460 = vsub.f32 %v1383, %v1431
      %v1461 = vsub.f32 %v1385, %v1433
      %v1462 = vsub.f32 %v1387, %v1435
      %v1463 = vsub.f32 %v1389, %v1437
      %v1464 = vsub.f32 %v1391, %v1439
      %v1465 = vsub.f32 %v1393, %v1441
      %v1466 = vsub.f32 %v1395, %v1443
      %v1467 = vsub.f32 %v1397, %v1445
      %v1468 = vsub.f32 %v1399, %v1447
      %v1469 = vsub.f32 %v1401, %v1449
      %v1470 = vsub.f32 %v1403, %v1451
      %v1471 = vsub.f32 %v1405, %v1453
      %v1472 = vsub.f32 %v1407, %v1455
      %v1473 = vsub.f32 %v1409, %v1457
      %v1474 = vand.u32 2147483647, %v1458
      %v1475 = vand.u32 2147483647, %v1459
      %v1476 = vand.u32 2147483647, %v1460
      %v1477 = vand.u32 2147483647, %v1461
      %v1478 = vand.u32 2147483647, %v1462
      %v1479 = vand.u32 2147483647, %v1463
      %v1480 = vand.u32 2147483647, %v1464
      %v1481 = vand.u32 2147483647, %v1465
      %v1482 = vand.u32 2147483647, %v1466
      %v1483 = vand.u32 2147483647, %v1467
      %v1484 = vand.u32 2147483647, %v1468
      %v1485 = vand.u32 2147483647, %v1469
      %v1486 = vand.u32 2147483647, %v1470
      %v1487 = vand.u32 2147483647, %v1471
      %v1488 = vand.u32 2147483647, %v1472
      %v1489 = vand.u32 2147483647, %v1473
      %v1490 = vadd.f32 %v1346, %v1474
      %v1491 = vadd.f32 %v1347, %v1475
      %v1492 = vadd.f32 %v1348, %v1476
      %v1493 = vadd.f32 %v1349, %v1477
      %v1494 = vadd.f32 %v1350, %v1478
      %v1495 = vadd.f32 %v1351, %v1479
      %v1496 = vadd.f32 %v1352, %v1480
      %v1497 = vadd.f32 %v1353, %v1481
      %v1498 = vadd.f32 %v1354, %v1482
      %v1499 = vadd.f32 %v1355, %v1483
      %v1500 = vadd.f32 %v1356, %v1484
      %v1501 = vadd.f32 %v1357, %v1485
      %v1502 = vadd.f32 %v1358, %v1486
      %v1503 = vadd.f32 %v1359, %v1487
      %v1504 = vadd.f32 %v1360, %v1488
      %v1505 = vadd.f32 %v1361, %v1489
      %v1506 = vadd.f32 %v1490, %v1491
      %v1507 = vadd.f32 %v1506, %v1492
      %v1508 = vadd.f32 %v1507, %v1493
      %v1509 = vadd.f32 %v1508, %v1494
      %v1510 = vadd.f32 %v1509, %v1495
      %v1511 = vadd.f32 %v1510, %v1496
      %v1512 = vadd.f32 %v1511, %v1497
      %v1513 = vadd.f32 %v1512, %v1498
      %v1514 = vadd.f32 %v1513, %v1499
      %v1515 = vadd.f32 %v1514, %v1500
      %v1516 = vadd.f32 %v1515, %v1501
      %v1517 = vadd.f32 %v1516, %v1502
      %v1518 = vadd.f32 %v1517, %v1503
      %v1519 = vadd.f32 %v1518, %v1504
      %v1520 = vadd.f32 %v1519, %v1505
      %1521 = vst [vmem:[%s246] sm:$0xff] %v1520
      %p1522 = scmp.lt.s32.totalorder %s16, 2
      %s1523 = scalar_select %p1522, %s16, 2
      %s1524 = smul.addr %s1523, 8
      %s1525 = scalar_lea.vmem %s5, %s1524
      // Predicated region
      $region41: #{audio_distance.5} parent=39 // pred_check
        %p1526 = pneg %p149
      $region42: #{audio_distance.5} parent=39 // pred_check_branch
        %1528 = sbr.rel (%p1526) target = $region44
      $region43: #{audio_distance.5} parent=39 // pred_region
        _
      $region44: #{audio_distance.5} parent=39 // pred_fallthru
        _
    $region40: #{audio_distance.5} parent=5 // pred_fallthru
      _
    %p1529 = scmp.le.s32.totalorder 2, %s11
    // Predicated region
    $region45: #{audio_distance.5} parent=5 // pred_check
      %p1530 = pneg %p1529
    $region46: #{audio_distance.5} parent=5 // pred_check_branch
      %1532 = sbr.rel (%p1530) target = $region48
    $region47: #{audio_distance.5} parent=5 // pred_region
      %s1533 = ssub.s32 %s11, 2
      // Predicated region
      $region49: #{audio_distance.5} parent=47 // pred_check
        %p1534 = pneg %p155
      $region50: #{audio_distance.5} parent=47 // pred_check_branch
        %1536 = sbr.rel (%p1534) target = $region52
      $region51: #{audio_distance.5} parent=47 // pred_region
        %p1537 = scmp.lt.s32.totalorder %s17, 2
        %s1538 = scalar_select %p1537, %s17, 2
        %s1539 = smul.addr %s1538, 8
        %s1540 = scalar_lea.vmem %s5, %s1539
      $region52: #{audio_distance.5} parent=47 // pred_fallthru
        _
    $region48: #{audio_distance.5} parent=5 // pred_fallthru
      _
  $region6: #{audio_distance.5} parent=0 // loop_footer
    %s15 = sadd.s32 1, %s11
  $region7: #{audio_distance.5} parent=0 // loop_footer_branch
    %10 = sbr.rel target = $region3
  $region8: #{audio_distance.5} parent=0 // loop_exit
    _

</llo_original>
